<compile_context>
chip_gen: v7x
topology: tpu7x:2x2x1
jax: 0.10.0
libtpu: 0.0.40
codegen_flags: <defaults>
</compile_context>

<pallas_src>
import jax
import jax.numpy as jnp
from jax.experimental import pallas as pl
from jax.experimental.pallas import tpu as pltpu


def chord_lstm_kernel(x_ref,     # [S, Bb, Vp]  time-major inputs (one batch block)
                      w_ih_ref,  # [Vp, 4*Hp]   input->gates weights (transposed, per-gate padded)
                      w_hh_ref,  # [Hp, 4*Hp]   recurrent weights (transposed, padded), f32
                      b_ref,     # [1, 4*Hp]    fused bias (b_ih + b_hh), zero on padded lanes
                      w_p_ref,   # [Hp, Vp]     predict weights (transposed, padded)
                      b_p_ref,   # [1, Vp]      predict bias (-1e30 on padded vocab lanes)
                      out_ref):  # [Bb, Vp]     softmax(h_n @ Wp + bp), f32
    S, Bb, _Vp = x_ref.shape
    Hp = w_hh_ref.shape[0]          # padded per-gate hidden size (multiple of 128)

    w_ih = w_ih_ref[...]
    w_hh = w_hh_ref[...]
    bias = b_ref[...]

    # Hoisted input projection: S independent [Bb,Vp]x[Vp,4Hp] MXU matmuls issued up front,
    # all off the serial h-dependence chain.  x_ref[t] is a free leading-axis view.
    xw = [jnp.dot(x_ref[t], w_ih, preferred_element_type=jnp.float32) + bias
          for t in range(S)]

    # Padded gate lanes: zero weights + zero bias -> gates_pad = 0 -> i=f=o=0.5, g=0,
    # so padded lanes of c and h remain exactly 0 at every timestep.
    h = jnp.zeros((Bb, Hp), jnp.float32)
    c = jnp.zeros((Bb, Hp), jnp.float32)

    # Recurrence.  S is small & static, so a Python unroll is appropriate (per review);
    # for long S switch to lax.fori_loop over a VMEM scratch holding xw to bound live ranges.
    for t in range(S):
        gates = xw[t] + jnp.dot(h, w_hh, preferred_element_type=jnp.float32)   # [Bb, 4*Hp]
        i_g = jax.nn.sigmoid(gates[:, 0 * Hp:1 * Hp])   # static, 128-aligned lane slices
        f_g = jax.nn.sigmoid(gates[:, 1 * Hp:2 * Hp])
        g_g = jnp.tanh(gates[:, 2 * Hp:3 * Hp])
        o_g = jax.nn.sigmoid(gates[:, 3 * Hp:4 * Hp])
        c = f_g * c + i_g * g_g
        h = o_g * jnp.tanh(c)

    # Predict layer: Linear(H, V) + softmax over the lane-dense padded vocab axis.
    logits = jnp.dot(h.astype(w_p_ref.dtype), w_p_ref[...],
                     preferred_element_type=jnp.float32) + b_p_ref[...]
    m = jnp.max(logits, axis=-1, keepdims=True)
    e = jnp.exp(logits - m)
    s = jnp.sum(e, axis=-1, keepdims=True)
    out_ref[...] = e * pl.reciprocal(s, approx=True)    # EUP reciprocal (free slot)


def _round_up(n, m):
    return ((n + m - 1) // m) * m


def _pick_block_b(B, target=256):
    """Largest batch tile <= target dividing B.  target=256 fills the v6e/v7x MXU M dim
    (use 128 on v5e); on v7x with large B prefer block_b = B // 2 so megacore gets 2 blocks."""
    if B <= target:
        return B
    for d in range(target, 0, -1):
        if B % d == 0 and d % 8 == 0:
            return d
    return B


def prepare_params(params, compute_dtype=jnp.bfloat16):
    """One-time weight preprocessing (transpose / fuse bias / per-gate + vocab padding).
    Cache and reuse across calls.  compute_dtype=jnp.float32 gives exact-f32 matmuls."""
    w_ih, w_hh, b_ih, b_hh, w_pred, b_pred = params
    V = w_ih.shape[1]          # vocab
    H = w_hh.shape[1]          # hidden (231 for the production module)
    Hp = _round_up(H, 128)     # per-gate lane-aligned hidden
    G = 4 * Hp
    Vp = _round_up(V, 128)     # lane-dense vocab

    def pad_gates_rows(w):     # [4H, X] -> [4*Hp, X], zero rows inside each gate block
        X = w.shape[1]
        w4 = w.reshape(4, H, X).astype(jnp.float32)
        return jnp.zeros((4, Hp, X), jnp.float32).at[:, :H, :].set(w4).reshape(G, X)

    # input->gates, transposed to [Vp, 4Hp]; padded vocab rows & padded gate cols are zero
    w_ih_p = jnp.zeros((Vp, G), jnp.float32).at[:V, :].set(pad_gates_rows(w_ih).T)
    # recurrent, transposed to [Hp, 4Hp]; rows >= H and padded gate cols are zero
    w_hh_p = jnp.zeros((Hp, G), jnp.float32).at[:H, :].set(pad_gates_rows(w_hh).T)
    # fused bias [1, 4Hp], zero on padded gate lanes (keeps padded h/c lanes exactly 0)
    b4 = (b_ih + b_hh).reshape(4, H).astype(jnp.float32)
    b_p = jnp.zeros((4, Hp), jnp.float32).at[:, :H].set(b4).reshape(1, G)
    # predict layer [Hp, Vp]; rows >= H zero (padded h lanes are 0 anyway)
    w_pred_p = jnp.zeros((Hp, Vp), jnp.float32).at[:H, :V].set(w_pred.T.astype(jnp.float32))
    # padded vocab lanes get a very negative bias -> ~0 probability after softmax
    b_pred_p = jnp.full((1, Vp), -1e30, jnp.float32).at[:, :V].set(b_pred.astype(jnp.float32))

    return dict(
        w_ih=w_ih_p.astype(compute_dtype),     # streamed bf16: MXU-native, half the HBM/VMEM
        w_hh=w_hh_p,                           # f32: serial recurrence kept full precision
        b=b_p,
        w_pred=w_pred_p.astype(compute_dtype),
        b_pred=b_pred_p,
        V=V, Vp=Vp, H=H, Hp=Hp,
    )


def chord_lstm_forward(x, prepared, block_b=None):
    """x: [batch, seq, vocab] f32 (batch_first, like PyTorch).  Returns [1, batch, vocab]."""
    V, Vp, Hp = prepared["V"], prepared["Vp"], prepared["Hp"]
    G = 4 * Hp
    B, S, _ = x.shape
    cdt = prepared["w_ih"].dtype

    # One-time XLA-side layout prep: time-major, vocab-padded, compute-dtype x so the
    # per-timestep slice inside the kernel is a free leading-axis view.
    x = jnp.transpose(x, (1, 0, 2)).astype(cdt)
    if Vp != V:
        x = jnp.pad(x, ((0, 0), (0, 0), (0, Vp - V)))

    if block_b is None:
        block_b = _pick_block_b(B)
    assert B % block_b == 0, "block_b must divide the batch"
    nb = B // block_b

    weight_keys = ("w_ih", "w_hh", "b", "w_pred", "b_pred")
    cost = pl.CostEstimate(
        flops=2 * B * S * Vp * G + 2 * B * S * Hp * G + 2 * B * Hp * Vp,
        transcendentals=B * S * 5 * Hp + B * Vp,
        bytes_accessed=int(x.size * x.dtype.itemsize + B * Vp * 4
                           + sum(prepared[k].size * prepared[k].dtype.itemsize
                                 for k in weight_keys)),
    )

    const2d = lambda i: (0, 0)   # weights / biases are grid-invariant
    out = pl.pallas_call(
        chord_lstm_kernel,
        out_shape=jax.ShapeDtypeStruct((B, Vp), jnp.float32),
        grid=(nb,),
        in_specs=[
            pl.BlockSpec((S, block_b, Vp), lambda i: (0, i, 0)),
            # Grid-invariant weights: single-buffer (double-buffering a constant block only
            # doubles its VMEM footprint -- matters at real size on v7x's 64 MiB VMEM).
            pl.BlockSpec((Vp, G), const2d, pipeline_mode=pl.Buffered(1)),
            pl.BlockSpec((Hp, G), const2d, pipeline_mode=pl.Buffered(1)),
            pl.BlockSpec((1, G), const2d),
            pl.BlockSpec((Hp, Vp), const2d, pipeline_mode=pl.Buffered(1)),
            pl.BlockSpec((1, Vp), const2d),
        ],
        out_specs=pl.BlockSpec((block_b, Vp), lambda i: (i, 0)),
        compiler_params=pltpu.CompilerParams(
            dimension_semantics=("parallel",),        # megacore shards batch blocks on v7x
            vmem_limit_bytes=64 * 1024 * 1024,        # raise scoped limit (v5e default is 16 MiB)
        ),
        cost_estimate=cost,
    )(x, prepared["w_ih"], prepared["w_hh"], prepared["b"],
      prepared["w_pred"], prepared["b_pred"])

    # PyTorch returns predict_layer(h_n) with h_n: [num_layers=1, B, H] -> [1, B, V]
    return out[:, :V].reshape(1, B, V)


def init_params(key, vocab_size, hidden_size):
    """Deterministic init mirroring PyTorch's uniform(-1/sqrt(H), 1/sqrt(H))."""
    ks = jax.random.split(key, 6)
    bound = 1.0 / jnp.sqrt(hidden_size)
    u = lambda k, shape: jax.random.uniform(k, shape, jnp.float32, -bound, bound)
    w_ih = u(ks[0], (4 * hidden_size, vocab_size))   # weight_ih_l0
    w_hh = u(ks[1], (4 * hidden_size, hidden_size))  # weight_hh_l0
    b_ih = u(ks[2], (4 * hidden_size,))
    b_hh = u(ks[3], (4 * hidden_size,))
    w_pred = u(ks[4], (vocab_size, hidden_size))     # predict Linear weight
    b_pred = u(ks[5], (vocab_size,))
    return (w_ih, w_hh, b_ih, b_hh, w_pred, b_pred)


def reference_forward(x, params):
    """Pure-JAX f32 reference of the PyTorch forward (for correctness check)."""
    w_ih, w_hh, b_ih, b_hh, w_pred, b_pred = params
    B, S, V = x.shape
    H = w_hh.shape[1]
    h = jnp.zeros((B, H), jnp.float32)
    c = jnp.zeros((B, H), jnp.float32)
    for t in range(S):
        gates = x[:, t, :] @ w_ih.T + b_ih + h @ w_hh.T + b_hh
        i = jax.nn.sigmoid(gates[:, :H])
        f = jax.nn.sigmoid(gates[:, H:2 * H])
        g = jnp.tanh(gates[:, 2 * H:3 * H])
        o = jax.nn.sigmoid(gates[:, 3 * H:])
        c = f * c + i * g
        h = o * jnp.tanh(c)
    logits = h @ w_pred.T + b_pred
    return jax.nn.softmax(logits, axis=-1).reshape(1, B, V)


if __name__ == "__main__":
    VOCAB = 256            # small stand-in for the default 1848 (production: H=231 -> Hp=256)
    HIDDEN = VOCAB // 8    # 32, as in the module
    BATCH, SEQ = 2, 8

    key = jax.random.PRNGKey(0)
    k_x, k_p = jax.random.split(key)
    x = jax.random.normal(k_x, (BATCH, SEQ, VOCAB), jnp.float32)
    params = init_params(k_p, VOCAB, HIDDEN)

    prepared = prepare_params(params)          # one-time weight prep; cache & reuse across calls
    out = jax.block_until_ready(chord_lstm_forward(x, prepared))
    ref = reference_forward(x, params)

    assert out.shape == (1, BATCH, VOCAB), out.shape
    # Tolerance deliberately covers bf16 streaming of x / w_ih / w_pred (f32 accumulation)
    # and the EUP approximate reciprocal in the softmax epilogue.
    assert jnp.allclose(out, ref, atol=1e-3, rtol=1e-2), "mismatch vs JAX reference"
    assert jnp.allclose(jnp.sum(out, axis=-1), 1.0, atol=5e-3), "softmax rows must sum to ~1"

    print("KERNEL_OK")
</pallas_src>

<mosaic_0001>
module attributes {stable_mosaic.version = 11 : i64} {
  func.func @chord_lstm_kernel(%arg0: i32, %arg1: memref<8x2x256xbf16, #tpu.memory_space<vmem>>, %arg2: memref<256x512xbf16, #tpu.memory_space<vmem>>, %arg3: memref<128x512xf32, #tpu.memory_space<vmem>>, %arg4: memref<1x512xf32, #tpu.memory_space<vmem>>, %arg5: memref<128x256xbf16, #tpu.memory_space<vmem>>, %arg6: memref<1x256xf32, #tpu.memory_space<vmem>>, %arg7: memref<2x256xf32, #tpu.memory_space<vmem>>) attributes {dimension_semantics = [#tpu.dimension_semantics<parallel>], iteration_bounds = array<i64: 1>, scalar_prefetch = 0 : i64, scratch_operands = 0 : i64, tpu.core_type = #tpu.core_type<tc>, window_params = [{transform_indices = @transform_0, window_bounds = array<i64: 8, 2, 256>}, {pipeline_mode = #tpu.pipeline_mode<synchronous>, transform_indices = @transform_1, window_bounds = array<i64: 256, 512>}, {pipeline_mode = #tpu.pipeline_mode<synchronous>, transform_indices = @transform_2, window_bounds = array<i64: 128, 512>}, {pipeline_mode = #tpu.pipeline_mode<synchronous>, transform_indices = @transform_3, window_bounds = array<i64: 1, 512>}, {pipeline_mode = #tpu.pipeline_mode<synchronous>, transform_indices = @transform_4, window_bounds = array<i64: 128, 256>}, {pipeline_mode = #tpu.pipeline_mode<synchronous>, transform_indices = @transform_5, window_bounds = array<i64: 1, 256>}, {transform_indices = @transform_6, window_bounds = array<i64: 2, 256>}]} {
    %c0 = arith.constant 0 : index
    %c0_0 = arith.constant 0 : index
    %0 = vector.load %arg2[%c0, %c0_0] : memref<256x512xbf16, #tpu.memory_space<vmem>>, vector<256x512xbf16>
    %c0_1 = arith.constant 0 : index
    %c0_2 = arith.constant 0 : index
    %1 = vector.load %arg3[%c0_1, %c0_2] : memref<128x512xf32, #tpu.memory_space<vmem>>, vector<128x512xf32>
    %c0_3 = arith.constant 0 : index
    %c0_4 = arith.constant 0 : index
    %2 = vector.load %arg4[%c0_3, %c0_4] : memref<1x512xf32, #tpu.memory_space<vmem>>, vector<1x512xf32>
    %c0_5 = arith.constant 0 : index
    %c0_6 = arith.constant 0 : index
    %c0_7 = arith.constant 0 : index
    %3 = vector.load %arg1[%c0_5, %c0_6, %c0_7] : memref<8x2x256xbf16, #tpu.memory_space<vmem>>, vector<1x2x256xbf16>
    %4 = vector.shape_cast %3 : vector<1x2x256xbf16> to vector<2x256xbf16>
    %cst = arith.constant dense<0.000000e+00> : vector<2x512xf32>
    %5 = tpu.matmul %4, %0, %cst {dimension_numbers = #tpu.dot_dimension_numbers<[1], [0], [0], [1], [0, 0, 1, 1], [], []>} : vector<2x256xbf16>, vector<256x512xbf16>, vector<2x512xf32> -> vector<2x512xf32>
    %6 = vector.broadcast %2 : vector<1x512xf32> to vector<2x512xf32>
    %7 = arith.addf %5, %6 : vector<2x512xf32>
    %c1 = arith.constant 1 : index
    %c0_8 = arith.constant 0 : index
    %c0_9 = arith.constant 0 : index
    %8 = vector.load %arg1[%c1, %c0_8, %c0_9] : memref<8x2x256xbf16, #tpu.memory_space<vmem>>, vector<1x2x256xbf16>
    %9 = vector.shape_cast %8 : vector<1x2x256xbf16> to vector<2x256xbf16>
    %cst_10 = arith.constant dense<0.000000e+00> : vector<2x512xf32>
    %10 = tpu.matmul %9, %0, %cst_10 {dimension_numbers = #tpu.dot_dimension_numbers<[1], [0], [0], [1], [0, 0, 1, 1], [], []>} : vector<2x256xbf16>, vector<256x512xbf16>, vector<2x512xf32> -> vector<2x512xf32>
    %11 = vector.broadcast %2 : vector<1x512xf32> to vector<2x512xf32>
    %12 = arith.addf %10, %11 : vector<2x512xf32>
    %c2 = arith.constant 2 : index
    %c0_11 = arith.constant 0 : index
    %c0_12 = arith.constant 0 : index
    %13 = vector.load %arg1[%c2, %c0_11, %c0_12] : memref<8x2x256xbf16, #tpu.memory_space<vmem>>, vector<1x2x256xbf16>
    %14 = vector.shape_cast %13 : vector<1x2x256xbf16> to vector<2x256xbf16>
    %cst_13 = arith.constant dense<0.000000e+00> : vector<2x512xf32>
    %15 = tpu.matmul %14, %0, %cst_13 {dimension_numbers = #tpu.dot_dimension_numbers<[1], [0], [0], [1], [0, 0, 1, 1], [], []>} : vector<2x256xbf16>, vector<256x512xbf16>, vector<2x512xf32> -> vector<2x512xf32>
    %16 = vector.broadcast %2 : vector<1x512xf32> to vector<2x512xf32>
    %17 = arith.addf %15, %16 : vector<2x512xf32>
    %c3 = arith.constant 3 : index
    %c0_14 = arith.constant 0 : index
    %c0_15 = arith.constant 0 : index
    %18 = vector.load %arg1[%c3, %c0_14, %c0_15] : memref<8x2x256xbf16, #tpu.memory_space<vmem>>, vector<1x2x256xbf16>
    %19 = vector.shape_cast %18 : vector<1x2x256xbf16> to vector<2x256xbf16>
    %cst_16 = arith.constant dense<0.000000e+00> : vector<2x512xf32>
    %20 = tpu.matmul %19, %0, %cst_16 {dimension_numbers = #tpu.dot_dimension_numbers<[1], [0], [0], [1], [0, 0, 1, 1], [], []>} : vector<2x256xbf16>, vector<256x512xbf16>, vector<2x512xf32> -> vector<2x512xf32>
    %21 = vector.broadcast %2 : vector<1x512xf32> to vector<2x512xf32>
    %22 = arith.addf %20, %21 : vector<2x512xf32>
    %c4 = arith.constant 4 : index
    %c0_17 = arith.constant 0 : index
    %c0_18 = arith.constant 0 : index
    %23 = vector.load %arg1[%c4, %c0_17, %c0_18] : memref<8x2x256xbf16, #tpu.memory_space<vmem>>, vector<1x2x256xbf16>
    %24 = vector.shape_cast %23 : vector<1x2x256xbf16> to vector<2x256xbf16>
    %cst_19 = arith.constant dense<0.000000e+00> : vector<2x512xf32>
    %25 = tpu.matmul %24, %0, %cst_19 {dimension_numbers = #tpu.dot_dimension_numbers<[1], [0], [0], [1], [0, 0, 1, 1], [], []>} : vector<2x256xbf16>, vector<256x512xbf16>, vector<2x512xf32> -> vector<2x512xf32>
    %26 = vector.broadcast %2 : vector<1x512xf32> to vector<2x512xf32>
    %27 = arith.addf %25, %26 : vector<2x512xf32>
    %c5 = arith.constant 5 : index
    %c0_20 = arith.constant 0 : index
    %c0_21 = arith.constant 0 : index
    %28 = vector.load %arg1[%c5, %c0_20, %c0_21] : memref<8x2x256xbf16, #tpu.memory_space<vmem>>, vector<1x2x256xbf16>
    %29 = vector.shape_cast %28 : vector<1x2x256xbf16> to vector<2x256xbf16>
    %cst_22 = arith.constant dense<0.000000e+00> : vector<2x512xf32>
    %30 = tpu.matmul %29, %0, %cst_22 {dimension_numbers = #tpu.dot_dimension_numbers<[1], [0], [0], [1], [0, 0, 1, 1], [], []>} : vector<2x256xbf16>, vector<256x512xbf16>, vector<2x512xf32> -> vector<2x512xf32>
    %31 = vector.broadcast %2 : vector<1x512xf32> to vector<2x512xf32>
    %32 = arith.addf %30, %31 : vector<2x512xf32>
    %c6 = arith.constant 6 : index
    %c0_23 = arith.constant 0 : index
    %c0_24 = arith.constant 0 : index
    %33 = vector.load %arg1[%c6, %c0_23, %c0_24] : memref<8x2x256xbf16, #tpu.memory_space<vmem>>, vector<1x2x256xbf16>
    %34 = vector.shape_cast %33 : vector<1x2x256xbf16> to vector<2x256xbf16>
    %cst_25 = arith.constant dense<0.000000e+00> : vector<2x512xf32>
    %35 = tpu.matmul %34, %0, %cst_25 {dimension_numbers = #tpu.dot_dimension_numbers<[1], [0], [0], [1], [0, 0, 1, 1], [], []>} : vector<2x256xbf16>, vector<256x512xbf16>, vector<2x512xf32> -> vector<2x512xf32>
    %36 = vector.broadcast %2 : vector<1x512xf32> to vector<2x512xf32>
    %37 = arith.addf %35, %36 : vector<2x512xf32>
    %c7 = arith.constant 7 : index
    %c0_26 = arith.constant 0 : index
    %c0_27 = arith.constant 0 : index
    %38 = vector.load %arg1[%c7, %c0_26, %c0_27] : memref<8x2x256xbf16, #tpu.memory_space<vmem>>, vector<1x2x256xbf16>
    %39 = vector.shape_cast %38 : vector<1x2x256xbf16> to vector<2x256xbf16>
    %cst_28 = arith.constant dense<0.000000e+00> : vector<2x512xf32>
    %40 = tpu.matmul %39, %0, %cst_28 {dimension_numbers = #tpu.dot_dimension_numbers<[1], [0], [0], [1], [0, 0, 1, 1], [], []>} : vector<2x256xbf16>, vector<256x512xbf16>, vector<2x512xf32> -> vector<2x512xf32>
    %41 = vector.broadcast %2 : vector<1x512xf32> to vector<2x512xf32>
    %42 = arith.addf %40, %41 : vector<2x512xf32>
    %cst_29 = arith.constant 0.000000e+00 : f32
    %43 = vector.broadcast %cst_29 : f32 to vector<2x128xf32>
    %cst_30 = arith.constant 0.000000e+00 : f32
    %44 = vector.broadcast %cst_30 : f32 to vector<2x128xf32>
    %cst_31 = arith.constant dense<0.000000e+00> : vector<2x512xf32>
    %45 = tpu.matmul %43, %1, %cst_31 {dimension_numbers = #tpu.dot_dimension_numbers<[1], [0], [0], [1], [0, 0, 1, 1], [], []>} : vector<2x128xf32>, vector<128x512xf32>, vector<2x512xf32> -> vector<2x512xf32>
    %46 = arith.addf %7, %45 : vector<2x512xf32>
    %47 = vector.extract_strided_slice %46 {offsets = [0, 0], sizes = [2, 128], strides = [1, 1]} : vector<2x512xf32> to vector<2x128xf32>
    %48 = arith.negf %47 : vector<2x128xf32>
    %49 = math.exp %48 : vector<2x128xf32>
    %cst_32 = arith.constant 1.000000e+00 : f32
    %50 = vector.broadcast %cst_32 : f32 to vector<2x128xf32>
    %51 = arith.addf %50, %49 : vector<2x128xf32>
    %52 = arith.divf %50, %51 : vector<2x128xf32>
    %53 = vector.extract_strided_slice %46 {offsets = [0, 128], sizes = [2, 128], strides = [1, 1]} : vector<2x512xf32> to vector<2x128xf32>
    %54 = arith.negf %53 : vector<2x128xf32>
    %55 = math.exp %54 : vector<2x128xf32>
    %cst_33 = arith.constant 1.000000e+00 : f32
    %56 = vector.broadcast %cst_33 : f32 to vector<2x128xf32>
    %57 = arith.addf %56, %55 : vector<2x128xf32>
    %58 = arith.divf %56, %57 : vector<2x128xf32>
    %59 = vector.extract_strided_slice %46 {offsets = [0, 256], sizes = [2, 128], strides = [1, 1]} : vector<2x512xf32> to vector<2x128xf32>
    %60 = math.tanh %59 : vector<2x128xf32>
    %61 = vector.extract_strided_slice %46 {offsets = [0, 384], sizes = [2, 128], strides = [1, 1]} : vector<2x512xf32> to vector<2x128xf32>
    %62 = arith.negf %61 : vector<2x128xf32>
    %63 = math.exp %62 : vector<2x128xf32>
    %cst_34 = arith.constant 1.000000e+00 : f32
    %64 = vector.broadcast %cst_34 : f32 to vector<2x128xf32>
    %65 = arith.addf %64, %63 : vector<2x128xf32>
    %66 = arith.divf %64, %65 : vector<2x128xf32>
    %67 = arith.mulf %58, %44 : vector<2x128xf32>
    %68 = arith.mulf %52, %60 : vector<2x128xf32>
    %69 = arith.addf %67, %68 : vector<2x128xf32>
    %70 = math.tanh %69 : vector<2x128xf32>
    %71 = arith.mulf %66, %70 : vector<2x128xf32>
    %cst_35 = arith.constant dense<0.000000e+00> : vector<2x512xf32>
    %72 = tpu.matmul %71, %1, %cst_35 {dimension_numbers = #tpu.dot_dimension_numbers<[1], [0], [0], [1], [0, 0, 1, 1], [], []>} : vector<2x128xf32>, vector<128x512xf32>, vector<2x512xf32> -> vector<2x512xf32>
    %73 = arith.addf %12, %72 : vector<2x512xf32>
    %74 = vector.extract_strided_slice %73 {offsets = [0, 0], sizes = [2, 128], strides = [1, 1]} : vector<2x512xf32> to vector<2x128xf32>
    %75 = arith.negf %74 : vector<2x128xf32>
    %76 = math.exp %75 : vector<2x128xf32>
    %cst_36 = arith.constant 1.000000e+00 : f32
    %77 = vector.broadcast %cst_36 : f32 to vector<2x128xf32>
    %78 = arith.addf %77, %76 : vector<2x128xf32>
    %79 = arith.divf %77, %78 : vector<2x128xf32>
    %80 = vector.extract_strided_slice %73 {offsets = [0, 128], sizes = [2, 128], strides = [1, 1]} : vector<2x512xf32> to vector<2x128xf32>
    %81 = arith.negf %80 : vector<2x128xf32>
    %82 = math.exp %81 : vector<2x128xf32>
    %cst_37 = arith.constant 1.000000e+00 : f32
    %83 = vector.broadcast %cst_37 : f32 to vector<2x128xf32>
    %84 = arith.addf %83, %82 : vector<2x128xf32>
    %85 = arith.divf %83, %84 : vector<2x128xf32>
    %86 = vector.extract_strided_slice %73 {offsets = [0, 256], sizes = [2, 128], strides = [1, 1]} : vector<2x512xf32> to vector<2x128xf32>
    %87 = math.tanh %86 : vector<2x128xf32>
    %88 = vector.extract_strided_slice %73 {offsets = [0, 384], sizes = [2, 128], strides = [1, 1]} : vector<2x512xf32> to vector<2x128xf32>
    %89 = arith.negf %88 : vector<2x128xf32>
    %90 = math.exp %89 : vector<2x128xf32>
    %cst_38 = arith.constant 1.000000e+00 : f32
    %91 = vector.broadcast %cst_38 : f32 to vector<2x128xf32>
    %92 = arith.addf %91, %90 : vector<2x128xf32>
    %93 = arith.divf %91, %92 : vector<2x128xf32>
    %94 = arith.mulf %85, %69 : vector<2x128xf32>
    %95 = arith.mulf %79, %87 : vector<2x128xf32>
    %96 = arith.addf %94, %95 : vector<2x128xf32>
    %97 = math.tanh %96 : vector<2x128xf32>
    %98 = arith.mulf %93, %97 : vector<2x128xf32>
    %cst_39 = arith.constant dense<0.000000e+00> : vector<2x512xf32>
    %99 = tpu.matmul %98, %1, %cst_39 {dimension_numbers = #tpu.dot_dimension_numbers<[1], [0], [0], [1], [0, 0, 1, 1], [], []>} : vector<2x128xf32>, vector<128x512xf32>, vector<2x512xf32> -> vector<2x512xf32>
    %100 = arith.addf %17, %99 : vector<2x512xf32>
    %101 = vector.extract_strided_slice %100 {offsets = [0, 0], sizes = [2, 128], strides = [1, 1]} : vector<2x512xf32> to vector<2x128xf32>
    %102 = arith.negf %101 : vector<2x128xf32>
    %103 = math.exp %102 : vector<2x128xf32>
    %cst_40 = arith.constant 1.000000e+00 : f32
    %104 = vector.broadcast %cst_40 : f32 to vector<2x128xf32>
    %105 = arith.addf %104, %103 : vector<2x128xf32>
    %106 = arith.divf %104, %105 : vector<2x128xf32>
    %107 = vector.extract_strided_slice %100 {offsets = [0, 128], sizes = [2, 128], strides = [1, 1]} : vector<2x512xf32> to vector<2x128xf32>
    %108 = arith.negf %107 : vector<2x128xf32>
    %109 = math.exp %108 : vector<2x128xf32>
    %cst_41 = arith.constant 1.000000e+00 : f32
    %110 = vector.broadcast %cst_41 : f32 to vector<2x128xf32>
    %111 = arith.addf %110, %109 : vector<2x128xf32>
    %112 = arith.divf %110, %111 : vector<2x128xf32>
    %113 = vector.extract_strided_slice %100 {offsets = [0, 256], sizes = [2, 128], strides = [1, 1]} : vector<2x512xf32> to vector<2x128xf32>
    %114 = math.tanh %113 : vector<2x128xf32>
    %115 = vector.extract_strided_slice %100 {offsets = [0, 384], sizes = [2, 128], strides = [1, 1]} : vector<2x512xf32> to vector<2x128xf32>
    %116 = arith.negf %115 : vector<2x128xf32>
    %117 = math.exp %116 : vector<2x128xf32>
    %cst_42 = arith.constant 1.000000e+00 : f32
    %118 = vector.broadcast %cst_42 : f32 to vector<2x128xf32>
    %119 = arith.addf %118, %117 : vector<2x128xf32>
    %120 = arith.divf %118, %119 : vector<2x128xf32>
    %121 = arith.mulf %112, %96 : vector<2x128xf32>
    %122 = arith.mulf %106, %114 : vector<2x128xf32>
    %123 = arith.addf %121, %122 : vector<2x128xf32>
    %124 = math.tanh %123 : vector<2x128xf32>
    %125 = arith.mulf %120, %124 : vector<2x128xf32>
    %cst_43 = arith.constant dense<0.000000e+00> : vector<2x512xf32>
    %126 = tpu.matmul %125, %1, %cst_43 {dimension_numbers = #tpu.dot_dimension_numbers<[1], [0], [0], [1], [0, 0, 1, 1], [], []>} : vector<2x128xf32>, vector<128x512xf32>, vector<2x512xf32> -> vector<2x512xf32>
    %127 = arith.addf %22, %126 : vector<2x512xf32>
    %128 = vector.extract_strided_slice %127 {offsets = [0, 0], sizes = [2, 128], strides = [1, 1]} : vector<2x512xf32> to vector<2x128xf32>
    %129 = arith.negf %128 : vector<2x128xf32>
    %130 = math.exp %129 : vector<2x128xf32>
    %cst_44 = arith.constant 1.000000e+00 : f32
    %131 = vector.broadcast %cst_44 : f32 to vector<2x128xf32>
    %132 = arith.addf %131, %130 : vector<2x128xf32>
    %133 = arith.divf %131, %132 : vector<2x128xf32>
    %134 = vector.extract_strided_slice %127 {offsets = [0, 128], sizes = [2, 128], strides = [1, 1]} : vector<2x512xf32> to vector<2x128xf32>
    %135 = arith.negf %134 : vector<2x128xf32>
    %136 = math.exp %135 : vector<2x128xf32>
    %cst_45 = arith.constant 1.000000e+00 : f32
    %137 = vector.broadcast %cst_45 : f32 to vector<2x128xf32>
    %138 = arith.addf %137, %136 : vector<2x128xf32>
    %139 = arith.divf %137, %138 : vector<2x128xf32>
    %140 = vector.extract_strided_slice %127 {offsets = [0, 256], sizes = [2, 128], strides = [1, 1]} : vector<2x512xf32> to vector<2x128xf32>
    %141 = math.tanh %140 : vector<2x128xf32>
    %142 = vector.extract_strided_slice %127 {offsets = [0, 384], sizes = [2, 128], strides = [1, 1]} : vector<2x512xf32> to vector<2x128xf32>
    %143 = arith.negf %142 : vector<2x128xf32>
    %144 = math.exp %143 : vector<2x128xf32>
    %cst_46 = arith.constant 1.000000e+00 : f32
    %145 = vector.broadcast %cst_46 : f32 to vector<2x128xf32>
    %146 = arith.addf %145, %144 : vector<2x128xf32>
    %147 = arith.divf %145, %146 : vector<2x128xf32>
    %148 = arith.mulf %139, %123 : vector<2x128xf32>
    %149 = arith.mulf %133, %141 : vector<2x128xf32>
    %150 = arith.addf %148, %149 : vector<2x128xf32>
    %151 = math.tanh %150 : vector<2x128xf32>
    %152 = arith.mulf %147, %151 : vector<2x128xf32>
    %cst_47 = arith.constant dense<0.000000e+00> : vector<2x512xf32>
    %153 = tpu.matmul %152, %1, %cst_47 {dimension_numbers = #tpu.dot_dimension_numbers<[1], [0], [0], [1], [0, 0, 1, 1], [], []>} : vector<2x128xf32>, vector<128x512xf32>, vector<2x512xf32> -> vector<2x512xf32>
    %154 = arith.addf %27, %153 : vector<2x512xf32>
    %155 = vector.extract_strided_slice %154 {offsets = [0, 0], sizes = [2, 128], strides = [1, 1]} : vector<2x512xf32> to vector<2x128xf32>
    %156 = arith.negf %155 : vector<2x128xf32>
    %157 = math.exp %156 : vector<2x128xf32>
    %cst_48 = arith.constant 1.000000e+00 : f32
    %158 = vector.broadcast %cst_48 : f32 to vector<2x128xf32>
    %159 = arith.addf %158, %157 : vector<2x128xf32>
    %160 = arith.divf %158, %159 : vector<2x128xf32>
    %161 = vector.extract_strided_slice %154 {offsets = [0, 128], sizes = [2, 128], strides = [1, 1]} : vector<2x512xf32> to vector<2x128xf32>
    %162 = arith.negf %161 : vector<2x128xf32>
    %163 = math.exp %162 : vector<2x128xf32>
    %cst_49 = arith.constant 1.000000e+00 : f32
    %164 = vector.broadcast %cst_49 : f32 to vector<2x128xf32>
    %165 = arith.addf %164, %163 : vector<2x128xf32>
    %166 = arith.divf %164, %165 : vector<2x128xf32>
    %167 = vector.extract_strided_slice %154 {offsets = [0, 256], sizes = [2, 128], strides = [1, 1]} : vector<2x512xf32> to vector<2x128xf32>
    %168 = math.tanh %167 : vector<2x128xf32>
    %169 = vector.extract_strided_slice %154 {offsets = [0, 384], sizes = [2, 128], strides = [1, 1]} : vector<2x512xf32> to vector<2x128xf32>
    %170 = arith.negf %169 : vector<2x128xf32>
    %171 = math.exp %170 : vector<2x128xf32>
    %cst_50 = arith.constant 1.000000e+00 : f32
    %172 = vector.broadcast %cst_50 : f32 to vector<2x128xf32>
    %173 = arith.addf %172, %171 : vector<2x128xf32>
    %174 = arith.divf %172, %173 : vector<2x128xf32>
    %175 = arith.mulf %166, %150 : vector<2x128xf32>
    %176 = arith.mulf %160, %168 : vector<2x128xf32>
    %177 = arith.addf %175, %176 : vector<2x128xf32>
    %178 = math.tanh %177 : vector<2x128xf32>
    %179 = arith.mulf %174, %178 : vector<2x128xf32>
    %cst_51 = arith.constant dense<0.000000e+00> : vector<2x512xf32>
    %180 = tpu.matmul %179, %1, %cst_51 {dimension_numbers = #tpu.dot_dimension_numbers<[1], [0], [0], [1], [0, 0, 1, 1], [], []>} : vector<2x128xf32>, vector<128x512xf32>, vector<2x512xf32> -> vector<2x512xf32>
    %181 = arith.addf %32, %180 : vector<2x512xf32>
    %182 = vector.extract_strided_slice %181 {offsets = [0, 0], sizes = [2, 128], strides = [1, 1]} : vector<2x512xf32> to vector<2x128xf32>
    %183 = arith.negf %182 : vector<2x128xf32>
    %184 = math.exp %183 : vector<2x128xf32>
    %cst_52 = arith.constant 1.000000e+00 : f32
    %185 = vector.broadcast %cst_52 : f32 to vector<2x128xf32>
    %186 = arith.addf %185, %184 : vector<2x128xf32>
    %187 = arith.divf %185, %186 : vector<2x128xf32>
    %188 = vector.extract_strided_slice %181 {offsets = [0, 128], sizes = [2, 128], strides = [1, 1]} : vector<2x512xf32> to vector<2x128xf32>
    %189 = arith.negf %188 : vector<2x128xf32>
    %190 = math.exp %189 : vector<2x128xf32>
    %cst_53 = arith.constant 1.000000e+00 : f32
    %191 = vector.broadcast %cst_53 : f32 to vector<2x128xf32>
    %192 = arith.addf %191, %190 : vector<2x128xf32>
    %193 = arith.divf %191, %192 : vector<2x128xf32>
    %194 = vector.extract_strided_slice %181 {offsets = [0, 256], sizes = [2, 128], strides = [1, 1]} : vector<2x512xf32> to vector<2x128xf32>
    %195 = math.tanh %194 : vector<2x128xf32>
    %196 = vector.extract_strided_slice %181 {offsets = [0, 384], sizes = [2, 128], strides = [1, 1]} : vector<2x512xf32> to vector<2x128xf32>
    %197 = arith.negf %196 : vector<2x128xf32>
    %198 = math.exp %197 : vector<2x128xf32>
    %cst_54 = arith.constant 1.000000e+00 : f32
    %199 = vector.broadcast %cst_54 : f32 to vector<2x128xf32>
    %200 = arith.addf %199, %198 : vector<2x128xf32>
    %201 = arith.divf %199, %200 : vector<2x128xf32>
    %202 = arith.mulf %193, %177 : vector<2x128xf32>
    %203 = arith.mulf %187, %195 : vector<2x128xf32>
    %204 = arith.addf %202, %203 : vector<2x128xf32>
    %205 = math.tanh %204 : vector<2x128xf32>
    %206 = arith.mulf %201, %205 : vector<2x128xf32>
    %cst_55 = arith.constant dense<0.000000e+00> : vector<2x512xf32>
    %207 = tpu.matmul %206, %1, %cst_55 {dimension_numbers = #tpu.dot_dimension_numbers<[1], [0], [0], [1], [0, 0, 1, 1], [], []>} : vector<2x128xf32>, vector<128x512xf32>, vector<2x512xf32> -> vector<2x512xf32>
    %208 = arith.addf %37, %207 : vector<2x512xf32>
    %209 = vector.extract_strided_slice %208 {offsets = [0, 0], sizes = [2, 128], strides = [1, 1]} : vector<2x512xf32> to vector<2x128xf32>
    %210 = arith.negf %209 : vector<2x128xf32>
    %211 = math.exp %210 : vector<2x128xf32>
    %cst_56 = arith.constant 1.000000e+00 : f32
    %212 = vector.broadcast %cst_56 : f32 to vector<2x128xf32>
    %213 = arith.addf %212, %211 : vector<2x128xf32>
    %214 = arith.divf %212, %213 : vector<2x128xf32>
    %215 = vector.extract_strided_slice %208 {offsets = [0, 128], sizes = [2, 128], strides = [1, 1]} : vector<2x512xf32> to vector<2x128xf32>
    %216 = arith.negf %215 : vector<2x128xf32>
    %217 = math.exp %216 : vector<2x128xf32>
    %cst_57 = arith.constant 1.000000e+00 : f32
    %218 = vector.broadcast %cst_57 : f32 to vector<2x128xf32>
    %219 = arith.addf %218, %217 : vector<2x128xf32>
    %220 = arith.divf %218, %219 : vector<2x128xf32>
    %221 = vector.extract_strided_slice %208 {offsets = [0, 256], sizes = [2, 128], strides = [1, 1]} : vector<2x512xf32> to vector<2x128xf32>
    %222 = math.tanh %221 : vector<2x128xf32>
    %223 = vector.extract_strided_slice %208 {offsets = [0, 384], sizes = [2, 128], strides = [1, 1]} : vector<2x512xf32> to vector<2x128xf32>
    %224 = arith.negf %223 : vector<2x128xf32>
    %225 = math.exp %224 : vector<2x128xf32>
    %cst_58 = arith.constant 1.000000e+00 : f32
    %226 = vector.broadcast %cst_58 : f32 to vector<2x128xf32>
    %227 = arith.addf %226, %225 : vector<2x128xf32>
    %228 = arith.divf %226, %227 : vector<2x128xf32>
    %229 = arith.mulf %220, %204 : vector<2x128xf32>
    %230 = arith.mulf %214, %222 : vector<2x128xf32>
    %231 = arith.addf %229, %230 : vector<2x128xf32>
    %232 = math.tanh %231 : vector<2x128xf32>
    %233 = arith.mulf %228, %232 : vector<2x128xf32>
    %cst_59 = arith.constant dense<0.000000e+00> : vector<2x512xf32>
    %234 = tpu.matmul %233, %1, %cst_59 {dimension_numbers = #tpu.dot_dimension_numbers<[1], [0], [0], [1], [0, 0, 1, 1], [], []>} : vector<2x128xf32>, vector<128x512xf32>, vector<2x512xf32> -> vector<2x512xf32>
    %235 = arith.addf %42, %234 : vector<2x512xf32>
    %236 = vector.extract_strided_slice %235 {offsets = [0, 0], sizes = [2, 128], strides = [1, 1]} : vector<2x512xf32> to vector<2x128xf32>
    %237 = arith.negf %236 : vector<2x128xf32>
    %238 = math.exp %237 : vector<2x128xf32>
    %cst_60 = arith.constant 1.000000e+00 : f32
    %239 = vector.broadcast %cst_60 : f32 to vector<2x128xf32>
    %240 = arith.addf %239, %238 : vector<2x128xf32>
    %241 = arith.divf %239, %240 : vector<2x128xf32>
    %242 = vector.extract_strided_slice %235 {offsets = [0, 128], sizes = [2, 128], strides = [1, 1]} : vector<2x512xf32> to vector<2x128xf32>
    %243 = arith.negf %242 : vector<2x128xf32>
    %244 = math.exp %243 : vector<2x128xf32>
    %cst_61 = arith.constant 1.000000e+00 : f32
    %245 = vector.broadcast %cst_61 : f32 to vector<2x128xf32>
    %246 = arith.addf %245, %244 : vector<2x128xf32>
    %247 = arith.divf %245, %246 : vector<2x128xf32>
    %248 = vector.extract_strided_slice %235 {offsets = [0, 256], sizes = [2, 128], strides = [1, 1]} : vector<2x512xf32> to vector<2x128xf32>
    %249 = math.tanh %248 : vector<2x128xf32>
    %250 = vector.extract_strided_slice %235 {offsets = [0, 384], sizes = [2, 128], strides = [1, 1]} : vector<2x512xf32> to vector<2x128xf32>
    %251 = arith.negf %250 : vector<2x128xf32>
    %252 = math.exp %251 : vector<2x128xf32>
    %cst_62 = arith.constant 1.000000e+00 : f32
    %253 = vector.broadcast %cst_62 : f32 to vector<2x128xf32>
    %254 = arith.addf %253, %252 : vector<2x128xf32>
    %255 = arith.divf %253, %254 : vector<2x128xf32>
    %256 = arith.mulf %247, %231 : vector<2x128xf32>
    %257 = arith.mulf %241, %249 : vector<2x128xf32>
    %258 = arith.addf %256, %257 : vector<2x128xf32>
    %259 = math.tanh %258 : vector<2x128xf32>
    %260 = arith.mulf %255, %259 : vector<2x128xf32>
    %261 = arith.truncf %260 : vector<2x128xf32> to vector<2x128xbf16>
    %c0_63 = arith.constant 0 : index
    %c0_64 = arith.constant 0 : index
    %262 = vector.load %arg5[%c0_63, %c0_64] : memref<128x256xbf16, #tpu.memory_space<vmem>>, vector<128x256xbf16>
    %cst_65 = arith.constant dense<0.000000e+00> : vector<2x256xf32>
    %263 = tpu.matmul %261, %262, %cst_65 {dimension_numbers = #tpu.dot_dimension_numbers<[1], [0], [0], [1], [0, 0, 1, 1], [], []>} : vector<2x128xbf16>, vector<128x256xbf16>, vector<2x256xf32> -> vector<2x256xf32>
    %c0_66 = arith.constant 0 : index
    %c0_67 = arith.constant 0 : index
    %264 = vector.load %arg6[%c0_66, %c0_67] : memref<1x256xf32, #tpu.memory_space<vmem>>, vector<1x256xf32>
    %265 = vector.broadcast %264 : vector<1x256xf32> to vector<2x256xf32>
    %266 = arith.addf %263, %265 : vector<2x256xf32>
    %cst_68 = arith.constant dense<0xFF800000> : vector<2xf32>
    %267 = vector.multi_reduction <maximumf>, %266, %cst_68 [1] : vector<2x256xf32> to vector<2xf32>
    %268 = vector.shape_cast %267 : vector<2xf32> to vector<2x1xf32>
    %269 = vector.broadcast %268 : vector<2x1xf32> to vector<2x256xf32>
    %270 = arith.subf %266, %269 : vector<2x256xf32>
    %271 = math.exp %270 : vector<2x256xf32>
    %cst_69 = arith.constant dense<0.000000e+00> : vector<2xf32>
    %272 = vector.multi_reduction <add>, %271, %cst_69 [1] : vector<2x256xf32> to vector<2xf32>
    %273 = vector.shape_cast %272 : vector<2xf32> to vector<2x1xf32>
    %274 = tpu.reciprocal %273 {approx = true} : vector<2x1xf32> -> vector<2x1xf32>
    %275 = vector.broadcast %274 : vector<2x1xf32> to vector<2x256xf32>
    %276 = arith.mulf %271, %275 : vector<2x256xf32>
    %c0_70 = arith.constant 0 : index
    %c0_71 = arith.constant 0 : index
    %277 = vector.load %arg7[%c0_70, %c0_71] : memref<2x256xf32, #tpu.memory_space<vmem>>, vector<2x256xf32>
    tpu.vector_store %arg7[%c0_70, %c0_71], %276 {strides = array<i32>} : memref<2x256xf32, #tpu.memory_space<vmem>>, vector<2x256xf32>,
    return
  }
  func.func @transform_0(%arg0: i32) -> (i32, i32, i32) {
    %c0_i32 = arith.constant 0 : i32
    %c0_i32_0 = arith.constant 0 : i32
    %c0_i32_1 = arith.constant 0 : i32
    return %c0_i32, %arg0, %c0_i32_0 : i32, i32, i32
  }
  func.func @transform_1(%arg0: i32) -> (i32, i32) {
    %c0_i32 = arith.constant 0 : i32
    %c0_i32_0 = arith.constant 0 : i32
    %c0_i32_1 = arith.constant 0 : i32
    return %c0_i32, %c0_i32_0 : i32, i32
  }
  func.func @transform_2(%arg0: i32) -> (i32, i32) {
    %c0_i32 = arith.constant 0 : i32
    %c0_i32_0 = arith.constant 0 : i32
    %c0_i32_1 = arith.constant 0 : i32
    return %c0_i32, %c0_i32_0 : i32, i32
  }
  func.func @transform_3(%arg0: i32) -> (i32, i32) {
    %c0_i32 = arith.constant 0 : i32
    %c0_i32_0 = arith.constant 0 : i32
    %c0_i32_1 = arith.constant 0 : i32
    return %c0_i32, %c0_i32_0 : i32, i32
  }
  func.func @transform_4(%arg0: i32) -> (i32, i32) {
    %c0_i32 = arith.constant 0 : i32
    %c0_i32_0 = arith.constant 0 : i32
    %c0_i32_1 = arith.constant 0 : i32
    return %c0_i32, %c0_i32_0 : i32, i32
  }
  func.func @transform_5(%arg0: i32) -> (i32, i32) {
    %c0_i32 = arith.constant 0 : i32
    %c0_i32_0 = arith.constant 0 : i32
    %c0_i32_1 = arith.constant 0 : i32
    return %c0_i32, %c0_i32_0 : i32, i32
  }
  func.func @transform_6(%arg0: i32) -> (i32, i32) {
    %c0_i32 = arith.constant 0 : i32
    %c0_i32_0 = arith.constant 0 : i32
    return %arg0, %c0_i32 : i32, i32
  }
}

</mosaic_0001>

<llo_original>
// kernel: tpu_custom_call.1
$region0: #{tpu_custom_call.1}
  #allocation0 [shape = 'u32[]', space=smem, size = 0x4, offset = 0x4, fixed_abs, tag = 'smem constant byte address 0x4 - core index']
  #allocation1 [shape = 'u32[144,128]{1,0:T(1,128)}', space=vmem, size = 0x12000, scoped, tag = 'internal scratch']
  %s0 = inlined_call_operand.hbm [shape: bf16[8,2,256], index: 0, kind: input, shape index: {}]
  %s1 = inlined_call_operand.hbm [shape: bf16[256,512], index: 1, kind: input, shape index: {}]
  %s2 = inlined_call_operand.hbm [shape: f32[128,512], index: 2, kind: input, shape index: {}]
  %s3 = inlined_call_operand.hbm [shape: f32[1,512], index: 3, kind: input, shape index: {}]
  %s4 = inlined_call_operand.hbm [shape: bf16[128,256], index: 4, kind: input, shape index: {}]
  %s5 = inlined_call_operand.hbm [shape: f32[1,256], index: 5, kind: input, shape index: {}]
  %s6 = inlined_call_operand.hbm [shape: f32[2,256], index: 6, kind: output, shape index: {}]
  %s7 = sld [smem:[#allocation0]]
  $region58: #{tpu_custom_call.1} parent=0
    _
  %s9 = ssub.s32 1, %s7
  %s10 = scalar_select 0, %s9, %s7
  $region1: #{tpu_custom_call.1} parent=0
    #allocation2 [shape = 'u8[8192]{0}', space=vmem, size = 0x2000, scoped, tag = 'input window, operand 0, single buffered']
    #allocation3 [shape = 's32[1]{0}', space=sflag, size = 0x4, scoped, tag = 'scoped memory for tpu_custom_call.1']
    #allocation4 [shape = 's32[1]{0}', space=sflag, size = 0x4, scoped, tag = 'scoped memory for tpu_custom_call.1']
    #allocation5 [shape = 'u8[262144]{0}', space=vmem, size = 0x40000, scoped, tag = 'input window, operand 1, single buffered']
    #allocation6 [shape = 's32[1]{0}', space=sflag, size = 0x4, scoped, tag = 'scoped memory for tpu_custom_call.1']
    #allocation7 [shape = 'u8[262144]{0}', space=vmem, size = 0x40000, scoped, tag = 'input window, operand 2, single buffered']
    #allocation8 [shape = 'u8[2048]{0}', space=vmem, size = 0x800, scoped, tag = 'input window, operand 3, single buffered']
    #allocation9 [shape = 's32[1]{0}', space=sflag, size = 0x4, scoped, tag = 'scoped memory for tpu_custom_call.1']
    #allocation10 [shape = 'u8[65536]{0}', space=vmem, size = 0x10000, scoped, tag = 'input window, operand 4, single buffered']
    #allocation11 [shape = 'u8[1024]{0}', space=vmem, size = 0x400, scoped, tag = 'input window, operand 5, single buffered']
    #allocation12 [shape = 's32[1]{0}', space=sflag, size = 0x4, scoped, tag = 'scoped memory for tpu_custom_call.1']
    #allocation13 [shape = 'u8[2048]{0}', space=vmem, size = 0x800, scoped, tag = 'output window, operand 0, single buffered']
    %11 = vsyncpa [#allocation3], 0
    %12 = vsyncpa [#allocation6], 0
    %13 = vsyncpa [#allocation9], 0
    %14 = vsyncpa [#allocation12], 0
    %15 = vsyncpa [#allocation4], 0
    // Predicated region
    $region2: #{tpu_custom_call.1} parent=1 // pred_check
      _
    $region3: #{tpu_custom_call.1} parent=1 // pred_check_branch
      %17 = sbr.rel (0) target = $region5
    $region4: #{tpu_custom_call.1} parent=1 // pred_region
      %s19 = ssub.s32 256, 256
      %20 = vsyncadd [#allocation3], %s19
      %s21 = sshll.u32 [#allocation2], 4
      %s22 = int_to_ptr.vmem [resolvable:$true] %s21
      %27 = dma.hbm_to_vmem [thread:$0]  %s0, 256, %s22, [#allocation3], 32, 32, 2
    $region5: #{tpu_custom_call.1} parent=1 // pred_fallthru
      _
    // Predicated region
    $region6: #{tpu_custom_call.1} parent=1 // pred_check
      _
    $region7: #{tpu_custom_call.1} parent=1 // pred_check_branch
      %29 = sbr.rel (0) target = $region9
    $region8: #{tpu_custom_call.1} parent=1 // pred_region
      %s31 = ssub.s32 8192, 8192
      %32 = vsyncadd [#allocation6], %s31
      %s33 = sshll.u32 [#allocation5], 4
      %s34 = int_to_ptr.vmem [resolvable:$true] %s33
      %39 = dma.hbm_to_vmem [thread:$0]  %s1, 8192, %s34, [#allocation6], 256, 256, 16
    $region9: #{tpu_custom_call.1} parent=1 // pred_fallthru
      _
    // Predicated region
    $region10: #{tpu_custom_call.1} parent=1 // pred_check
      _
    $region11: #{tpu_custom_call.1} parent=1 // pred_check_branch
      %41 = sbr.rel (0) target = $region13
    $region12: #{tpu_custom_call.1} parent=1 // pred_region
      %s43 = ssub.s32 8192, 8192
      %44 = vsyncadd [#allocation6], %s43
      %s45 = sshll.u32 [#allocation7], 4
      %s46 = int_to_ptr.vmem [resolvable:$true] %s45
      %51 = dma.hbm_to_vmem [thread:$0]  %s2, 8192, %s46, [#allocation6], 512, 512, 32
    $region13: #{tpu_custom_call.1} parent=1 // pred_fallthru
      _
    // Predicated region
    $region14: #{tpu_custom_call.1} parent=1 // pred_check
      _
    $region15: #{tpu_custom_call.1} parent=1 // pred_check_branch
      %53 = sbr.rel (0) target = $region17
    $region16: #{tpu_custom_call.1} parent=1 // pred_region
      %s55 = ssub.s32 64, 64
      %56 = vsyncadd [#allocation9], %s55
      %s58 = sshll.u32 [#allocation8], 4
      %s59 = int_to_ptr.vmem [resolvable:$true] %s58
      %61 = dma.hbm_to_vmem [thread:$0]  %s3, 64, %s59, [#allocation9]
    $region17: #{tpu_custom_call.1} parent=1 // pred_fallthru
      _
    // Predicated region
    $region18: #{tpu_custom_call.1} parent=1 // pred_check
      _
    $region19: #{tpu_custom_call.1} parent=1 // pred_check_branch
      %63 = sbr.rel (0) target = $region21
    $region20: #{tpu_custom_call.1} parent=1 // pred_region
      %s65 = ssub.s32 2048, 2048
      %66 = vsyncadd [#allocation9], %s65
      %s67 = sshll.u32 [#allocation10], 4
      %s68 = int_to_ptr.vmem [resolvable:$true] %s67
      %73 = dma.hbm_to_vmem [thread:$0]  %s4, 2048, %s68, [#allocation9], 128, 128, 8
    $region21: #{tpu_custom_call.1} parent=1 // pred_fallthru
      _
    // Predicated region
    $region22: #{tpu_custom_call.1} parent=1 // pred_check
      _
    $region23: #{tpu_custom_call.1} parent=1 // pred_check_branch
      %75 = sbr.rel (0) target = $region25
    $region24: #{tpu_custom_call.1} parent=1 // pred_region
      %s77 = ssub.s32 32, 32
      %78 = vsyncadd [#allocation12], %s77
      %s80 = sshll.u32 [#allocation11], 4
      %s81 = int_to_ptr.vmem [resolvable:$true] %s80
      %83 = dma.hbm_to_vmem [thread:$0]  %s5, 32, %s81, [#allocation12]
    $region25: #{tpu_custom_call.1} parent=1 // pred_fallthru
      _
    // Predicated region
    $region26: #{tpu_custom_call.1} parent=1 // pred_check
      _
    $region27: #{tpu_custom_call.1} parent=1 // pred_check_branch
      %85 = sbr.rel (0) target = $region29
    $region28: #{tpu_custom_call.1} parent=1 // pred_region
      %86 = dma.done [#allocation3], 256
    $region29: #{tpu_custom_call.1} parent=1 // pred_fallthru
      _
    // Predicated region
    $region30: #{tpu_custom_call.1} parent=1 // pred_check
      _
    $region31: #{tpu_custom_call.1} parent=1 // pred_check_branch
      %88 = sbr.rel (0) target = $region33
    $region32: #{tpu_custom_call.1} parent=1 // pred_region
      %89 = dma.done [#allocation6], 8192
    $region33: #{tpu_custom_call.1} parent=1 // pred_fallthru
      _
    // Predicated region
    $region34: #{tpu_custom_call.1} parent=1 // pred_check
      _
    $region35: #{tpu_custom_call.1} parent=1 // pred_check_branch
      %91 = sbr.rel (0) target = $region37
    $region36: #{tpu_custom_call.1} parent=1 // pred_region
      %92 = dma.done [#allocation6], 8192
    $region37: #{tpu_custom_call.1} parent=1 // pred_fallthru
      _
    // Predicated region
    $region38: #{tpu_custom_call.1} parent=1 // pred_check
      _
    $region39: #{tpu_custom_call.1} parent=1 // pred_check_branch
      %94 = sbr.rel (0) target = $region41
    $region40: #{tpu_custom_call.1} parent=1 // pred_region
      %95 = dma.done [#allocation9], 64
    $region41: #{tpu_custom_call.1} parent=1 // pred_fallthru
      _
    // Predicated region
    $region42: #{tpu_custom_call.1} parent=1 // pred_check
      _
    $region43: #{tpu_custom_call.1} parent=1 // pred_check_branch
      %97 = sbr.rel (0) target = $region45
    $region44: #{tpu_custom_call.1} parent=1 // pred_region
      %98 = dma.done [#allocation9], 2048
    $region45: #{tpu_custom_call.1} parent=1 // pred_fallthru
      _
    // Predicated region
    $region46: #{tpu_custom_call.1} parent=1 // pred_check
      _
    $region47: #{tpu_custom_call.1} parent=1 // pred_check_branch
      %100 = sbr.rel (0) target = $region49
    $region48: #{tpu_custom_call.1} parent=1 // pred_region
      %101 = dma.done [#allocation12], 32
    $region49: #{tpu_custom_call.1} parent=1 // pred_fallthru
      _
    %v103 = vld [vmem:[#allocation5] sm:$0xff]
    %v104 = vld [vmem:[#allocation5 + $0x8] sm:$0xff]
    %v105 = vld [vmem:[#allocation5 + $0x10] sm:$0xff]
    %v106 = vld [vmem:[#allocation5 + $0x18] sm:$0xff]
    %v107 = vld [vmem:[#allocation5 + $0x20] sm:$0xff]
    %v108 = vld [vmem:[#allocation5 + $0x28] sm:$0xff]
    %v109 = vld [vmem:[#allocation5 + $0x30] sm:$0xff]
    %v110 = vld [vmem:[#allocation5 + $0x38] sm:$0xff]
    %v111 = vld [vmem:[#allocation5 + $0x40] sm:$0xff]
    %v112 = vld [vmem:[#allocation5 + $0x48] sm:$0xff]
    %v113 = vld [vmem:[#allocation5 + $0x50] sm:$0xff]
    %v114 = vld [vmem:[#allocation5 + $0x58] sm:$0xff]
    %v115 = vld [vmem:[#allocation5 + $0x60] sm:$0xff]
    %v116 = vld [vmem:[#allocation5 + $0x68] sm:$0xff]
    %v117 = vld [vmem:[#allocation5 + $0x70] sm:$0xff]
    %v118 = vld [vmem:[#allocation5 + $0x78] sm:$0xff]
    %v119 = vld [vmem:[#allocation5 + $0x80] sm:$0xff]
    %v120 = vld [vmem:[#allocation5 + $0x88] sm:$0xff]
    %v121 = vld [vmem:[#allocation5 + $0x90] sm:$0xff]
    %v122 = vld [vmem:[#allocation5 + $0x98] sm:$0xff]
    %v123 = vld [vmem:[#allocation5 + $0xa0] sm:$0xff]
    %v124 = vld [vmem:[#allocation5 + $0xa8] sm:$0xff]
    %v125 = vld [vmem:[#allocation5 + $0xb0] sm:$0xff]
    %v126 = vld [vmem:[#allocation5 + $0xb8] sm:$0xff]
    %v127 = vld [vmem:[#allocation5 + $0xc0] sm:$0xff]
    %v128 = vld [vmem:[#allocation5 + $0xc8] sm:$0xff]
    %v129 = vld [vmem:[#allocation5 + $0xd0] sm:$0xff]
    %v130 = vld [vmem:[#allocation5 + $0xd8] sm:$0xff]
    %v131 = vld [vmem:[#allocation5 + $0xe0] sm:$0xff]
    %v132 = vld [vmem:[#allocation5 + $0xe8] sm:$0xff]
    %v133 = vld [vmem:[#allocation5 + $0xf0] sm:$0xff]
    %v134 = vld [vmem:[#allocation5 + $0xf8] sm:$0xff]
    %v135 = vld [vmem:[#allocation5 + $0x100] sm:$0xff]
    %v136 = vld [vmem:[#allocation5 + $0x108] sm:$0xff]
    %v137 = vld [vmem:[#allocation5 + $0x110] sm:$0xff]
    %v138 = vld [vmem:[#allocation5 + $0x118] sm:$0xff]
    %v139 = vld [vmem:[#allocation5 + $0x120] sm:$0xff]
    %v140 = vld [vmem:[#allocation5 + $0x128] sm:$0xff]
    %v141 = vld [vmem:[#allocation5 + $0x130] sm:$0xff]
    %v142 = vld [vmem:[#allocation5 + $0x138] sm:$0xff]
    %v143 = vld [vmem:[#allocation5 + $0x140] sm:$0xff]
    %v144 = vld [vmem:[#allocation5 + $0x148] sm:$0xff]
    %v145 = vld [vmem:[#allocation5 + $0x150] sm:$0xff]
    %v146 = vld [vmem:[#allocation5 + $0x158] sm:$0xff]
    %v147 = vld [vmem:[#allocation5 + $0x160] sm:$0xff]
    %v148 = vld [vmem:[#allocation5 + $0x168] sm:$0xff]
    %v149 = vld [vmem:[#allocation5 + $0x170] sm:$0xff]
    %v150 = vld [vmem:[#allocation5 + $0x178] sm:$0xff]
    %v151 = vld [vmem:[#allocation5 + $0x180] sm:$0xff]
    %v152 = vld [vmem:[#allocation5 + $0x188] sm:$0xff]
    %v153 = vld [vmem:[#allocation5 + $0x190] sm:$0xff]
    %v154 = vld [vmem:[#allocation5 + $0x198] sm:$0xff]
    %v155 = vld [vmem:[#allocation5 + $0x1a0] sm:$0xff]
    %v156 = vld [vmem:[#allocation5 + $0x1a8] sm:$0xff]
    %v157 = vld [vmem:[#allocation5 + $0x1b0] sm:$0xff]
    %v158 = vld [vmem:[#allocation5 + $0x1b8] sm:$0xff]
    %v159 = vld [vmem:[#allocation5 + $0x1c0] sm:$0xff]
    %v160 = vld [vmem:[#allocation5 + $0x1c8] sm:$0xff]
    %v161 = vld [vmem:[#allocation5 + $0x1d0] sm:$0xff]
    %v162 = vld [vmem:[#allocation5 + $0x1d8] sm:$0xff]
    %v163 = vld [vmem:[#allocation5 + $0x1e0] sm:$0xff]
    %v164 = vld [vmem:[#allocation5 + $0x1e8] sm:$0xff]
    %v165 = vld [vmem:[#allocation5 + $0x1f0] sm:$0xff]
    %v166 = vld [vmem:[#allocation5 + $0x1f8] sm:$0xff]
    %v167 = vld [vmem:[#allocation7] sm:$0xff]
    %v168 = vld [vmem:[#allocation7 + $0x8] sm:$0xff]
    %v169 = vld [vmem:[#allocation7 + $0x10] sm:$0xff]
    %v170 = vld [vmem:[#allocation7 + $0x18] sm:$0xff]
    %v171 = vld [vmem:[#allocation7 + $0x20] sm:$0xff]
    %v172 = vld [vmem:[#allocation7 + $0x28] sm:$0xff]
    %v173 = vld [vmem:[#allocation7 + $0x30] sm:$0xff]
    %v174 = vld [vmem:[#allocation7 + $0x38] sm:$0xff]
    %v175 = vld [vmem:[#allocation7 + $0x40] sm:$0xff]
    %v176 = vld [vmem:[#allocation7 + $0x48] sm:$0xff]
    %v177 = vld [vmem:[#allocation7 + $0x50] sm:$0xff]
    %v178 = vld [vmem:[#allocation7 + $0x58] sm:$0xff]
    %v179 = vld [vmem:[#allocation7 + $0x60] sm:$0xff]
    %v180 = vld [vmem:[#allocation7 + $0x68] sm:$0xff]
    %v181 = vld [vmem:[#allocation7 + $0x70] sm:$0xff]
    %v182 = vld [vmem:[#allocation7 + $0x78] sm:$0xff]
    %v183 = vld [vmem:[#allocation7 + $0x80] sm:$0xff]
    %v184 = vld [vmem:[#allocation7 + $0x88] sm:$0xff]
    %v185 = vld [vmem:[#allocation7 + $0x90] sm:$0xff]
    %v186 = vld [vmem:[#allocation7 + $0x98] sm:$0xff]
    %v187 = vld [vmem:[#allocation7 + $0xa0] sm:$0xff]
    %v188 = vld [vmem:[#allocation7 + $0xa8] sm:$0xff]
    %v189 = vld [vmem:[#allocation7 + $0xb0] sm:$0xff]
    %v190 = vld [vmem:[#allocation7 + $0xb8] sm:$0xff]
    %v191 = vld [vmem:[#allocation7 + $0xc0] sm:$0xff]
    %v192 = vld [vmem:[#allocation7 + $0xc8] sm:$0xff]
    %v193 = vld [vmem:[#allocation7 + $0xd0] sm:$0xff]
    %v194 = vld [vmem:[#allocation7 + $0xd8] sm:$0xff]
    %v195 = vld [vmem:[#allocation7 + $0xe0] sm:$0xff]
    %v196 = vld [vmem:[#allocation7 + $0xe8] sm:$0xff]
    %v197 = vld [vmem:[#allocation7 + $0xf0] sm:$0xff]
    %v198 = vld [vmem:[#allocation7 + $0xf8] sm:$0xff]
    %v199 = vld [vmem:[#allocation7 + $0x100] sm:$0xff]
    %v200 = vld [vmem:[#allocation7 + $0x108] sm:$0xff]
    %v201 = vld [vmem:[#allocation7 + $0x110] sm:$0xff]
    %v202 = vld [vmem:[#allocation7 + $0x118] sm:$0xff]
    %v203 = vld [vmem:[#allocation7 + $0x120] sm:$0xff]
    %v204 = vld [vmem:[#allocation7 + $0x128] sm:$0xff]
    %v205 = vld [vmem:[#allocation7 + $0x130] sm:$0xff]
    %v206 = vld [vmem:[#allocation7 + $0x138] sm:$0xff]
    %v207 = vld [vmem:[#allocation7 + $0x140] sm:$0xff]
    %v208 = vld [vmem:[#allocation7 + $0x148] sm:$0xff]
    %v209 = vld [vmem:[#allocation7 + $0x150] sm:$0xff]
    %v210 = vld [vmem:[#allocation7 + $0x158] sm:$0xff]
    %v211 = vld [vmem:[#allocation7 + $0x160] sm:$0xff]
    %v212 = vld [vmem:[#allocation7 + $0x168] sm:$0xff]
    %v213 = vld [vmem:[#allocation7 + $0x170] sm:$0xff]
    %v214 = vld [vmem:[#allocation7 + $0x178] sm:$0xff]
    %v215 = vld [vmem:[#allocation7 + $0x180] sm:$0xff]
    %v216 = vld [vmem:[#allocation7 + $0x188] sm:$0xff]
    %v217 = vld [vmem:[#allocation7 + $0x190] sm:$0xff]
    %v218 = vld [vmem:[#allocation7 + $0x198] sm:$0xff]
    %v219 = vld [vmem:[#allocation7 + $0x1a0] sm:$0xff]
    %v220 = vld [vmem:[#allocation7 + $0x1a8] sm:$0xff]
    %v221 = vld [vmem:[#allocation7 + $0x1b0] sm:$0xff]
    %v222 = vld [vmem:[#allocation7 + $0x1b8] sm:$0xff]
    %v223 = vld [vmem:[#allocation7 + $0x1c0] sm:$0xff]
    %v224 = vld [vmem:[#allocation7 + $0x1c8] sm:$0xff]
    %v225 = vld [vmem:[#allocation7 + $0x1d0] sm:$0xff]
    %v226 = vld [vmem:[#allocation7 + $0x1d8] sm:$0xff]
    %v227 = vld [vmem:[#allocation7 + $0x1e0] sm:$0xff]
    %v228 = vld [vmem:[#allocation7 + $0x1e8] sm:$0xff]
    %v229 = vld [vmem:[#allocation7 + $0x1f0] sm:$0xff]
    %v230 = vld [vmem:[#allocation7 + $0x1f8] sm:$0xff]
    %v231 = vld [vmem:[#allocation8] sm:$0xf]
    %v232 = vld [vmem:[#allocation2] sm:$0x3]
    %v234 = vlaneseq
    %v235 = vshrl.u32 %v234, 7
    %v236 = vsub.s32 0, %v235
    %v237 = vrot.slane %v231, %v236
    %v238 = vlaneseq
    %v239 = vshrl.u32 %v238, 7
    %v240 = vsub.s32 1, %v239
    %v241 = vrot.slane %v231, %v240
    %v242 = vlaneseq
    %v243 = vshrl.u32 %v242, 7
    %v244 = vsub.s32 2, %v243
    %v245 = vrot.slane %v231, %v244
    %v246 = vlaneseq
    %v247 = vshrl.u32 %v246, 7
    %v248 = vsub.s32 3, %v247
    %v249 = vrot.slane %v231, %v248
    %v256 = vunpack.c.l.s4 1966171168
    %v257 = vunpack.c.0.s8 %v256
    %v258 = vlaneseq
    %v259 = vshrl.u32 %v258, 7
    %v260 = vsub.s32 %v257, %v259
    %v261 = vrot.slane %v232, %v260
    %v262 = vcombine.high %v261, %v261
    %v264 = vunpack.c.l.s4 1966171168
    %v265 = vunpack.c.0.s8 %v264
    %v266 = vlaneseq
    %v267 = vshrl.u32 %v266, 7
    %v268 = vsub.s32 %v265, %v267
    %v269 = vrot.slane %v261, %v268
    %v271 = vunpack.c.l.s4 1966171168
    %v272 = vunpack.c.0.s8 %v271
    %v273 = vlaneseq
    %v274 = vshrl.u32 %v273, 7
    %v275 = vsub.s32 %v272, %v274
    %v276 = vrot.slane %v262, %v275
    %v343 = vunpack.c.l.b16 %v103
    %v344 = vunpack.c.h.b16 %v103
    %v345 = vunpack.c.l.b16 %v104
    %v346 = vunpack.c.h.b16 %v104
    %v347 = vunpack.c.l.b16 %v105
    %v348 = vunpack.c.h.b16 %v105
    %v349 = vunpack.c.l.b16 %v106
    %v350 = vunpack.c.h.b16 %v106
    %v351 = vunpack.c.l.b16 %v107
    %v352 = vunpack.c.h.b16 %v107
    %v353 = vunpack.c.l.b16 %v108
    %v354 = vunpack.c.h.b16 %v108
    %v355 = vunpack.c.l.b16 %v109
    %v356 = vunpack.c.h.b16 %v109
    %v357 = vunpack.c.l.b16 %v110
    %v358 = vunpack.c.h.b16 %v110
    %v359 = vunpack.c.l.b16 %v111
    %v360 = vunpack.c.h.b16 %v111
    %v361 = vunpack.c.l.b16 %v112
    %v362 = vunpack.c.h.b16 %v112
    %v363 = vunpack.c.l.b16 %v113
    %v364 = vunpack.c.h.b16 %v113
    %v365 = vunpack.c.l.b16 %v114
    %v366 = vunpack.c.h.b16 %v114
    %v367 = vunpack.c.l.b16 %v115
    %v368 = vunpack.c.h.b16 %v115
    %v369 = vunpack.c.l.b16 %v116
    %v370 = vunpack.c.h.b16 %v116
    %v371 = vunpack.c.l.b16 %v117
    %v372 = vunpack.c.h.b16 %v117
    %v373 = vunpack.c.l.b16 %v118
    %v374 = vunpack.c.h.b16 %v118
    %v375 = vunpack.c.l.b16 %v119
    %v376 = vunpack.c.h.b16 %v119
    %v377 = vunpack.c.l.b16 %v120
    %v378 = vunpack.c.h.b16 %v120
    %v379 = vunpack.c.l.b16 %v121
    %v380 = vunpack.c.h.b16 %v121
    %v381 = vunpack.c.l.b16 %v122
    %v382 = vunpack.c.h.b16 %v122
    %v383 = vunpack.c.l.b16 %v123
    %v384 = vunpack.c.h.b16 %v123
    %v385 = vunpack.c.l.b16 %v124
    %v386 = vunpack.c.h.b16 %v124
    %v387 = vunpack.c.l.b16 %v125
    %v388 = vunpack.c.h.b16 %v125
    %v389 = vunpack.c.l.b16 %v126
    %v390 = vunpack.c.h.b16 %v126
    %v391 = vunpack.c.l.b16 %v127
    %v392 = vunpack.c.h.b16 %v127
    %v393 = vunpack.c.l.b16 %v128
    %v394 = vunpack.c.h.b16 %v128
    %v395 = vunpack.c.l.b16 %v129
    %v396 = vunpack.c.h.b16 %v129
    %v397 = vunpack.c.l.b16 %v130
    %v398 = vunpack.c.h.b16 %v130
    %v399 = vunpack.c.l.b16 %v131
    %v400 = vunpack.c.h.b16 %v131
    %v401 = vunpack.c.l.b16 %v132
    %v402 = vunpack.c.h.b16 %v132
    %v403 = vunpack.c.l.b16 %v133
    %v404 = vunpack.c.h.b16 %v133
    %v405 = vunpack.c.l.b16 %v134
    %v406 = vunpack.c.h.b16 %v134
    %v407 = vunpack.c.l.b16 %v135
    %v408 = vunpack.c.h.b16 %v135
    %v409 = vunpack.c.l.b16 %v136
    %v410 = vunpack.c.h.b16 %v136
    %v411 = vunpack.c.l.b16 %v137
    %v412 = vunpack.c.h.b16 %v137
    %v413 = vunpack.c.l.b16 %v138
    %v414 = vunpack.c.h.b16 %v138
    %v415 = vunpack.c.l.b16 %v139
    %v416 = vunpack.c.h.b16 %v139
    %v417 = vunpack.c.l.b16 %v140
    %v418 = vunpack.c.h.b16 %v140
    %v419 = vunpack.c.l.b16 %v141
    %v420 = vunpack.c.h.b16 %v141
    %v421 = vunpack.c.l.b16 %v142
    %v422 = vunpack.c.h.b16 %v142
    %v423 = vunpack.c.l.b16 %v143
    %v424 = vunpack.c.h.b16 %v143
    %v425 = vunpack.c.l.b16 %v144
    %v426 = vunpack.c.h.b16 %v144
    %v427 = vunpack.c.l.b16 %v145
    %v428 = vunpack.c.h.b16 %v145
    %v429 = vunpack.c.l.b16 %v146
    %v430 = vunpack.c.h.b16 %v146
    %v431 = vunpack.c.l.b16 %v147
    %v432 = vunpack.c.h.b16 %v147
    %v433 = vunpack.c.l.b16 %v148
    %v434 = vunpack.c.h.b16 %v148
    %v435 = vunpack.c.l.b16 %v149
    %v436 = vunpack.c.h.b16 %v149
    %v437 = vunpack.c.l.b16 %v150
    %v438 = vunpack.c.h.b16 %v150
    %v439 = vunpack.c.l.b16 %v151
    %v440 = vunpack.c.h.b16 %v151
    %v441 = vunpack.c.l.b16 %v152
    %v442 = vunpack.c.h.b16 %v152
    %v443 = vunpack.c.l.b16 %v153
    %v444 = vunpack.c.h.b16 %v153
    %v445 = vunpack.c.l.b16 %v154
    %v446 = vunpack.c.h.b16 %v154
    %v447 = vunpack.c.l.b16 %v155
    %v448 = vunpack.c.h.b16 %v155
    %v449 = vunpack.c.l.b16 %v156
    %v450 = vunpack.c.h.b16 %v156
    %v451 = vunpack.c.l.b16 %v157
    %v452 = vunpack.c.h.b16 %v157
    %v453 = vunpack.c.l.b16 %v158
    %v454 = vunpack.c.h.b16 %v158
    %v455 = vunpack.c.l.b16 %v159
    %v456 = vunpack.c.h.b16 %v159
    %v457 = vunpack.c.l.b16 %v160
    %v458 = vunpack.c.h.b16 %v160
    %v459 = vunpack.c.l.b16 %v161
    %v460 = vunpack.c.h.b16 %v161
    %v461 = vunpack.c.l.b16 %v162
    %v462 = vunpack.c.h.b16 %v162
    %v463 = vunpack.c.l.b16 %v163
    %v464 = vunpack.c.h.b16 %v163
    %v465 = vunpack.c.l.b16 %v164
    %v466 = vunpack.c.h.b16 %v164
    %v467 = vunpack.c.l.b16 %v165
    %v468 = vunpack.c.h.b16 %v165
    %v469 = vunpack.c.l.b16 %v166
    %v470 = vunpack.c.h.b16 %v166
    %v471 = vpack.c.b16 %v347, %v343
    %v472 = vpack.c.b16 %v348, %v344
    %v473 = vpack.c.b16 %v349, %v345
    %v474 = vpack.c.b16 %v350, %v346
    %v475 = vpack.c.b16 %v355, %v351
    %v476 = vpack.c.b16 %v356, %v352
    %v477 = vpack.c.b16 %v357, %v353
    %v478 = vpack.c.b16 %v358, %v354
    %v479 = vpack.c.b16 %v363, %v359
    %v480 = vpack.c.b16 %v364, %v360
    %v481 = vpack.c.b16 %v365, %v361
    %v482 = vpack.c.b16 %v366, %v362
    %v483 = vpack.c.b16 %v371, %v367
    %v484 = vpack.c.b16 %v372, %v368
    %v485 = vpack.c.b16 %v373, %v369
    %v486 = vpack.c.b16 %v374, %v370
    %v487 = vpack.c.b16 %v379, %v375
    %v488 = vpack.c.b16 %v380, %v376
    %v489 = vpack.c.b16 %v381, %v377
    %v490 = vpack.c.b16 %v382, %v378
    %v491 = vpack.c.b16 %v387, %v383
    %v492 = vpack.c.b16 %v388, %v384
    %v493 = vpack.c.b16 %v389, %v385
    %v494 = vpack.c.b16 %v390, %v386
    %v495 = vpack.c.b16 %v395, %v391
    %v496 = vpack.c.b16 %v396, %v392
    %v497 = vpack.c.b16 %v397, %v393
    %v498 = vpack.c.b16 %v398, %v394
    %v499 = vpack.c.b16 %v403, %v399
    %v500 = vpack.c.b16 %v404, %v400
    %v501 = vpack.c.b16 %v405, %v401
    %v502 = vpack.c.b16 %v406, %v402
    %v503 = vpack.c.b16 %v411, %v407
    %v504 = vpack.c.b16 %v412, %v408
    %v505 = vpack.c.b16 %v413, %v409
    %v506 = vpack.c.b16 %v414, %v410
    %v507 = vpack.c.b16 %v419, %v415
    %v508 = vpack.c.b16 %v420, %v416
    %v509 = vpack.c.b16 %v421, %v417
    %v510 = vpack.c.b16 %v422, %v418
    %v511 = vpack.c.b16 %v427, %v423
    %v512 = vpack.c.b16 %v428, %v424
    %v513 = vpack.c.b16 %v429, %v425
    %v514 = vpack.c.b16 %v430, %v426
    %v515 = vpack.c.b16 %v435, %v431
    %v516 = vpack.c.b16 %v436, %v432
    %v517 = vpack.c.b16 %v437, %v433
    %v518 = vpack.c.b16 %v438, %v434
    %v519 = vpack.c.b16 %v443, %v439
    %v520 = vpack.c.b16 %v444, %v440
    %v521 = vpack.c.b16 %v445, %v441
    %v522 = vpack.c.b16 %v446, %v442
    %v523 = vpack.c.b16 %v451, %v447
    %v524 = vpack.c.b16 %v452, %v448
    %v525 = vpack.c.b16 %v453, %v449
    %v526 = vpack.c.b16 %v454, %v450
    %v527 = vpack.c.b16 %v459, %v455
    %v528 = vpack.c.b16 %v460, %v456
    %v529 = vpack.c.b16 %v461, %v457
    %v530 = vpack.c.b16 %v462, %v458
    %v531 = vpack.c.b16 %v467, %v463
    %v532 = vpack.c.b16 %v468, %v464
    %v533 = vpack.c.b16 %v469, %v465
    %v534 = vpack.c.b16 %v470, %v466
    %599 = vmatprep.subr.bf16.mxu0 %v472
    %600 = vmatpush1.bf16.msra.mxu0 %v471
    %601 = vmatprep.subr.bf16.mxu0 %v476
    %602 = vmatpush1.bf16.msra.mxu0 %v475
    %603 = vmatprep.subr.bf16.mxu0 %v480
    %604 = vmatpush1.bf16.msra.mxu0 %v479
    %605 = vmatprep.subr.bf16.mxu0 %v484
    %606 = vmatpush1.bf16.msra.mxu0 %v483
    %607 = vmatprep.subr.bf16.mxu0 %v488
    %608 = vmatpush1.bf16.msra.mxu0 %v487
    %609 = vmatprep.subr.bf16.mxu0 %v492
    %610 = vmatpush1.bf16.msra.mxu0 %v491
    %611 = vmatprep.subr.bf16.mxu0 %v496
    %612 = vmatpush1.bf16.msra.mxu0 %v495
    %613 = vmatprep.subr.bf16.mxu0 %v500
    %614 = vmatpush1.bf16.msra.mxu0 %v499
    %615 = vmatprep.subr.bf16.mxu0 %v504
    %616 = vmatpush1.bf16.msra.mxu0 %v503
    %617 = vmatprep.subr.bf16.mxu0 %v508
    %618 = vmatpush1.bf16.msra.mxu0 %v507
    %619 = vmatprep.subr.bf16.mxu0 %v512
    %620 = vmatpush1.bf16.msra.mxu0 %v511
    %621 = vmatprep.subr.bf16.mxu0 %v516
    %622 = vmatpush1.bf16.msra.mxu0 %v515
    %623 = vmatprep.subr.bf16.mxu0 %v520
    %624 = vmatpush1.bf16.msra.mxu0 %v519
    %625 = vmatprep.subr.bf16.mxu0 %v524
    %626 = vmatpush1.bf16.msra.mxu0 %v523
    %627 = vmatprep.subr.bf16.mxu0 %v528
    %628 = vmatpush1.bf16.msra.mxu0 %v527
    %629 = vmatprep.subr.bf16.mxu0 %v532
    %630 = vmatpush1.bf16.msra.mxu0 %v531
    %631 = vmatprep.mubr.bf16.mxu0 %v276
    %632 = vmatmul.mubr.bf16.gmra.mrb[0].mxu0 %v269
    %v633 = vpop.f32.mrb[0].mxu0
    %v634 = vadd.f32 %v237, %v633
    %v635 = vpop.f32.mrb[0].mxu0
    %v636 = vadd.f32 %v241, %v635
    %v637 = vpop.f32.mrb[0].mxu0
    %v638 = vpop.f32.mrb[0].mxu0
    %639 = vdwg.mxu0
    %640 = vmatprep.subr.bf16.mxu0 %v474
    %641 = vmatpush1.bf16.msra.mxu0 %v473
    %642 = vmatprep.subr.bf16.mxu0 %v478
    %643 = vmatpush1.bf16.msra.mxu0 %v477
    %644 = vmatprep.subr.bf16.mxu0 %v482
    %645 = vmatpush1.bf16.msra.mxu0 %v481
    %646 = vmatprep.subr.bf16.mxu0 %v486
    %647 = vmatpush1.bf16.msra.mxu0 %v485
    %648 = vmatprep.subr.bf16.mxu0 %v490
    %649 = vmatpush1.bf16.msra.mxu0 %v489
    %650 = vmatprep.subr.bf16.mxu0 %v494
    %651 = vmatpush1.bf16.msra.mxu0 %v493
    %652 = vmatprep.subr.bf16.mxu0 %v498
    %653 = vmatpush1.bf16.msra.mxu0 %v497
    %654 = vmatprep.subr.bf16.mxu0 %v502
    %655 = vmatpush1.bf16.msra.mxu0 %v501
    %656 = vmatprep.subr.bf16.mxu0 %v506
    %657 = vmatpush1.bf16.msra.mxu0 %v505
    %658 = vmatprep.subr.bf16.mxu0 %v510
    %659 = vmatpush1.bf16.msra.mxu0 %v509
    %660 = vmatprep.subr.bf16.mxu0 %v514
    %661 = vmatpush1.bf16.msra.mxu0 %v513
    %662 = vmatprep.subr.bf16.mxu0 %v518
    %663 = vmatpush1.bf16.msra.mxu0 %v517
    %664 = vmatprep.subr.bf16.mxu0 %v522
    %665 = vmatpush1.bf16.msra.mxu0 %v521
    %666 = vmatprep.subr.bf16.mxu0 %v526
    %667 = vmatpush1.bf16.msra.mxu0 %v525
    %668 = vmatprep.subr.bf16.mxu0 %v530
    %669 = vmatpush1.bf16.msra.mxu0 %v529
    %670 = vmatprep.subr.bf16.mxu0 %v534
    %671 = vmatpush1.bf16.msra.mxu0 %v533
    %672 = vmatprep.mubr.bf16.mxu0 %v276
    %673 = vmatmul.mubr.bf16.gmra.mrb[0].mxu0 %v269
    %v674 = vpop.f32.mrb[0].mxu0
    %v675 = vadd.f32 %v245, %v674
    %v676 = vpop.f32.mrb[0].mxu0
    %v677 = vadd.f32 %v249, %v676
    %v678 = vpop.f32.mrb[0].mxu0
    %v679 = vpop.f32.mrb[0].mxu0
    %680 = vdwg.mxu0
    %s681 = scalar_lea.vmem [#allocation2], 2
    %v682 = vld [vmem:[%s681] sm:$0x3]
    %v685 = vunpack.c.l.s4 1966171168
    %v686 = vunpack.c.0.s8 %v685
    %v687 = vlaneseq
    %v688 = vshrl.u32 %v687, 7
    %v689 = vsub.s32 %v686, %v688
    %v690 = vrot.slane %v682, %v689
    %v691 = vcombine.high %v690, %v690
    %v693 = vunpack.c.l.s4 1966171168
    %v694 = vunpack.c.0.s8 %v693
    %v695 = vlaneseq
    %v696 = vshrl.u32 %v695, 7
    %v697 = vsub.s32 %v694, %v696
    %v698 = vrot.slane %v690, %v697
    %v700 = vunpack.c.l.s4 1966171168
    %v701 = vunpack.c.0.s8 %v700
    %v702 = vlaneseq
    %v703 = vshrl.u32 %v702, 7
    %v704 = vsub.s32 %v701, %v703
    %v705 = vrot.slane %v691, %v704
    %708 = vmatprep.subr.bf16.mxu0 %v472
    %709 = vmatpush1.bf16.msra.mxu0 %v471
    %710 = vmatprep.subr.bf16.mxu0 %v476
    %711 = vmatpush1.bf16.msra.mxu0 %v475
    %712 = vmatprep.subr.bf16.mxu0 %v480
    %713 = vmatpush1.bf16.msra.mxu0 %v479
    %714 = vmatprep.subr.bf16.mxu0 %v484
    %715 = vmatpush1.bf16.msra.mxu0 %v483
    %716 = vmatprep.subr.bf16.mxu0 %v488
    %717 = vmatpush1.bf16.msra.mxu0 %v487
    %718 = vmatprep.subr.bf16.mxu0 %v492
    %719 = vmatpush1.bf16.msra.mxu0 %v491
    %720 = vmatprep.subr.bf16.mxu0 %v496
    %721 = vmatpush1.bf16.msra.mxu0 %v495
    %722 = vmatprep.subr.bf16.mxu0 %v500
    %723 = vmatpush1.bf16.msra.mxu0 %v499
    %724 = vmatprep.subr.bf16.mxu0 %v504
    %725 = vmatpush1.bf16.msra.mxu0 %v503
    %726 = vmatprep.subr.bf16.mxu0 %v508
    %727 = vmatpush1.bf16.msra.mxu0 %v507
    %728 = vmatprep.subr.bf16.mxu0 %v512
    %729 = vmatpush1.bf16.msra.mxu0 %v511
    %730 = vmatprep.subr.bf16.mxu0 %v516
    %731 = vmatpush1.bf16.msra.mxu0 %v515
    %732 = vmatprep.subr.bf16.mxu0 %v520
    %733 = vmatpush1.bf16.msra.mxu0 %v519
    %734 = vmatprep.subr.bf16.mxu0 %v524
    %735 = vmatpush1.bf16.msra.mxu0 %v523
    %736 = vmatprep.subr.bf16.mxu0 %v528
    %737 = vmatpush1.bf16.msra.mxu0 %v527
    %738 = vmatprep.subr.bf16.mxu0 %v532
    %739 = vmatpush1.bf16.msra.mxu0 %v531
    %740 = vmatprep.mubr.bf16.mxu0 %v705
    %741 = vmatmul.mubr.bf16.gmra.mrb[0].mxu0 %v698
    %v742 = vpop.f32.mrb[0].mxu0
    %v743 = vadd.f32 %v237, %v742
    %v744 = vpop.f32.mrb[0].mxu0
    %v745 = vadd.f32 %v241, %v744
    %v746 = vpop.f32.mrb[0].mxu0
    %v747 = vpop.f32.mrb[0].mxu0
    %748 = vdwg.mxu0
    %749 = vmatprep.subr.bf16.mxu0 %v474
    %750 = vmatpush1.bf16.msra.mxu0 %v473
    %751 = vmatprep.subr.bf16.mxu0 %v478
    %752 = vmatpush1.bf16.msra.mxu0 %v477
    %753 = vmatprep.subr.bf16.mxu0 %v482
    %754 = vmatpush1.bf16.msra.mxu0 %v481
    %755 = vmatprep.subr.bf16.mxu0 %v486
    %756 = vmatpush1.bf16.msra.mxu0 %v485
    %757 = vmatprep.subr.bf16.mxu0 %v490
    %758 = vmatpush1.bf16.msra.mxu0 %v489
    %759 = vmatprep.subr.bf16.mxu0 %v494
    %760 = vmatpush1.bf16.msra.mxu0 %v493
    %761 = vmatprep.subr.bf16.mxu0 %v498
    %762 = vmatpush1.bf16.msra.mxu0 %v497
    %763 = vmatprep.subr.bf16.mxu0 %v502
    %764 = vmatpush1.bf16.msra.mxu0 %v501
    %765 = vmatprep.subr.bf16.mxu0 %v506
    %766 = vmatpush1.bf16.msra.mxu0 %v505
    %767 = vmatprep.subr.bf16.mxu0 %v510
    %768 = vmatpush1.bf16.msra.mxu0 %v509
    %769 = vmatprep.subr.bf16.mxu0 %v514
    %770 = vmatpush1.bf16.msra.mxu0 %v513
    %771 = vmatprep.subr.bf16.mxu0 %v518
    %772 = vmatpush1.bf16.msra.mxu0 %v517
    %773 = vmatprep.subr.bf16.mxu0 %v522
    %774 = vmatpush1.bf16.msra.mxu0 %v521
    %775 = vmatprep.subr.bf16.mxu0 %v526
    %776 = vmatpush1.bf16.msra.mxu0 %v525
    %777 = vmatprep.subr.bf16.mxu0 %v530
    %778 = vmatpush1.bf16.msra.mxu0 %v529
    %779 = vmatprep.subr.bf16.mxu0 %v534
    %780 = vmatpush1.bf16.msra.mxu0 %v533
    %781 = vmatprep.mubr.bf16.mxu0 %v705
    %782 = vmatmul.mubr.bf16.gmra.mrb[0].mxu0 %v698
    %v783 = vpop.f32.mrb[0].mxu0
    %v784 = vadd.f32 %v245, %v783
    %v785 = vpop.f32.mrb[0].mxu0
    %v786 = vadd.f32 %v249, %v785
    %v787 = vpop.f32.mrb[0].mxu0
    %v788 = vpop.f32.mrb[0].mxu0
    %789 = vdwg.mxu0
    %s790 = scalar_lea.vmem [#allocation2], 4
    %v791 = vld [vmem:[%s790] sm:$0x3]
    %v794 = vunpack.c.l.s4 1966171168
    %v795 = vunpack.c.0.s8 %v794
    %v796 = vlaneseq
    %v797 = vshrl.u32 %v796, 7
    %v798 = vsub.s32 %v795, %v797
    %v799 = vrot.slane %v791, %v798
    %v800 = vcombine.high %v799, %v799
    %v802 = vunpack.c.l.s4 1966171168
    %v803 = vunpack.c.0.s8 %v802
    %v804 = vlaneseq
    %v805 = vshrl.u32 %v804, 7
    %v806 = vsub.s32 %v803, %v805
    %v807 = vrot.slane %v799, %v806
    %v809 = vunpack.c.l.s4 1966171168
    %v810 = vunpack.c.0.s8 %v809
    %v811 = vlaneseq
    %v812 = vshrl.u32 %v811, 7
    %v813 = vsub.s32 %v810, %v812
    %v814 = vrot.slane %v800, %v813
    %817 = vmatprep.subr.bf16.mxu0 %v472
    %818 = vmatpush1.bf16.msra.mxu0 %v471
    %819 = vmatprep.subr.bf16.mxu0 %v476
    %820 = vmatpush1.bf16.msra.mxu0 %v475
    %821 = vmatprep.subr.bf16.mxu0 %v480
    %822 = vmatpush1.bf16.msra.mxu0 %v479
    %823 = vmatprep.subr.bf16.mxu0 %v484
    %824 = vmatpush1.bf16.msra.mxu0 %v483
    %825 = vmatprep.subr.bf16.mxu0 %v488
    %826 = vmatpush1.bf16.msra.mxu0 %v487
    %827 = vmatprep.subr.bf16.mxu0 %v492
    %828 = vmatpush1.bf16.msra.mxu0 %v491
    %829 = vmatprep.subr.bf16.mxu0 %v496
    %830 = vmatpush1.bf16.msra.mxu0 %v495
    %831 = vmatprep.subr.bf16.mxu0 %v500
    %832 = vmatpush1.bf16.msra.mxu0 %v499
    %833 = vmatprep.subr.bf16.mxu0 %v504
    %834 = vmatpush1.bf16.msra.mxu0 %v503
    %835 = vmatprep.subr.bf16.mxu0 %v508
    %836 = vmatpush1.bf16.msra.mxu0 %v507
    %837 = vmatprep.subr.bf16.mxu0 %v512
    %838 = vmatpush1.bf16.msra.mxu0 %v511
    %839 = vmatprep.subr.bf16.mxu0 %v516
    %840 = vmatpush1.bf16.msra.mxu0 %v515
    %841 = vmatprep.subr.bf16.mxu0 %v520
    %842 = vmatpush1.bf16.msra.mxu0 %v519
    %843 = vmatprep.subr.bf16.mxu0 %v524
    %844 = vmatpush1.bf16.msra.mxu0 %v523
    %845 = vmatprep.subr.bf16.mxu0 %v528
    %846 = vmatpush1.bf16.msra.mxu0 %v527
    %847 = vmatprep.subr.bf16.mxu0 %v532
    %848 = vmatpush1.bf16.msra.mxu0 %v531
    %849 = vmatprep.mubr.bf16.mxu0 %v814
    %850 = vmatmul.mubr.bf16.gmra.mrb[0].mxu0 %v807
    %v851 = vpop.f32.mrb[0].mxu0
    %v852 = vadd.f32 %v237, %v851
    %v853 = vpop.f32.mrb[0].mxu0
    %v854 = vadd.f32 %v241, %v853
    %v855 = vpop.f32.mrb[0].mxu0
    %v856 = vpop.f32.mrb[0].mxu0
    %857 = vdwg.mxu0
    %858 = vmatprep.subr.bf16.mxu0 %v474
    %859 = vmatpush1.bf16.msra.mxu0 %v473
    %860 = vmatprep.subr.bf16.mxu0 %v478
    %861 = vmatpush1.bf16.msra.mxu0 %v477
    %862 = vmatprep.subr.bf16.mxu0 %v482
    %863 = vmatpush1.bf16.msra.mxu0 %v481
    %864 = vmatprep.subr.bf16.mxu0 %v486
    %865 = vmatpush1.bf16.msra.mxu0 %v485
    %866 = vmatprep.subr.bf16.mxu0 %v490
    %867 = vmatpush1.bf16.msra.mxu0 %v489
    %868 = vmatprep.subr.bf16.mxu0 %v494
    %869 = vmatpush1.bf16.msra.mxu0 %v493
    %870 = vmatprep.subr.bf16.mxu0 %v498
    %871 = vmatpush1.bf16.msra.mxu0 %v497
    %872 = vmatprep.subr.bf16.mxu0 %v502
    %873 = vmatpush1.bf16.msra.mxu0 %v501
    %874 = vmatprep.subr.bf16.mxu0 %v506
    %875 = vmatpush1.bf16.msra.mxu0 %v505
    %876 = vmatprep.subr.bf16.mxu0 %v510
    %877 = vmatpush1.bf16.msra.mxu0 %v509
    %878 = vmatprep.subr.bf16.mxu0 %v514
    %879 = vmatpush1.bf16.msra.mxu0 %v513
    %880 = vmatprep.subr.bf16.mxu0 %v518
    %881 = vmatpush1.bf16.msra.mxu0 %v517
    %882 = vmatprep.subr.bf16.mxu0 %v522
    %883 = vmatpush1.bf16.msra.mxu0 %v521
    %884 = vmatprep.subr.bf16.mxu0 %v526
    %885 = vmatpush1.bf16.msra.mxu0 %v525
    %886 = vmatprep.subr.bf16.mxu0 %v530
    %887 = vmatpush1.bf16.msra.mxu0 %v529
    %888 = vmatprep.subr.bf16.mxu0 %v534
    %889 = vmatpush1.bf16.msra.mxu0 %v533
    %890 = vmatprep.mubr.bf16.mxu0 %v814
    %891 = vmatmul.mubr.bf16.gmra.mrb[0].mxu0 %v807
    %v892 = vpop.f32.mrb[0].mxu0
    %v893 = vadd.f32 %v245, %v892
    %v894 = vpop.f32.mrb[0].mxu0
    %v895 = vadd.f32 %v249, %v894
    %v896 = vpop.f32.mrb[0].mxu0
    %v897 = vpop.f32.mrb[0].mxu0
    %898 = vdwg.mxu0
    %s899 = scalar_lea.vmem [#allocation2], 6
    %v900 = vld [vmem:[%s899] sm:$0x3]
    %v903 = vunpack.c.l.s4 1966171168
    %v904 = vunpack.c.0.s8 %v903
    %v905 = vlaneseq
    %v906 = vshrl.u32 %v905, 7
    %v907 = vsub.s32 %v904, %v906
    %v908 = vrot.slane %v900, %v907
    %v909 = vcombine.high %v908, %v908
    %v911 = vunpack.c.l.s4 1966171168
    %v912 = vunpack.c.0.s8 %v911
    %v913 = vlaneseq
    %v914 = vshrl.u32 %v913, 7
    %v915 = vsub.s32 %v912, %v914
    %v916 = vrot.slane %v908, %v915
    %v918 = vunpack.c.l.s4 1966171168
    %v919 = vunpack.c.0.s8 %v918
    %v920 = vlaneseq
    %v921 = vshrl.u32 %v920, 7
    %v922 = vsub.s32 %v919, %v921
    %v923 = vrot.slane %v909, %v922
    %926 = vmatprep.subr.bf16.mxu0 %v472
    %927 = vmatpush1.bf16.msra.mxu0 %v471
    %928 = vmatprep.subr.bf16.mxu0 %v476
    %929 = vmatpush1.bf16.msra.mxu0 %v475
    %930 = vmatprep.subr.bf16.mxu0 %v480
    %931 = vmatpush1.bf16.msra.mxu0 %v479
    %932 = vmatprep.subr.bf16.mxu0 %v484
    %933 = vmatpush1.bf16.msra.mxu0 %v483
    %934 = vmatprep.subr.bf16.mxu0 %v488
    %935 = vmatpush1.bf16.msra.mxu0 %v487
    %936 = vmatprep.subr.bf16.mxu0 %v492
    %937 = vmatpush1.bf16.msra.mxu0 %v491
    %938 = vmatprep.subr.bf16.mxu0 %v496
    %939 = vmatpush1.bf16.msra.mxu0 %v495
    %940 = vmatprep.subr.bf16.mxu0 %v500
    %941 = vmatpush1.bf16.msra.mxu0 %v499
    %942 = vmatprep.subr.bf16.mxu0 %v504
    %943 = vmatpush1.bf16.msra.mxu0 %v503
    %944 = vmatprep.subr.bf16.mxu0 %v508
    %945 = vmatpush1.bf16.msra.mxu0 %v507
    %946 = vmatprep.subr.bf16.mxu0 %v512
    %947 = vmatpush1.bf16.msra.mxu0 %v511
    %948 = vmatprep.subr.bf16.mxu0 %v516
    %949 = vmatpush1.bf16.msra.mxu0 %v515
    %950 = vmatprep.subr.bf16.mxu0 %v520
    %951 = vmatpush1.bf16.msra.mxu0 %v519
    %952 = vmatprep.subr.bf16.mxu0 %v524
    %953 = vmatpush1.bf16.msra.mxu0 %v523
    %954 = vmatprep.subr.bf16.mxu0 %v528
    %955 = vmatpush1.bf16.msra.mxu0 %v527
    %956 = vmatprep.subr.bf16.mxu0 %v532
    %957 = vmatpush1.bf16.msra.mxu0 %v531
    %958 = vmatprep.mubr.bf16.mxu0 %v923
    %959 = vmatmul.mubr.bf16.gmra.mrb[0].mxu0 %v916
    %v960 = vpop.f32.mrb[0].mxu0
    %v961 = vadd.f32 %v237, %v960
    %v962 = vpop.f32.mrb[0].mxu0
    %v963 = vadd.f32 %v241, %v962
    %v964 = vpop.f32.mrb[0].mxu0
    %v965 = vpop.f32.mrb[0].mxu0
    %966 = vdwg.mxu0
    %967 = vmatprep.subr.bf16.mxu0 %v474
    %968 = vmatpush1.bf16.msra.mxu0 %v473
    %969 = vmatprep.subr.bf16.mxu0 %v478
    %970 = vmatpush1.bf16.msra.mxu0 %v477
    %971 = vmatprep.subr.bf16.mxu0 %v482
    %972 = vmatpush1.bf16.msra.mxu0 %v481
    %973 = vmatprep.subr.bf16.mxu0 %v486
    %974 = vmatpush1.bf16.msra.mxu0 %v485
    %975 = vmatprep.subr.bf16.mxu0 %v490
    %976 = vmatpush1.bf16.msra.mxu0 %v489
    %977 = vmatprep.subr.bf16.mxu0 %v494
    %978 = vmatpush1.bf16.msra.mxu0 %v493
    %979 = vmatprep.subr.bf16.mxu0 %v498
    %980 = vmatpush1.bf16.msra.mxu0 %v497
    %981 = vmatprep.subr.bf16.mxu0 %v502
    %982 = vmatpush1.bf16.msra.mxu0 %v501
    %983 = vmatprep.subr.bf16.mxu0 %v506
    %984 = vmatpush1.bf16.msra.mxu0 %v505
    %985 = vmatprep.subr.bf16.mxu0 %v510
    %986 = vmatpush1.bf16.msra.mxu0 %v509
    %987 = vmatprep.subr.bf16.mxu0 %v514
    %988 = vmatpush1.bf16.msra.mxu0 %v513
    %989 = vmatprep.subr.bf16.mxu0 %v518
    %990 = vmatpush1.bf16.msra.mxu0 %v517
    %991 = vmatprep.subr.bf16.mxu0 %v522
    %992 = vmatpush1.bf16.msra.mxu0 %v521
    %993 = vmatprep.subr.bf16.mxu0 %v526
    %994 = vmatpush1.bf16.msra.mxu0 %v525
    %995 = vmatprep.subr.bf16.mxu0 %v530
    %996 = vmatpush1.bf16.msra.mxu0 %v529
    %997 = vmatprep.subr.bf16.mxu0 %v534
    %998 = vmatpush1.bf16.msra.mxu0 %v533
    %999 = vmatprep.mubr.bf16.mxu0 %v923
    %1000 = vmatmul.mubr.bf16.gmra.mrb[0].mxu0 %v916
    %v1001 = vpop.f32.mrb[0].mxu0
    %v1002 = vadd.f32 %v245, %v1001
    %v1003 = vpop.f32.mrb[0].mxu0
    %v1004 = vadd.f32 %v249, %v1003
    %v1005 = vpop.f32.mrb[0].mxu0
    %v1006 = vpop.f32.mrb[0].mxu0
    %1007 = vdwg.mxu0
    %s1008 = scalar_lea.vmem [#allocation2], 8
    %v1009 = vld [vmem:[%s1008] sm:$0x3]
    %v1012 = vunpack.c.l.s4 1966171168
    %v1013 = vunpack.c.0.s8 %v1012
    %v1014 = vlaneseq
    %v1015 = vshrl.u32 %v1014, 7
    %v1016 = vsub.s32 %v1013, %v1015
    %v1017 = vrot.slane %v1009, %v1016
    %v1018 = vcombine.high %v1017, %v1017
    %v1020 = vunpack.c.l.s4 1966171168
    %v1021 = vunpack.c.0.s8 %v1020
    %v1022 = vlaneseq
    %v1023 = vshrl.u32 %v1022, 7
    %v1024 = vsub.s32 %v1021, %v1023
    %v1025 = vrot.slane %v1017, %v1024
    %v1027 = vunpack.c.l.s4 1966171168
    %v1028 = vunpack.c.0.s8 %v1027
    %v1029 = vlaneseq
    %v1030 = vshrl.u32 %v1029, 7
    %v1031 = vsub.s32 %v1028, %v1030
    %v1032 = vrot.slane %v1018, %v1031
    %1035 = vmatprep.subr.bf16.mxu0 %v472
    %1036 = vmatpush1.bf16.msra.mxu0 %v471
    %1037 = vmatprep.subr.bf16.mxu0 %v476
    %1038 = vmatpush1.bf16.msra.mxu0 %v475
    %1039 = vmatprep.subr.bf16.mxu0 %v480
    %1040 = vmatpush1.bf16.msra.mxu0 %v479
    %1041 = vmatprep.subr.bf16.mxu0 %v484
    %1042 = vmatpush1.bf16.msra.mxu0 %v483
    %1043 = vmatprep.subr.bf16.mxu0 %v488
    %1044 = vmatpush1.bf16.msra.mxu0 %v487
    %1045 = vmatprep.subr.bf16.mxu0 %v492
    %1046 = vmatpush1.bf16.msra.mxu0 %v491
    %1047 = vmatprep.subr.bf16.mxu0 %v496
    %1048 = vmatpush1.bf16.msra.mxu0 %v495
    %1049 = vmatprep.subr.bf16.mxu0 %v500
    %1050 = vmatpush1.bf16.msra.mxu0 %v499
    %1051 = vmatprep.subr.bf16.mxu0 %v504
    %1052 = vmatpush1.bf16.msra.mxu0 %v503
    %1053 = vmatprep.subr.bf16.mxu0 %v508
    %1054 = vmatpush1.bf16.msra.mxu0 %v507
    %1055 = vmatprep.subr.bf16.mxu0 %v512
    %1056 = vmatpush1.bf16.msra.mxu0 %v511
    %1057 = vmatprep.subr.bf16.mxu0 %v516
    %1058 = vmatpush1.bf16.msra.mxu0 %v515
    %1059 = vmatprep.subr.bf16.mxu0 %v520
    %1060 = vmatpush1.bf16.msra.mxu0 %v519
    %1061 = vmatprep.subr.bf16.mxu0 %v524
    %1062 = vmatpush1.bf16.msra.mxu0 %v523
    %1063 = vmatprep.subr.bf16.mxu0 %v528
    %1064 = vmatpush1.bf16.msra.mxu0 %v527
    %1065 = vmatprep.subr.bf16.mxu0 %v532
    %1066 = vmatpush1.bf16.msra.mxu0 %v531
    %1067 = vmatprep.mubr.bf16.mxu0 %v1032
    %1068 = vmatmul.mubr.bf16.gmra.mrb[0].mxu0 %v1025
    %v1069 = vpop.f32.mrb[0].mxu0
    %v1070 = vadd.f32 %v237, %v1069
    %v1071 = vpop.f32.mrb[0].mxu0
    %v1072 = vadd.f32 %v241, %v1071
    %v1073 = vpop.f32.mrb[0].mxu0
    %v1074 = vpop.f32.mrb[0].mxu0
    %1075 = vdwg.mxu0
    %1076 = vmatprep.subr.bf16.mxu0 %v474
    %1077 = vmatpush1.bf16.msra.mxu0 %v473
    %1078 = vmatprep.subr.bf16.mxu0 %v478
    %1079 = vmatpush1.bf16.msra.mxu0 %v477
    %1080 = vmatprep.subr.bf16.mxu0 %v482
    %1081 = vmatpush1.bf16.msra.mxu0 %v481
    %1082 = vmatprep.subr.bf16.mxu0 %v486
    %1083 = vmatpush1.bf16.msra.mxu0 %v485
    %1084 = vmatprep.subr.bf16.mxu0 %v490
    %1085 = vmatpush1.bf16.msra.mxu0 %v489
    %1086 = vmatprep.subr.bf16.mxu0 %v494
    %1087 = vmatpush1.bf16.msra.mxu0 %v493
    %1088 = vmatprep.subr.bf16.mxu0 %v498
    %1089 = vmatpush1.bf16.msra.mxu0 %v497
    %1090 = vmatprep.subr.bf16.mxu0 %v502
    %1091 = vmatpush1.bf16.msra.mxu0 %v501
    %1092 = vmatprep.subr.bf16.mxu0 %v506
    %1093 = vmatpush1.bf16.msra.mxu0 %v505
    %1094 = vmatprep.subr.bf16.mxu0 %v510
    %1095 = vmatpush1.bf16.msra.mxu0 %v509
    %1096 = vmatprep.subr.bf16.mxu0 %v514
    %1097 = vmatpush1.bf16.msra.mxu0 %v513
    %1098 = vmatprep.subr.bf16.mxu0 %v518
    %1099 = vmatpush1.bf16.msra.mxu0 %v517
    %1100 = vmatprep.subr.bf16.mxu0 %v522
    %1101 = vmatpush1.bf16.msra.mxu0 %v521
    %1102 = vmatprep.subr.bf16.mxu0 %v526
    %1103 = vmatpush1.bf16.msra.mxu0 %v525
    %1104 = vmatprep.subr.bf16.mxu0 %v530
    %1105 = vmatpush1.bf16.msra.mxu0 %v529
    %1106 = vmatprep.subr.bf16.mxu0 %v534
    %1107 = vmatpush1.bf16.msra.mxu0 %v533
    %1108 = vmatprep.mubr.bf16.mxu0 %v1032
    %1109 = vmatmul.mubr.bf16.gmra.mrb[0].mxu0 %v1025
    %v1110 = vpop.f32.mrb[0].mxu0
    %v1111 = vadd.f32 %v245, %v1110
    %v1112 = vpop.f32.mrb[0].mxu0
    %v1113 = vadd.f32 %v249, %v1112
    %v1114 = vpop.f32.mrb[0].mxu0
    %v1115 = vpop.f32.mrb[0].mxu0
    %1116 = vdwg.mxu0
    %s1117 = scalar_lea.vmem [#allocation2], 10
    %v1118 = vld [vmem:[%s1117] sm:$0x3]
    %v1121 = vunpack.c.l.s4 1966171168
    %v1122 = vunpack.c.0.s8 %v1121
    %v1123 = vlaneseq
    %v1124 = vshrl.u32 %v1123, 7
    %v1125 = vsub.s32 %v1122, %v1124
    %v1126 = vrot.slane %v1118, %v1125
    %v1127 = vcombine.high %v1126, %v1126
    %v1129 = vunpack.c.l.s4 1966171168
    %v1130 = vunpack.c.0.s8 %v1129
    %v1131 = vlaneseq
    %v1132 = vshrl.u32 %v1131, 7
    %v1133 = vsub.s32 %v1130, %v1132
    %v1134 = vrot.slane %v1126, %v1133
    %v1136 = vunpack.c.l.s4 1966171168
    %v1137 = vunpack.c.0.s8 %v1136
    %v1138 = vlaneseq
    %v1139 = vshrl.u32 %v1138, 7
    %v1140 = vsub.s32 %v1137, %v1139
    %v1141 = vrot.slane %v1127, %v1140
    %1144 = vmatprep.subr.bf16.mxu0 %v472
    %1145 = vmatpush1.bf16.msra.mxu0 %v471
    %1146 = vmatprep.subr.bf16.mxu0 %v476
    %1147 = vmatpush1.bf16.msra.mxu0 %v475
    %1148 = vmatprep.subr.bf16.mxu0 %v480
    %1149 = vmatpush1.bf16.msra.mxu0 %v479
    %1150 = vmatprep.subr.bf16.mxu0 %v484
    %1151 = vmatpush1.bf16.msra.mxu0 %v483
    %1152 = vmatprep.subr.bf16.mxu0 %v488
    %1153 = vmatpush1.bf16.msra.mxu0 %v487
    %1154 = vmatprep.subr.bf16.mxu0 %v492
    %1155 = vmatpush1.bf16.msra.mxu0 %v491
    %1156 = vmatprep.subr.bf16.mxu0 %v496
    %1157 = vmatpush1.bf16.msra.mxu0 %v495
    %1158 = vmatprep.subr.bf16.mxu0 %v500
    %1159 = vmatpush1.bf16.msra.mxu0 %v499
    %1160 = vmatprep.subr.bf16.mxu0 %v504
    %1161 = vmatpush1.bf16.msra.mxu0 %v503
    %1162 = vmatprep.subr.bf16.mxu0 %v508
    %1163 = vmatpush1.bf16.msra.mxu0 %v507
    %1164 = vmatprep.subr.bf16.mxu0 %v512
    %1165 = vmatpush1.bf16.msra.mxu0 %v511
    %1166 = vmatprep.subr.bf16.mxu0 %v516
    %1167 = vmatpush1.bf16.msra.mxu0 %v515
    %1168 = vmatprep.subr.bf16.mxu0 %v520
    %1169 = vmatpush1.bf16.msra.mxu0 %v519
    %1170 = vmatprep.subr.bf16.mxu0 %v524
    %1171 = vmatpush1.bf16.msra.mxu0 %v523
    %1172 = vmatprep.subr.bf16.mxu0 %v528
    %1173 = vmatpush1.bf16.msra.mxu0 %v527
    %1174 = vmatprep.subr.bf16.mxu0 %v532
    %1175 = vmatpush1.bf16.msra.mxu0 %v531
    %1176 = vmatprep.mubr.bf16.mxu0 %v1141
    %1177 = vmatmul.mubr.bf16.gmra.mrb[0].mxu0 %v1134
    %v1178 = vpop.f32.mrb[0].mxu0
    %v1179 = vadd.f32 %v237, %v1178
    %v1180 = vpop.f32.mrb[0].mxu0
    %v1181 = vadd.f32 %v241, %v1180
    %v1182 = vpop.f32.mrb[0].mxu0
    %v1183 = vpop.f32.mrb[0].mxu0
    %1184 = vdwg.mxu0
    %1185 = vmatprep.subr.bf16.mxu0 %v474
    %1186 = vmatpush1.bf16.msra.mxu0 %v473
    %1187 = vmatprep.subr.bf16.mxu0 %v478
    %1188 = vmatpush1.bf16.msra.mxu0 %v477
    %1189 = vmatprep.subr.bf16.mxu0 %v482
    %1190 = vmatpush1.bf16.msra.mxu0 %v481
    %1191 = vmatprep.subr.bf16.mxu0 %v486
    %1192 = vmatpush1.bf16.msra.mxu0 %v485
    %1193 = vmatprep.subr.bf16.mxu0 %v490
    %1194 = vmatpush1.bf16.msra.mxu0 %v489
    %1195 = vmatprep.subr.bf16.mxu0 %v494
    %1196 = vmatpush1.bf16.msra.mxu0 %v493
    %1197 = vmatprep.subr.bf16.mxu0 %v498
    %1198 = vmatpush1.bf16.msra.mxu0 %v497
    %1199 = vmatprep.subr.bf16.mxu0 %v502
    %1200 = vmatpush1.bf16.msra.mxu0 %v501
    %1201 = vmatprep.subr.bf16.mxu0 %v506
    %1202 = vmatpush1.bf16.msra.mxu0 %v505
    %1203 = vmatprep.subr.bf16.mxu0 %v510
    %1204 = vmatpush1.bf16.msra.mxu0 %v509
    %1205 = vmatprep.subr.bf16.mxu0 %v514
    %1206 = vmatpush1.bf16.msra.mxu0 %v513
    %1207 = vmatprep.subr.bf16.mxu0 %v518
    %1208 = vmatpush1.bf16.msra.mxu0 %v517
    %1209 = vmatprep.subr.bf16.mxu0 %v522
    %1210 = vmatpush1.bf16.msra.mxu0 %v521
    %1211 = vmatprep.subr.bf16.mxu0 %v526
    %1212 = vmatpush1.bf16.msra.mxu0 %v525
    %1213 = vmatprep.subr.bf16.mxu0 %v530
    %1214 = vmatpush1.bf16.msra.mxu0 %v529
    %1215 = vmatprep.subr.bf16.mxu0 %v534
    %1216 = vmatpush1.bf16.msra.mxu0 %v533
    %1217 = vmatprep.mubr.bf16.mxu0 %v1141
    %1218 = vmatmul.mubr.bf16.gmra.mrb[0].mxu0 %v1134
    %v1219 = vpop.f32.mrb[0].mxu0
    %v1220 = vadd.f32 %v245, %v1219
    %v1221 = vpop.f32.mrb[0].mxu0
    %v1222 = vadd.f32 %v249, %v1221
    %v1223 = vpop.f32.mrb[0].mxu0
    %v1224 = vpop.f32.mrb[0].mxu0
    %1225 = vdwg.mxu0
    %s1226 = scalar_lea.vmem [#allocation2], 12
    %v1227 = vld [vmem:[%s1226] sm:$0x3]
    %v1230 = vunpack.c.l.s4 1966171168
    %v1231 = vunpack.c.0.s8 %v1230
    %v1232 = vlaneseq
    %v1233 = vshrl.u32 %v1232, 7
    %v1234 = vsub.s32 %v1231, %v1233
    %v1235 = vrot.slane %v1227, %v1234
    %v1236 = vcombine.high %v1235, %v1235
    %v1238 = vunpack.c.l.s4 1966171168
    %v1239 = vunpack.c.0.s8 %v1238
    %v1240 = vlaneseq
    %v1241 = vshrl.u32 %v1240, 7
    %v1242 = vsub.s32 %v1239, %v1241
    %v1243 = vrot.slane %v1235, %v1242
    %v1245 = vunpack.c.l.s4 1966171168
    %v1246 = vunpack.c.0.s8 %v1245
    %v1247 = vlaneseq
    %v1248 = vshrl.u32 %v1247, 7
    %v1249 = vsub.s32 %v1246, %v1248
    %v1250 = vrot.slane %v1236, %v1249
    %1253 = vmatprep.subr.bf16.mxu0 %v472
    %1254 = vmatpush1.bf16.msra.mxu0 %v471
    %1255 = vmatprep.subr.bf16.mxu0 %v476
    %1256 = vmatpush1.bf16.msra.mxu0 %v475
    %1257 = vmatprep.subr.bf16.mxu0 %v480
    %1258 = vmatpush1.bf16.msra.mxu0 %v479
    %1259 = vmatprep.subr.bf16.mxu0 %v484
    %1260 = vmatpush1.bf16.msra.mxu0 %v483
    %1261 = vmatprep.subr.bf16.mxu0 %v488
    %1262 = vmatpush1.bf16.msra.mxu0 %v487
    %1263 = vmatprep.subr.bf16.mxu0 %v492
    %1264 = vmatpush1.bf16.msra.mxu0 %v491
    %1265 = vmatprep.subr.bf16.mxu0 %v496
    %1266 = vmatpush1.bf16.msra.mxu0 %v495
    %1267 = vmatprep.subr.bf16.mxu0 %v500
    %1268 = vmatpush1.bf16.msra.mxu0 %v499
    %1269 = vmatprep.subr.bf16.mxu0 %v504
    %1270 = vmatpush1.bf16.msra.mxu0 %v503
    %1271 = vmatprep.subr.bf16.mxu0 %v508
    %1272 = vmatpush1.bf16.msra.mxu0 %v507
    %1273 = vmatprep.subr.bf16.mxu0 %v512
    %1274 = vmatpush1.bf16.msra.mxu0 %v511
    %1275 = vmatprep.subr.bf16.mxu0 %v516
    %1276 = vmatpush1.bf16.msra.mxu0 %v515
    %1277 = vmatprep.subr.bf16.mxu0 %v520
    %1278 = vmatpush1.bf16.msra.mxu0 %v519
    %1279 = vmatprep.subr.bf16.mxu0 %v524
    %1280 = vmatpush1.bf16.msra.mxu0 %v523
    %1281 = vmatprep.subr.bf16.mxu0 %v528
    %1282 = vmatpush1.bf16.msra.mxu0 %v527
    %1283 = vmatprep.subr.bf16.mxu0 %v532
    %1284 = vmatpush1.bf16.msra.mxu0 %v531
    %1285 = vmatprep.mubr.bf16.mxu0 %v1250
    %1286 = vmatmul.mubr.bf16.gmra.mrb[0].mxu0 %v1243
    %v1287 = vpop.f32.mrb[0].mxu0
    %v1288 = vadd.f32 %v237, %v1287
    %v1289 = vpop.f32.mrb[0].mxu0
    %v1290 = vadd.f32 %v241, %v1289
    %v1291 = vpop.f32.mrb[0].mxu0
    %v1292 = vpop.f32.mrb[0].mxu0
    %1293 = vdwg.mxu0
    %1294 = vmatprep.subr.bf16.mxu0 %v474
    %1295 = vmatpush1.bf16.msra.mxu0 %v473
    %1296 = vmatprep.subr.bf16.mxu0 %v478
    %1297 = vmatpush1.bf16.msra.mxu0 %v477
    %1298 = vmatprep.subr.bf16.mxu0 %v482
    %1299 = vmatpush1.bf16.msra.mxu0 %v481
    %1300 = vmatprep.subr.bf16.mxu0 %v486
    %1301 = vmatpush1.bf16.msra.mxu0 %v485
    %1302 = vmatprep.subr.bf16.mxu0 %v490
    %1303 = vmatpush1.bf16.msra.mxu0 %v489
    %1304 = vmatprep.subr.bf16.mxu0 %v494
    %1305 = vmatpush1.bf16.msra.mxu0 %v493
    %1306 = vmatprep.subr.bf16.mxu0 %v498
    %1307 = vmatpush1.bf16.msra.mxu0 %v497
    %1308 = vmatprep.subr.bf16.mxu0 %v502
    %1309 = vmatpush1.bf16.msra.mxu0 %v501
    %1310 = vmatprep.subr.bf16.mxu0 %v506
    %1311 = vmatpush1.bf16.msra.mxu0 %v505
    %1312 = vmatprep.subr.bf16.mxu0 %v510
    %1313 = vmatpush1.bf16.msra.mxu0 %v509
    %1314 = vmatprep.subr.bf16.mxu0 %v514
    %1315 = vmatpush1.bf16.msra.mxu0 %v513
    %1316 = vmatprep.subr.bf16.mxu0 %v518
    %1317 = vmatpush1.bf16.msra.mxu0 %v517
    %1318 = vmatprep.subr.bf16.mxu0 %v522
    %1319 = vmatpush1.bf16.msra.mxu0 %v521
    %1320 = vmatprep.subr.bf16.mxu0 %v526
    %1321 = vmatpush1.bf16.msra.mxu0 %v525
    %1322 = vmatprep.subr.bf16.mxu0 %v530
    %1323 = vmatpush1.bf16.msra.mxu0 %v529
    %1324 = vmatprep.subr.bf16.mxu0 %v534
    %1325 = vmatpush1.bf16.msra.mxu0 %v533
    %1326 = vmatprep.mubr.bf16.mxu0 %v1250
    %1327 = vmatmul.mubr.bf16.gmra.mrb[0].mxu0 %v1243
    %v1328 = vpop.f32.mrb[0].mxu0
    %v1329 = vadd.f32 %v245, %v1328
    %v1330 = vpop.f32.mrb[0].mxu0
    %v1331 = vadd.f32 %v249, %v1330
    %v1332 = vpop.f32.mrb[0].mxu0
    %v1333 = vpop.f32.mrb[0].mxu0
    %1334 = vdwg.mxu0
    %s1335 = scalar_lea.vmem [#allocation2], 14
    %v1336 = vld [vmem:[%s1335] sm:$0x3]
    %v1339 = vunpack.c.l.s4 1966171168
    %v1340 = vunpack.c.0.s8 %v1339
    %v1341 = vlaneseq
    %v1342 = vshrl.u32 %v1341, 7
    %v1343 = vsub.s32 %v1340, %v1342
    %v1344 = vrot.slane %v1336, %v1343
    %v1345 = vcombine.high %v1344, %v1344
    %v1347 = vunpack.c.l.s4 1966171168
    %v1348 = vunpack.c.0.s8 %v1347
    %v1349 = vlaneseq
    %v1350 = vshrl.u32 %v1349, 7
    %v1351 = vsub.s32 %v1348, %v1350
    %v1352 = vrot.slane %v1344, %v1351
    %v1354 = vunpack.c.l.s4 1966171168
    %v1355 = vunpack.c.0.s8 %v1354
    %v1356 = vlaneseq
    %v1357 = vshrl.u32 %v1356, 7
    %v1358 = vsub.s32 %v1355, %v1357
    %v1359 = vrot.slane %v1345, %v1358
    %1362 = vmatprep.subr.bf16.mxu0 %v472
    %1363 = vmatpush1.bf16.msra.mxu0 %v471
    %1364 = vmatprep.subr.bf16.mxu0 %v476
    %1365 = vmatpush1.bf16.msra.mxu0 %v475
    %1366 = vmatprep.subr.bf16.mxu0 %v480
    %1367 = vmatpush1.bf16.msra.mxu0 %v479
    %1368 = vmatprep.subr.bf16.mxu0 %v484
    %1369 = vmatpush1.bf16.msra.mxu0 %v483
    %1370 = vmatprep.subr.bf16.mxu0 %v488
    %1371 = vmatpush1.bf16.msra.mxu0 %v487
    %1372 = vmatprep.subr.bf16.mxu0 %v492
    %1373 = vmatpush1.bf16.msra.mxu0 %v491
    %1374 = vmatprep.subr.bf16.mxu0 %v496
    %1375 = vmatpush1.bf16.msra.mxu0 %v495
    %1376 = vmatprep.subr.bf16.mxu0 %v500
    %1377 = vmatpush1.bf16.msra.mxu0 %v499
    %1378 = vmatprep.subr.bf16.mxu0 %v504
    %1379 = vmatpush1.bf16.msra.mxu0 %v503
    %1380 = vmatprep.subr.bf16.mxu0 %v508
    %1381 = vmatpush1.bf16.msra.mxu0 %v507
    %1382 = vmatprep.subr.bf16.mxu0 %v512
    %1383 = vmatpush1.bf16.msra.mxu0 %v511
    %1384 = vmatprep.subr.bf16.mxu0 %v516
    %1385 = vmatpush1.bf16.msra.mxu0 %v515
    %1386 = vmatprep.subr.bf16.mxu0 %v520
    %1387 = vmatpush1.bf16.msra.mxu0 %v519
    %1388 = vmatprep.subr.bf16.mxu0 %v524
    %1389 = vmatpush1.bf16.msra.mxu0 %v523
    %1390 = vmatprep.subr.bf16.mxu0 %v528
    %1391 = vmatpush1.bf16.msra.mxu0 %v527
    %1392 = vmatprep.subr.bf16.mxu0 %v532
    %1393 = vmatpush1.bf16.msra.mxu0 %v531
    %1394 = vmatprep.mubr.bf16.mxu0 %v1359
    %1395 = vmatmul.mubr.bf16.gmra.mrb[0].mxu0 %v1352
    %v1396 = vpop.f32.mrb[0].mxu0
    %v1397 = vadd.f32 %v237, %v1396
    %v1398 = vpop.f32.mrb[0].mxu0
    %v1399 = vadd.f32 %v241, %v1398
    %v1400 = vpop.f32.mrb[0].mxu0
    %v1401 = vpop.f32.mrb[0].mxu0
    %1402 = vdwg.mxu0
    %1403 = vmatprep.subr.bf16.mxu0 %v474
    %1404 = vmatpush1.bf16.msra.mxu0 %v473
    %1405 = vmatprep.subr.bf16.mxu0 %v478
    %1406 = vmatpush1.bf16.msra.mxu0 %v477
    %1407 = vmatprep.subr.bf16.mxu0 %v482
    %1408 = vmatpush1.bf16.msra.mxu0 %v481
    %1409 = vmatprep.subr.bf16.mxu0 %v486
    %1410 = vmatpush1.bf16.msra.mxu0 %v485
    %1411 = vmatprep.subr.bf16.mxu0 %v490
    %1412 = vmatpush1.bf16.msra.mxu0 %v489
    %1413 = vmatprep.subr.bf16.mxu0 %v494
    %1414 = vmatpush1.bf16.msra.mxu0 %v493
    %1415 = vmatprep.subr.bf16.mxu0 %v498
    %1416 = vmatpush1.bf16.msra.mxu0 %v497
    %1417 = vmatprep.subr.bf16.mxu0 %v502
    %1418 = vmatpush1.bf16.msra.mxu0 %v501
    %1419 = vmatprep.subr.bf16.mxu0 %v506
    %1420 = vmatpush1.bf16.msra.mxu0 %v505
    %1421 = vmatprep.subr.bf16.mxu0 %v510
    %1422 = vmatpush1.bf16.msra.mxu0 %v509
    %1423 = vmatprep.subr.bf16.mxu0 %v514
    %1424 = vmatpush1.bf16.msra.mxu0 %v513
    %1425 = vmatprep.subr.bf16.mxu0 %v518
    %1426 = vmatpush1.bf16.msra.mxu0 %v517
    %1427 = vmatprep.subr.bf16.mxu0 %v522
    %1428 = vmatpush1.bf16.msra.mxu0 %v521
    %1429 = vmatprep.subr.bf16.mxu0 %v526
    %1430 = vmatpush1.bf16.msra.mxu0 %v525
    %1431 = vmatprep.subr.bf16.mxu0 %v530
    %1432 = vmatpush1.bf16.msra.mxu0 %v529
    %1433 = vmatprep.subr.bf16.mxu0 %v534
    %1434 = vmatpush1.bf16.msra.mxu0 %v533
    %1435 = vmatprep.mubr.bf16.mxu0 %v1359
    %1436 = vmatmul.mubr.bf16.gmra.mrb[0].mxu0 %v1352
    %v1437 = vpop.f32.mrb[0].mxu0
    %v1438 = vadd.f32 %v245, %v1437
    %v1439 = vpop.f32.mrb[0].mxu0
    %v1440 = vadd.f32 %v249, %v1439
    %v1441 = vpop.f32.mrb[0].mxu0
    %v1442 = vpop.f32.mrb[0].mxu0
    %1443 = vdwg.mxu0
    %1444 = vmatprep.subr.mxu0 %v168
    %1445 = vmatpush1.msra.mxu0 %v167
    %1446 = vmatprep.subr.mxu0 %v172
    %1447 = vmatpush1.msra.mxu0 %v171
    %1448 = vmatprep.subr.mxu0 %v176
    %1449 = vmatpush1.msra.mxu0 %v175
    %1450 = vmatprep.subr.mxu0 %v180
    %1451 = vmatpush1.msra.mxu0 %v179
    %1452 = vmatprep.subr.mxu0 %v184
    %1453 = vmatpush1.msra.mxu0 %v183
    %1454 = vmatprep.subr.mxu0 %v188
    %1455 = vmatpush1.msra.mxu0 %v187
    %1456 = vmatprep.subr.mxu0 %v192
    %1457 = vmatpush1.msra.mxu0 %v191
    %1458 = vmatprep.subr.mxu0 %v196
    %1459 = vmatpush1.msra.mxu0 %v195
    %1460 = vmatprep.subr.mxu0 %v200
    %1461 = vmatpush1.msra.mxu0 %v199
    %1462 = vmatprep.subr.mxu0 %v204
    %1463 = vmatpush1.msra.mxu0 %v203
    %1464 = vmatprep.subr.mxu0 %v208
    %1465 = vmatpush1.msra.mxu0 %v207
    %1466 = vmatprep.subr.mxu0 %v212
    %1467 = vmatpush1.msra.mxu0 %v211
    %1468 = vmatprep.subr.mxu0 %v216
    %1469 = vmatpush1.msra.mxu0 %v215
    %1470 = vmatprep.subr.mxu0 %v220
    %1471 = vmatpush1.msra.mxu0 %v219
    %1472 = vmatprep.subr.mxu0 %v224
    %1473 = vmatpush1.msra.mxu0 %v223
    %1474 = vmatprep.subr.mxu0 %v228
    %1475 = vmatpush1.msra.mxu0 %v227
    %1476 = vmatprep.subr.mxu0 0.0
    %1477 = vmatpush1.msra.mxu0 0.0
    %1478 = vmatprep.subr.mxu0 0.0
    %1479 = vmatpush1.msra.mxu0 0.0
    %1480 = vmatprep.subr.mxu0 0.0
    %1481 = vmatpush1.msra.mxu0 0.0
    %1482 = vmatprep.subr.mxu0 0.0
    %1483 = vmatpush1.msra.mxu0 0.0
    %1484 = vmatprep.subr.mxu0 0.0
    %1485 = vmatpush1.msra.mxu0 0.0
    %1486 = vmatprep.subr.mxu0 0.0
    %1487 = vmatpush1.msra.mxu0 0.0
    %1488 = vmatprep.subr.mxu0 0.0
    %1489 = vmatpush1.msra.mxu0 0.0
    %1490 = vmatprep.subr.mxu0 0.0
    %1491 = vmatpush1.msra.mxu0 0.0
    %1492 = vmatprep.subr.mxu0 0.0
    %1493 = vmatpush1.msra.mxu0 0.0
    %1494 = vmatprep.subr.mxu0 0.0
    %1495 = vmatpush1.msra.mxu0 0.0
    %1496 = vmatprep.subr.mxu0 0.0
    %1497 = vmatpush1.msra.mxu0 0.0
    %1498 = vmatprep.subr.mxu0 0.0
    %1499 = vmatpush1.msra.mxu0 0.0
    %1500 = vmatprep.subr.mxu0 0.0
    %1501 = vmatpush1.msra.mxu0 0.0
    %1502 = vmatprep.subr.mxu0 0.0
    %1503 = vmatpush1.msra.mxu0 0.0
    %1504 = vmatprep.subr.mxu0 0.0
    %1505 = vmatpush1.msra.mxu0 0.0
    %1506 = vmatprep.subr.mxu0 0.0
    %1507 = vmatpush1.msra.mxu0 0.0
    %1508 = vmatprep.mubr.f32.mxu0 0.0
    %1509 = vmatmul.mubr.f32.gmra.mrb[0].mxu0 0.0
    %v1510 = vpop.f32.mrb[0].mxu0
    %v1511 = vadd.f32 0.0, %v1510
    %v1512 = vpop.f32.mrb[0].mxu0
    %v1513 = vadd.f32 0.0, %v1512
    %1514 = vdwg.mxu0
    %1515 = vmatprep.subr.mxu0 %v170
    %1516 = vmatpush1.msra.mxu0 %v169
    %1517 = vmatprep.subr.mxu0 %v174
    %1518 = vmatpush1.msra.mxu0 %v173
    %1519 = vmatprep.subr.mxu0 %v178
    %1520 = vmatpush1.msra.mxu0 %v177
    %1521 = vmatprep.subr.mxu0 %v182
    %1522 = vmatpush1.msra.mxu0 %v181
    %1523 = vmatprep.subr.mxu0 %v186
    %1524 = vmatpush1.msra.mxu0 %v185
    %1525 = vmatprep.subr.mxu0 %v190
    %1526 = vmatpush1.msra.mxu0 %v189
    %1527 = vmatprep.subr.mxu0 %v194
    %1528 = vmatpush1.msra.mxu0 %v193
    %1529 = vmatprep.subr.mxu0 %v198
    %1530 = vmatpush1.msra.mxu0 %v197
    %1531 = vmatprep.subr.mxu0 %v202
    %1532 = vmatpush1.msra.mxu0 %v201
    %1533 = vmatprep.subr.mxu0 %v206
    %1534 = vmatpush1.msra.mxu0 %v205
    %1535 = vmatprep.subr.mxu0 %v210
    %1536 = vmatpush1.msra.mxu0 %v209
    %1537 = vmatprep.subr.mxu0 %v214
    %1538 = vmatpush1.msra.mxu0 %v213
    %1539 = vmatprep.subr.mxu0 %v218
    %1540 = vmatpush1.msra.mxu0 %v217
    %1541 = vmatprep.subr.mxu0 %v222
    %1542 = vmatpush1.msra.mxu0 %v221
    %1543 = vmatprep.subr.mxu0 %v226
    %1544 = vmatpush1.msra.mxu0 %v225
    %1545 = vmatprep.subr.mxu0 %v230
    %1546 = vmatpush1.msra.mxu0 %v229
    %1547 = vmatprep.subr.mxu0 0.0
    %1548 = vmatpush1.msra.mxu0 0.0
    %1549 = vmatprep.subr.mxu0 0.0
    %1550 = vmatpush1.msra.mxu0 0.0
    %1551 = vmatprep.subr.mxu0 0.0
    %1552 = vmatpush1.msra.mxu0 0.0
    %1553 = vmatprep.subr.mxu0 0.0
    %1554 = vmatpush1.msra.mxu0 0.0
    %1555 = vmatprep.subr.mxu0 0.0
    %1556 = vmatpush1.msra.mxu0 0.0
    %1557 = vmatprep.subr.mxu0 0.0
    %1558 = vmatpush1.msra.mxu0 0.0
    %1559 = vmatprep.subr.mxu0 0.0
    %1560 = vmatpush1.msra.mxu0 0.0
    %1561 = vmatprep.subr.mxu0 0.0
    %1562 = vmatpush1.msra.mxu0 0.0
    %1563 = vmatprep.subr.mxu0 0.0
    %1564 = vmatpush1.msra.mxu0 0.0
    %1565 = vmatprep.subr.mxu0 0.0
    %1566 = vmatpush1.msra.mxu0 0.0
    %1567 = vmatprep.subr.mxu0 0.0
    %1568 = vmatpush1.msra.mxu0 0.0
    %1569 = vmatprep.subr.mxu0 0.0
    %1570 = vmatpush1.msra.mxu0 0.0
    %1571 = vmatprep.subr.mxu0 0.0
    %1572 = vmatpush1.msra.mxu0 0.0
    %1573 = vmatprep.subr.mxu0 0.0
    %1574 = vmatpush1.msra.mxu0 0.0
    %1575 = vmatprep.subr.mxu0 0.0
    %1576 = vmatpush1.msra.mxu0 0.0
    %1577 = vmatprep.subr.mxu0 0.0
    %1578 = vmatpush1.msra.mxu0 0.0
    %1579 = vmatprep.mubr.f32.mxu0 0.0
    %1580 = vmatmul.mubr.f32.gmra.mrb[0].mxu0 0.0
    %v1581 = vpop.f32.mrb[0].mxu0
    %v1582 = vadd.f32 0.0, %v1581
    %v1583 = vpop.f32.mrb[0].mxu0
    %v1584 = vadd.f32 0.0, %v1583
    %1585 = vdwg.mxu0
    %v1586 = vadd.f32 %v634, %v1511
    %v1587 = vadd.f32 %v636, %v1513
    %v1588 = vadd.f32 %v675, %v1582
    %v1589 = vadd.f32 %v677, %v1584
    %v1590 = vxor.u32 %v1586, 2147483648
    %v1591 = vmul.f32 %v1590, 1.442695
    %v1592 = vpow.pop %v1591
    %v1593 = vadd.f32 %v1592, 1.0
    %v1594 = vrcp.pop %v1593
    %v1595 = vmul.f32 1.0, %v1594
    %v1596 = vxor.u32 %v1587, 2147483648
    %v1597 = vmul.f32 %v1596, 1.442695
    %v1598 = vpow.pop %v1597
    %v1599 = vadd.f32 %v1598, 1.0
    %v1600 = vrcp.pop %v1599
    %v1601 = vmul.f32 1.0, %v1600
    %v1602 = vtanh.pop %v1588
    %v1603 = vxor.u32 %v1589, 2147483648
    %v1604 = vmul.f32 %v1603, 1.442695
    %v1605 = vpow.pop %v1604
    %v1606 = vadd.f32 %v1605, 1.0
    %v1607 = vrcp.pop %v1606
    %v1608 = vmul.f32 1.0, %v1607
    %v1609 = vmul.f32 %v1601, 0.0
    %v1610 = vmul.f32 %v1595, %v1602
    %v1611 = vadd.f32 %v1609, %v1610
    %v1612 = vtanh.pop %v1611
    %v1613 = vmul.f32 %v1608, %v1612
    %1614 = vmatprep.subr.mxu0 %v168
    %1615 = vmatpush1.msra.mxu0 %v167
    %1616 = vmatprep.subr.mxu0 %v172
    %1617 = vmatpush1.msra.mxu0 %v171
    %1618 = vmatprep.subr.mxu0 %v176
    %1619 = vmatpush1.msra.mxu0 %v175
    %1620 = vmatprep.subr.mxu0 %v180
    %1621 = vmatpush1.msra.mxu0 %v179
    %1622 = vmatprep.subr.mxu0 %v184
    %1623 = vmatpush1.msra.mxu0 %v183
    %1624 = vmatprep.subr.mxu0 %v188
    %1625 = vmatpush1.msra.mxu0 %v187
    %1626 = vmatprep.subr.mxu0 %v192
    %1627 = vmatpush1.msra.mxu0 %v191
    %1628 = vmatprep.subr.mxu0 %v196
    %1629 = vmatpush1.msra.mxu0 %v195
    %1630 = vmatprep.subr.mxu0 %v200
    %1631 = vmatpush1.msra.mxu0 %v199
    %1632 = vmatprep.subr.mxu0 %v204
    %1633 = vmatpush1.msra.mxu0 %v203
    %1634 = vmatprep.subr.mxu0 %v208
    %1635 = vmatpush1.msra.mxu0 %v207
    %1636 = vmatprep.subr.mxu0 %v212
    %1637 = vmatpush1.msra.mxu0 %v211
    %1638 = vmatprep.subr.mxu0 %v216
    %1639 = vmatpush1.msra.mxu0 %v215
    %1640 = vmatprep.subr.mxu0 %v220
    %1641 = vmatpush1.msra.mxu0 %v219
    %1642 = vmatprep.subr.mxu0 %v224
    %1643 = vmatpush1.msra.mxu0 %v223
    %1644 = vmatprep.subr.mxu0 %v228
    %1645 = vmatpush1.msra.mxu0 %v227
    %1646 = vmatprep.subr.mxu0 0.0
    %1647 = vmatpush1.msra.mxu0 0.0
    %1648 = vmatprep.subr.mxu0 0.0
    %1649 = vmatpush1.msra.mxu0 0.0
    %1650 = vmatprep.subr.mxu0 0.0
    %1651 = vmatpush1.msra.mxu0 0.0
    %1652 = vmatprep.subr.mxu0 0.0
    %1653 = vmatpush1.msra.mxu0 0.0
    %1654 = vmatprep.subr.mxu0 0.0
    %1655 = vmatpush1.msra.mxu0 0.0
    %1656 = vmatprep.subr.mxu0 0.0
    %1657 = vmatpush1.msra.mxu0 0.0
    %1658 = vmatprep.subr.mxu0 0.0
    %1659 = vmatpush1.msra.mxu0 0.0
    %1660 = vmatprep.subr.mxu0 0.0
    %1661 = vmatpush1.msra.mxu0 0.0
    %1662 = vmatprep.subr.mxu0 0.0
    %1663 = vmatpush1.msra.mxu0 0.0
    %1664 = vmatprep.subr.mxu0 0.0
    %1665 = vmatpush1.msra.mxu0 0.0
    %1666 = vmatprep.subr.mxu0 0.0
    %1667 = vmatpush1.msra.mxu0 0.0
    %1668 = vmatprep.subr.mxu0 0.0
    %1669 = vmatpush1.msra.mxu0 0.0
    %1670 = vmatprep.subr.mxu0 0.0
    %1671 = vmatpush1.msra.mxu0 0.0
    %1672 = vmatprep.subr.mxu0 0.0
    %1673 = vmatpush1.msra.mxu0 0.0
    %1674 = vmatprep.subr.mxu0 0.0
    %1675 = vmatpush1.msra.mxu0 0.0
    %1676 = vmatprep.subr.mxu0 0.0
    %1677 = vmatpush1.msra.mxu0 0.0
    %1678 = vmatprep.mubr.f32.mxu0 0.0
    %1679 = vmatmul.mubr.f32.gmra.mrb[0].mxu0 %v1613
    %v1680 = vpop.f32.mrb[0].mxu0
    %v1681 = vadd.f32 0.0, %v1680
    %v1682 = vpop.f32.mrb[0].mxu0
    %v1683 = vadd.f32 0.0, %v1682
    %1684 = vdwg.mxu0
    %1685 = vmatprep.subr.mxu0 %v170
    %1686 = vmatpush1.msra.mxu0 %v169
    %1687 = vmatprep.subr.mxu0 %v174
    %1688 = vmatpush1.msra.mxu0 %v173
    %1689 = vmatprep.subr.mxu0 %v178
    %1690 = vmatpush1.msra.mxu0 %v177
    %1691 = vmatprep.subr.mxu0 %v182
    %1692 = vmatpush1.msra.mxu0 %v181
    %1693 = vmatprep.subr.mxu0 %v186
    %1694 = vmatpush1.msra.mxu0 %v185
    %1695 = vmatprep.subr.mxu0 %v190
    %1696 = vmatpush1.msra.mxu0 %v189
    %1697 = vmatprep.subr.mxu0 %v194
    %1698 = vmatpush1.msra.mxu0 %v193
    %1699 = vmatprep.subr.mxu0 %v198
    %1700 = vmatpush1.msra.mxu0 %v197
    %1701 = vmatprep.subr.mxu0 %v202
    %1702 = vmatpush1.msra.mxu0 %v201
    %1703 = vmatprep.subr.mxu0 %v206
    %1704 = vmatpush1.msra.mxu0 %v205
    %1705 = vmatprep.subr.mxu0 %v210
    %1706 = vmatpush1.msra.mxu0 %v209
    %1707 = vmatprep.subr.mxu0 %v214
    %1708 = vmatpush1.msra.mxu0 %v213
    %1709 = vmatprep.subr.mxu0 %v218
    %1710 = vmatpush1.msra.mxu0 %v217
    %1711 = vmatprep.subr.mxu0 %v222
    %1712 = vmatpush1.msra.mxu0 %v221
    %1713 = vmatprep.subr.mxu0 %v226
    %1714 = vmatpush1.msra.mxu0 %v225
    %1715 = vmatprep.subr.mxu0 %v230
    %1716 = vmatpush1.msra.mxu0 %v229
    %1717 = vmatprep.subr.mxu0 0.0
    %1718 = vmatpush1.msra.mxu0 0.0
    %1719 = vmatprep.subr.mxu0 0.0
    %1720 = vmatpush1.msra.mxu0 0.0
    %1721 = vmatprep.subr.mxu0 0.0
    %1722 = vmatpush1.msra.mxu0 0.0
    %1723 = vmatprep.subr.mxu0 0.0
    %1724 = vmatpush1.msra.mxu0 0.0
    %1725 = vmatprep.subr.mxu0 0.0
    %1726 = vmatpush1.msra.mxu0 0.0
    %1727 = vmatprep.subr.mxu0 0.0
    %1728 = vmatpush1.msra.mxu0 0.0
    %1729 = vmatprep.subr.mxu0 0.0
    %1730 = vmatpush1.msra.mxu0 0.0
    %1731 = vmatprep.subr.mxu0 0.0
    %1732 = vmatpush1.msra.mxu0 0.0
    %1733 = vmatprep.subr.mxu0 0.0
    %1734 = vmatpush1.msra.mxu0 0.0
    %1735 = vmatprep.subr.mxu0 0.0
    %1736 = vmatpush1.msra.mxu0 0.0
    %1737 = vmatprep.subr.mxu0 0.0
    %1738 = vmatpush1.msra.mxu0 0.0
    %1739 = vmatprep.subr.mxu0 0.0
    %1740 = vmatpush1.msra.mxu0 0.0
    %1741 = vmatprep.subr.mxu0 0.0
    %1742 = vmatpush1.msra.mxu0 0.0
    %1743 = vmatprep.subr.mxu0 0.0
    %1744 = vmatpush1.msra.mxu0 0.0
    %1745 = vmatprep.subr.mxu0 0.0
    %1746 = vmatpush1.msra.mxu0 0.0
    %1747 = vmatprep.subr.mxu0 0.0
    %1748 = vmatpush1.msra.mxu0 0.0
    %1749 = vmatprep.mubr.f32.mxu0 0.0
    %1750 = vmatmul.mubr.f32.gmra.mrb[0].mxu0 %v1613
    %v1751 = vpop.f32.mrb[0].mxu0
    %v1752 = vadd.f32 0.0, %v1751
    %v1753 = vpop.f32.mrb[0].mxu0
    %v1754 = vadd.f32 0.0, %v1753
    %1755 = vdwg.mxu0
    %v1756 = vadd.f32 %v743, %v1681
    %v1757 = vadd.f32 %v745, %v1683
    %v1758 = vadd.f32 %v784, %v1752
    %v1759 = vadd.f32 %v786, %v1754
    %v1760 = vxor.u32 %v1756, 2147483648
    %v1761 = vmul.f32 %v1760, 1.442695
    %v1762 = vpow.pop %v1761
    %v1763 = vadd.f32 %v1762, 1.0
    %v1764 = vrcp.pop %v1763
    %v1765 = vmul.f32 1.0, %v1764
    %v1766 = vxor.u32 %v1757, 2147483648
    %v1767 = vmul.f32 %v1766, 1.442695
    %v1768 = vpow.pop %v1767
    %v1769 = vadd.f32 %v1768, 1.0
    %v1770 = vrcp.pop %v1769
    %v1771 = vmul.f32 1.0, %v1770
    %v1772 = vtanh.pop %v1758
    %v1773 = vxor.u32 %v1759, 2147483648
    %v1774 = vmul.f32 %v1773, 1.442695
    %v1775 = vpow.pop %v1774
    %v1776 = vadd.f32 %v1775, 1.0
    %v1777 = vrcp.pop %v1776
    %v1778 = vmul.f32 1.0, %v1777
    %v1779 = vmul.f32 %v1771, %v1611
    %v1780 = vmul.f32 %v1765, %v1772
    %v1781 = vadd.f32 %v1779, %v1780
    %v1782 = vtanh.pop %v1781
    %v1783 = vmul.f32 %v1778, %v1782
    %1784 = vmatprep.subr.mxu0 %v168
    %1785 = vmatpush1.msra.mxu0 %v167
    %1786 = vmatprep.subr.mxu0 %v172
    %1787 = vmatpush1.msra.mxu0 %v171
    %1788 = vmatprep.subr.mxu0 %v176
    %1789 = vmatpush1.msra.mxu0 %v175
    %1790 = vmatprep.subr.mxu0 %v180
    %1791 = vmatpush1.msra.mxu0 %v179
    %1792 = vmatprep.subr.mxu0 %v184
    %1793 = vmatpush1.msra.mxu0 %v183
    %1794 = vmatprep.subr.mxu0 %v188
    %1795 = vmatpush1.msra.mxu0 %v187
    %1796 = vmatprep.subr.mxu0 %v192
    %1797 = vmatpush1.msra.mxu0 %v191
    %1798 = vmatprep.subr.mxu0 %v196
    %1799 = vmatpush1.msra.mxu0 %v195
    %1800 = vmatprep.subr.mxu0 %v200
    %1801 = vmatpush1.msra.mxu0 %v199
    %1802 = vmatprep.subr.mxu0 %v204
    %1803 = vmatpush1.msra.mxu0 %v203
    %1804 = vmatprep.subr.mxu0 %v208
    %1805 = vmatpush1.msra.mxu0 %v207
    %1806 = vmatprep.subr.mxu0 %v212
    %1807 = vmatpush1.msra.mxu0 %v211
    %1808 = vmatprep.subr.mxu0 %v216
    %1809 = vmatpush1.msra.mxu0 %v215
    %1810 = vmatprep.subr.mxu0 %v220
    %1811 = vmatpush1.msra.mxu0 %v219
    %1812 = vmatprep.subr.mxu0 %v224
    %1813 = vmatpush1.msra.mxu0 %v223
    %1814 = vmatprep.subr.mxu0 %v228
    %1815 = vmatpush1.msra.mxu0 %v227
    %1816 = vmatprep.subr.mxu0 0.0
    %1817 = vmatpush1.msra.mxu0 0.0
    %1818 = vmatprep.subr.mxu0 0.0
    %1819 = vmatpush1.msra.mxu0 0.0
    %1820 = vmatprep.subr.mxu0 0.0
    %1821 = vmatpush1.msra.mxu0 0.0
    %1822 = vmatprep.subr.mxu0 0.0
    %1823 = vmatpush1.msra.mxu0 0.0
    %1824 = vmatprep.subr.mxu0 0.0
    %1825 = vmatpush1.msra.mxu0 0.0
    %1826 = vmatprep.subr.mxu0 0.0
    %1827 = vmatpush1.msra.mxu0 0.0
    %1828 = vmatprep.subr.mxu0 0.0
    %1829 = vmatpush1.msra.mxu0 0.0
    %1830 = vmatprep.subr.mxu0 0.0
    %1831 = vmatpush1.msra.mxu0 0.0
    %1832 = vmatprep.subr.mxu0 0.0
    %1833 = vmatpush1.msra.mxu0 0.0
    %1834 = vmatprep.subr.mxu0 0.0
    %1835 = vmatpush1.msra.mxu0 0.0
    %1836 = vmatprep.subr.mxu0 0.0
    %1837 = vmatpush1.msra.mxu0 0.0
    %1838 = vmatprep.subr.mxu0 0.0
    %1839 = vmatpush1.msra.mxu0 0.0
    %1840 = vmatprep.subr.mxu0 0.0
    %1841 = vmatpush1.msra.mxu0 0.0
    %1842 = vmatprep.subr.mxu0 0.0
    %1843 = vmatpush1.msra.mxu0 0.0
    %1844 = vmatprep.subr.mxu0 0.0
    %1845 = vmatpush1.msra.mxu0 0.0
    %1846 = vmatprep.subr.mxu0 0.0
    %1847 = vmatpush1.msra.mxu0 0.0
    %1848 = vmatprep.mubr.f32.mxu0 0.0
    %1849 = vmatmul.mubr.f32.gmra.mrb[0].mxu0 %v1783
    %v1850 = vpop.f32.mrb[0].mxu0
    %v1851 = vadd.f32 0.0, %v1850
    %v1852 = vpop.f32.mrb[0].mxu0
    %v1853 = vadd.f32 0.0, %v1852
    %1854 = vdwg.mxu0
    %1855 = vmatprep.subr.mxu0 %v170
    %1856 = vmatpush1.msra.mxu0 %v169
    %1857 = vmatprep.subr.mxu0 %v174
    %1858 = vmatpush1.msra.mxu0 %v173
    %1859 = vmatprep.subr.mxu0 %v178
    %1860 = vmatpush1.msra.mxu0 %v177
    %1861 = vmatprep.subr.mxu0 %v182
    %1862 = vmatpush1.msra.mxu0 %v181
    %1863 = vmatprep.subr.mxu0 %v186
    %1864 = vmatpush1.msra.mxu0 %v185
    %1865 = vmatprep.subr.mxu0 %v190
    %1866 = vmatpush1.msra.mxu0 %v189
    %1867 = vmatprep.subr.mxu0 %v194
    %1868 = vmatpush1.msra.mxu0 %v193
    %1869 = vmatprep.subr.mxu0 %v198
    %1870 = vmatpush1.msra.mxu0 %v197
    %1871 = vmatprep.subr.mxu0 %v202
    %1872 = vmatpush1.msra.mxu0 %v201
    %1873 = vmatprep.subr.mxu0 %v206
    %1874 = vmatpush1.msra.mxu0 %v205
    %1875 = vmatprep.subr.mxu0 %v210
    %1876 = vmatpush1.msra.mxu0 %v209
    %1877 = vmatprep.subr.mxu0 %v214
    %1878 = vmatpush1.msra.mxu0 %v213
    %1879 = vmatprep.subr.mxu0 %v218
    %1880 = vmatpush1.msra.mxu0 %v217
    %1881 = vmatprep.subr.mxu0 %v222
    %1882 = vmatpush1.msra.mxu0 %v221
    %1883 = vmatprep.subr.mxu0 %v226
    %1884 = vmatpush1.msra.mxu0 %v225
    %1885 = vmatprep.subr.mxu0 %v230
    %1886 = vmatpush1.msra.mxu0 %v229
    %1887 = vmatprep.subr.mxu0 0.0
    %1888 = vmatpush1.msra.mxu0 0.0
    %1889 = vmatprep.subr.mxu0 0.0
    %1890 = vmatpush1.msra.mxu0 0.0
    %1891 = vmatprep.subr.mxu0 0.0
    %1892 = vmatpush1.msra.mxu0 0.0
    %1893 = vmatprep.subr.mxu0 0.0
    %1894 = vmatpush1.msra.mxu0 0.0
    %1895 = vmatprep.subr.mxu0 0.0
    %1896 = vmatpush1.msra.mxu0 0.0
    %1897 = vmatprep.subr.mxu0 0.0
    %1898 = vmatpush1.msra.mxu0 0.0
    %1899 = vmatprep.subr.mxu0 0.0
    %1900 = vmatpush1.msra.mxu0 0.0
    %1901 = vmatprep.subr.mxu0 0.0
    %1902 = vmatpush1.msra.mxu0 0.0
    %1903 = vmatprep.subr.mxu0 0.0
    %1904 = vmatpush1.msra.mxu0 0.0
    %1905 = vmatprep.subr.mxu0 0.0
    %1906 = vmatpush1.msra.mxu0 0.0
    %1907 = vmatprep.subr.mxu0 0.0
    %1908 = vmatpush1.msra.mxu0 0.0
    %1909 = vmatprep.subr.mxu0 0.0
    %1910 = vmatpush1.msra.mxu0 0.0
    %1911 = vmatprep.subr.mxu0 0.0
    %1912 = vmatpush1.msra.mxu0 0.0
    %1913 = vmatprep.subr.mxu0 0.0
    %1914 = vmatpush1.msra.mxu0 0.0
    %1915 = vmatprep.subr.mxu0 0.0
    %1916 = vmatpush1.msra.mxu0 0.0
    %1917 = vmatprep.subr.mxu0 0.0
    %1918 = vmatpush1.msra.mxu0 0.0
    %1919 = vmatprep.mubr.f32.mxu0 0.0
    %1920 = vmatmul.mubr.f32.gmra.mrb[0].mxu0 %v1783
    %v1921 = vpop.f32.mrb[0].mxu0
    %v1922 = vadd.f32 0.0, %v1921
    %v1923 = vpop.f32.mrb[0].mxu0
    %v1924 = vadd.f32 0.0, %v1923
    %1925 = vdwg.mxu0
    %v1926 = vadd.f32 %v852, %v1851
    %v1927 = vadd.f32 %v854, %v1853
    %v1928 = vadd.f32 %v893, %v1922
    %v1929 = vadd.f32 %v895, %v1924
    %v1930 = vxor.u32 %v1926, 2147483648
    %v1931 = vmul.f32 %v1930, 1.442695
    %v1932 = vpow.pop %v1931
    %v1933 = vadd.f32 %v1932, 1.0
    %v1934 = vrcp.pop %v1933
    %v1935 = vmul.f32 1.0, %v1934
    %v1936 = vxor.u32 %v1927, 2147483648
    %v1937 = vmul.f32 %v1936, 1.442695
    %v1938 = vpow.pop %v1937
    %v1939 = vadd.f32 %v1938, 1.0
    %v1940 = vrcp.pop %v1939
    %v1941 = vmul.f32 1.0, %v1940
    %v1942 = vtanh.pop %v1928
    %v1943 = vxor.u32 %v1929, 2147483648
    %v1944 = vmul.f32 %v1943, 1.442695
    %v1945 = vpow.pop %v1944
    %v1946 = vadd.f32 %v1945, 1.0
    %v1947 = vrcp.pop %v1946
    %v1948 = vmul.f32 1.0, %v1947
    %v1949 = vmul.f32 %v1941, %v1781
    %v1950 = vmul.f32 %v1935, %v1942
    %v1951 = vadd.f32 %v1949, %v1950
    %v1952 = vtanh.pop %v1951
    %v1953 = vmul.f32 %v1948, %v1952
    %1954 = vmatprep.subr.mxu0 %v168
    %1955 = vmatpush1.msra.mxu0 %v167
    %1956 = vmatprep.subr.mxu0 %v172
    %1957 = vmatpush1.msra.mxu0 %v171
    %1958 = vmatprep.subr.mxu0 %v176
    %1959 = vmatpush1.msra.mxu0 %v175
    %1960 = vmatprep.subr.mxu0 %v180
    %1961 = vmatpush1.msra.mxu0 %v179
    %1962 = vmatprep.subr.mxu0 %v184
    %1963 = vmatpush1.msra.mxu0 %v183
    %1964 = vmatprep.subr.mxu0 %v188
    %1965 = vmatpush1.msra.mxu0 %v187
    %1966 = vmatprep.subr.mxu0 %v192
    %1967 = vmatpush1.msra.mxu0 %v191
    %1968 = vmatprep.subr.mxu0 %v196
    %1969 = vmatpush1.msra.mxu0 %v195
    %1970 = vmatprep.subr.mxu0 %v200
    %1971 = vmatpush1.msra.mxu0 %v199
    %1972 = vmatprep.subr.mxu0 %v204
    %1973 = vmatpush1.msra.mxu0 %v203
    %1974 = vmatprep.subr.mxu0 %v208
    %1975 = vmatpush1.msra.mxu0 %v207
    %1976 = vmatprep.subr.mxu0 %v212
    %1977 = vmatpush1.msra.mxu0 %v211
    %1978 = vmatprep.subr.mxu0 %v216
    %1979 = vmatpush1.msra.mxu0 %v215
    %1980 = vmatprep.subr.mxu0 %v220
    %1981 = vmatpush1.msra.mxu0 %v219
    %1982 = vmatprep.subr.mxu0 %v224
    %1983 = vmatpush1.msra.mxu0 %v223
    %1984 = vmatprep.subr.mxu0 %v228
    %1985 = vmatpush1.msra.mxu0 %v227
    %1986 = vmatprep.subr.mxu0 0.0
    %1987 = vmatpush1.msra.mxu0 0.0
    %1988 = vmatprep.subr.mxu0 0.0
    %1989 = vmatpush1.msra.mxu0 0.0
    %1990 = vmatprep.subr.mxu0 0.0
    %1991 = vmatpush1.msra.mxu0 0.0
    %1992 = vmatprep.subr.mxu0 0.0
    %1993 = vmatpush1.msra.mxu0 0.0
    %1994 = vmatprep.subr.mxu0 0.0
    %1995 = vmatpush1.msra.mxu0 0.0
    %1996 = vmatprep.subr.mxu0 0.0
    %1997 = vmatpush1.msra.mxu0 0.0
    %1998 = vmatprep.subr.mxu0 0.0
    %1999 = vmatpush1.msra.mxu0 0.0
    %2000 = vmatprep.subr.mxu0 0.0
    %2001 = vmatpush1.msra.mxu0 0.0
    %2002 = vmatprep.subr.mxu0 0.0
    %2003 = vmatpush1.msra.mxu0 0.0
    %2004 = vmatprep.subr.mxu0 0.0
    %2005 = vmatpush1.msra.mxu0 0.0
    %2006 = vmatprep.subr.mxu0 0.0
    %2007 = vmatpush1.msra.mxu0 0.0
    %2008 = vmatprep.subr.mxu0 0.0
    %2009 = vmatpush1.msra.mxu0 0.0
    %2010 = vmatprep.subr.mxu0 0.0
    %2011 = vmatpush1.msra.mxu0 0.0
    %2012 = vmatprep.subr.mxu0 0.0
    %2013 = vmatpush1.msra.mxu0 0.0
    %2014 = vmatprep.subr.mxu0 0.0
    %2015 = vmatpush1.msra.mxu0 0.0
    %2016 = vmatprep.subr.mxu0 0.0
    %2017 = vmatpush1.msra.mxu0 0.0
    %2018 = vmatprep.mubr.f32.mxu0 0.0
    %2019 = vmatmul.mubr.f32.gmra.mrb[0].mxu0 %v1953
    %v2020 = vpop.f32.mrb[0].mxu0
    %v2021 = vadd.f32 0.0, %v2020
    %v2022 = vpop.f32.mrb[0].mxu0
    %v2023 = vadd.f32 0.0, %v2022
    %2024 = vdwg.mxu0
    %2025 = vmatprep.subr.mxu0 %v170
    %2026 = vmatpush1.msra.mxu0 %v169
    %2027 = vmatprep.subr.mxu0 %v174
    %2028 = vmatpush1.msra.mxu0 %v173
    %2029 = vmatprep.subr.mxu0 %v178
    %2030 = vmatpush1.msra.mxu0 %v177
    %2031 = vmatprep.subr.mxu0 %v182
    %2032 = vmatpush1.msra.mxu0 %v181
    %2033 = vmatprep.subr.mxu0 %v186
    %2034 = vmatpush1.msra.mxu0 %v185
    %2035 = vmatprep.subr.mxu0 %v190
    %2036 = vmatpush1.msra.mxu0 %v189
    %2037 = vmatprep.subr.mxu0 %v194
    %2038 = vmatpush1.msra.mxu0 %v193
    %2039 = vmatprep.subr.mxu0 %v198
    %2040 = vmatpush1.msra.mxu0 %v197
    %2041 = vmatprep.subr.mxu0 %v202
    %2042 = vmatpush1.msra.mxu0 %v201
    %2043 = vmatprep.subr.mxu0 %v206
    %2044 = vmatpush1.msra.mxu0 %v205
    %2045 = vmatprep.subr.mxu0 %v210
    %2046 = vmatpush1.msra.mxu0 %v209
    %2047 = vmatprep.subr.mxu0 %v214
    %2048 = vmatpush1.msra.mxu0 %v213
    %2049 = vmatprep.subr.mxu0 %v218
    %2050 = vmatpush1.msra.mxu0 %v217
    %2051 = vmatprep.subr.mxu0 %v222
    %2052 = vmatpush1.msra.mxu0 %v221
    %2053 = vmatprep.subr.mxu0 %v226
    %2054 = vmatpush1.msra.mxu0 %v225
    %2055 = vmatprep.subr.mxu0 %v230
    %2056 = vmatpush1.msra.mxu0 %v229
    %2057 = vmatprep.subr.mxu0 0.0
    %2058 = vmatpush1.msra.mxu0 0.0
    %2059 = vmatprep.subr.mxu0 0.0
    %2060 = vmatpush1.msra.mxu0 0.0
    %2061 = vmatprep.subr.mxu0 0.0
    %2062 = vmatpush1.msra.mxu0 0.0
    %2063 = vmatprep.subr.mxu0 0.0
    %2064 = vmatpush1.msra.mxu0 0.0
    %2065 = vmatprep.subr.mxu0 0.0
    %2066 = vmatpush1.msra.mxu0 0.0
    %2067 = vmatprep.subr.mxu0 0.0
    %2068 = vmatpush1.msra.mxu0 0.0
    %2069 = vmatprep.subr.mxu0 0.0
    %2070 = vmatpush1.msra.mxu0 0.0
    %2071 = vmatprep.subr.mxu0 0.0
    %2072 = vmatpush1.msra.mxu0 0.0
    %2073 = vmatprep.subr.mxu0 0.0
    %2074 = vmatpush1.msra.mxu0 0.0
    %2075 = vmatprep.subr.mxu0 0.0
    %2076 = vmatpush1.msra.mxu0 0.0
    %2077 = vmatprep.subr.mxu0 0.0
    %2078 = vmatpush1.msra.mxu0 0.0
    %2079 = vmatprep.subr.mxu0 0.0
    %2080 = vmatpush1.msra.mxu0 0.0
    %2081 = vmatprep.subr.mxu0 0.0
    %2082 = vmatpush1.msra.mxu0 0.0
    %2083 = vmatprep.subr.mxu0 0.0
    %2084 = vmatpush1.msra.mxu0 0.0
    %2085 = vmatprep.subr.mxu0 0.0
    %2086 = vmatpush1.msra.mxu0 0.0
    %2087 = vmatprep.subr.mxu0 0.0
    %2088 = vmatpush1.msra.mxu0 0.0
    %2089 = vmatprep.mubr.f32.mxu0 0.0
    %2090 = vmatmul.mubr.f32.gmra.mrb[0].mxu0 %v1953
    %v2091 = vpop.f32.mrb[0].mxu0
    %v2092 = vadd.f32 0.0, %v2091
    %v2093 = vpop.f32.mrb[0].mxu0
    %v2094 = vadd.f32 0.0, %v2093
    %2095 = vdwg.mxu0
    %v2096 = vadd.f32 %v961, %v2021
    %v2097 = vadd.f32 %v963, %v2023
    %v2098 = vadd.f32 %v1002, %v2092
    %v2099 = vadd.f32 %v1004, %v2094
    %v2100 = vxor.u32 %v2096, 2147483648
    %v2101 = vmul.f32 %v2100, 1.442695
    %v2102 = vpow.pop %v2101
    %v2103 = vadd.f32 %v2102, 1.0
    %v2104 = vrcp.pop %v2103
    %v2105 = vmul.f32 1.0, %v2104
    %v2106 = vxor.u32 %v2097, 2147483648
    %v2107 = vmul.f32 %v2106, 1.442695
    %v2108 = vpow.pop %v2107
    %v2109 = vadd.f32 %v2108, 1.0
    %v2110 = vrcp.pop %v2109
    %v2111 = vmul.f32 1.0, %v2110
    %v2112 = vtanh.pop %v2098
    %v2113 = vxor.u32 %v2099, 2147483648
    %v2114 = vmul.f32 %v2113, 1.442695
    %v2115 = vpow.pop %v2114
    %v2116 = vadd.f32 %v2115, 1.0
    %v2117 = vrcp.pop %v2116
    %v2118 = vmul.f32 1.0, %v2117
    %v2119 = vmul.f32 %v2111, %v1951
    %v2120 = vmul.f32 %v2105, %v2112
    %v2121 = vadd.f32 %v2119, %v2120
    %v2122 = vtanh.pop %v2121
    %v2123 = vmul.f32 %v2118, %v2122
    %2124 = vmatprep.subr.mxu0 %v168
    %2125 = vmatpush1.msra.mxu0 %v167
    %2126 = vmatprep.subr.mxu0 %v172
    %2127 = vmatpush1.msra.mxu0 %v171
    %2128 = vmatprep.subr.mxu0 %v176
    %2129 = vmatpush1.msra.mxu0 %v175
    %2130 = vmatprep.subr.mxu0 %v180
    %2131 = vmatpush1.msra.mxu0 %v179
    %2132 = vmatprep.subr.mxu0 %v184
    %2133 = vmatpush1.msra.mxu0 %v183
    %2134 = vmatprep.subr.mxu0 %v188
    %2135 = vmatpush1.msra.mxu0 %v187
    %2136 = vmatprep.subr.mxu0 %v192
    %2137 = vmatpush1.msra.mxu0 %v191
    %2138 = vmatprep.subr.mxu0 %v196
    %2139 = vmatpush1.msra.mxu0 %v195
    %2140 = vmatprep.subr.mxu0 %v200
    %2141 = vmatpush1.msra.mxu0 %v199
    %2142 = vmatprep.subr.mxu0 %v204
    %2143 = vmatpush1.msra.mxu0 %v203
    %2144 = vmatprep.subr.mxu0 %v208
    %2145 = vmatpush1.msra.mxu0 %v207
    %2146 = vmatprep.subr.mxu0 %v212
    %2147 = vmatpush1.msra.mxu0 %v211
    %2148 = vmatprep.subr.mxu0 %v216
    %2149 = vmatpush1.msra.mxu0 %v215
    %2150 = vmatprep.subr.mxu0 %v220
    %2151 = vmatpush1.msra.mxu0 %v219
    %2152 = vmatprep.subr.mxu0 %v224
    %2153 = vmatpush1.msra.mxu0 %v223
    %2154 = vmatprep.subr.mxu0 %v228
    %2155 = vmatpush1.msra.mxu0 %v227
    %2156 = vmatprep.subr.mxu0 0.0
    %2157 = vmatpush1.msra.mxu0 0.0
    %2158 = vmatprep.subr.mxu0 0.0
    %2159 = vmatpush1.msra.mxu0 0.0
    %2160 = vmatprep.subr.mxu0 0.0
    %2161 = vmatpush1.msra.mxu0 0.0
    %2162 = vmatprep.subr.mxu0 0.0
    %2163 = vmatpush1.msra.mxu0 0.0
    %2164 = vmatprep.subr.mxu0 0.0
    %2165 = vmatpush1.msra.mxu0 0.0
    %2166 = vmatprep.subr.mxu0 0.0
    %2167 = vmatpush1.msra.mxu0 0.0
    %2168 = vmatprep.subr.mxu0 0.0
    %2169 = vmatpush1.msra.mxu0 0.0
    %2170 = vmatprep.subr.mxu0 0.0
    %2171 = vmatpush1.msra.mxu0 0.0
    %2172 = vmatprep.subr.mxu0 0.0
    %2173 = vmatpush1.msra.mxu0 0.0
    %2174 = vmatprep.subr.mxu0 0.0
    %2175 = vmatpush1.msra.mxu0 0.0
    %2176 = vmatprep.subr.mxu0 0.0
    %2177 = vmatpush1.msra.mxu0 0.0
    %2178 = vmatprep.subr.mxu0 0.0
    %2179 = vmatpush1.msra.mxu0 0.0
    %2180 = vmatprep.subr.mxu0 0.0
    %2181 = vmatpush1.msra.mxu0 0.0
    %2182 = vmatprep.subr.mxu0 0.0
    %2183 = vmatpush1.msra.mxu0 0.0
    %2184 = vmatprep.subr.mxu0 0.0
    %2185 = vmatpush1.msra.mxu0 0.0
    %2186 = vmatprep.subr.mxu0 0.0
    %2187 = vmatpush1.msra.mxu0 0.0
    %2188 = vmatprep.mubr.f32.mxu0 0.0
    %2189 = vmatmul.mubr.f32.gmra.mrb[0].mxu0 %v2123
    %v2190 = vpop.f32.mrb[0].mxu0
    %v2191 = vadd.f32 0.0, %v2190
    %v2192 = vpop.f32.mrb[0].mxu0
    %v2193 = vadd.f32 0.0, %v2192
    %2194 = vdwg.mxu0
    %2195 = vmatprep.subr.mxu0 %v170
    %2196 = vmatpush1.msra.mxu0 %v169
    %2197 = vmatprep.subr.mxu0 %v174
    %2198 = vmatpush1.msra.mxu0 %v173
    %2199 = vmatprep.subr.mxu0 %v178
    %2200 = vmatpush1.msra.mxu0 %v177
    %2201 = vmatprep.subr.mxu0 %v182
    %2202 = vmatpush1.msra.mxu0 %v181
    %2203 = vmatprep.subr.mxu0 %v186
    %2204 = vmatpush1.msra.mxu0 %v185
    %2205 = vmatprep.subr.mxu0 %v190
    %2206 = vmatpush1.msra.mxu0 %v189
    %2207 = vmatprep.subr.mxu0 %v194
    %2208 = vmatpush1.msra.mxu0 %v193
    %2209 = vmatprep.subr.mxu0 %v198
    %2210 = vmatpush1.msra.mxu0 %v197
    %2211 = vmatprep.subr.mxu0 %v202
    %2212 = vmatpush1.msra.mxu0 %v201
    %2213 = vmatprep.subr.mxu0 %v206
    %2214 = vmatpush1.msra.mxu0 %v205
    %2215 = vmatprep.subr.mxu0 %v210
    %2216 = vmatpush1.msra.mxu0 %v209
    %2217 = vmatprep.subr.mxu0 %v214
    %2218 = vmatpush1.msra.mxu0 %v213
    %2219 = vmatprep.subr.mxu0 %v218
    %2220 = vmatpush1.msra.mxu0 %v217
    %2221 = vmatprep.subr.mxu0 %v222
    %2222 = vmatpush1.msra.mxu0 %v221
    %2223 = vmatprep.subr.mxu0 %v226
    %2224 = vmatpush1.msra.mxu0 %v225
    %2225 = vmatprep.subr.mxu0 %v230
    %2226 = vmatpush1.msra.mxu0 %v229
    %2227 = vmatprep.subr.mxu0 0.0
    %2228 = vmatpush1.msra.mxu0 0.0
    %2229 = vmatprep.subr.mxu0 0.0
    %2230 = vmatpush1.msra.mxu0 0.0
    %2231 = vmatprep.subr.mxu0 0.0
    %2232 = vmatpush1.msra.mxu0 0.0
    %2233 = vmatprep.subr.mxu0 0.0
    %2234 = vmatpush1.msra.mxu0 0.0
    %2235 = vmatprep.subr.mxu0 0.0
    %2236 = vmatpush1.msra.mxu0 0.0
    %2237 = vmatprep.subr.mxu0 0.0
    %2238 = vmatpush1.msra.mxu0 0.0
    %2239 = vmatprep.subr.mxu0 0.0
    %2240 = vmatpush1.msra.mxu0 0.0
    %2241 = vmatprep.subr.mxu0 0.0
    %2242 = vmatpush1.msra.mxu0 0.0
    %2243 = vmatprep.subr.mxu0 0.0
    %2244 = vmatpush1.msra.mxu0 0.0
    %2245 = vmatprep.subr.mxu0 0.0
    %2246 = vmatpush1.msra.mxu0 0.0
    %2247 = vmatprep.subr.mxu0 0.0
    %2248 = vmatpush1.msra.mxu0 0.0
    %2249 = vmatprep.subr.mxu0 0.0
    %2250 = vmatpush1.msra.mxu0 0.0
    %2251 = vmatprep.subr.mxu0 0.0
    %2252 = vmatpush1.msra.mxu0 0.0
    %2253 = vmatprep.subr.mxu0 0.0
    %2254 = vmatpush1.msra.mxu0 0.0
    %2255 = vmatprep.subr.mxu0 0.0
    %2256 = vmatpush1.msra.mxu0 0.0
    %2257 = vmatprep.subr.mxu0 0.0
    %2258 = vmatpush1.msra.mxu0 0.0
    %2259 = vmatprep.mubr.f32.mxu0 0.0
    %2260 = vmatmul.mubr.f32.gmra.mrb[0].mxu0 %v2123
    %v2261 = vpop.f32.mrb[0].mxu0
    %v2262 = vadd.f32 0.0, %v2261
    %v2263 = vpop.f32.mrb[0].mxu0
    %v2264 = vadd.f32 0.0, %v2263
    %2265 = vdwg.mxu0
    %v2266 = vadd.f32 %v1070, %v2191
    %v2267 = vadd.f32 %v1072, %v2193
    %v2268 = vadd.f32 %v1111, %v2262
    %v2269 = vadd.f32 %v1113, %v2264
    %v2270 = vxor.u32 %v2266, 2147483648
    %v2271 = vmul.f32 %v2270, 1.442695
    %v2272 = vpow.pop %v2271
    %v2273 = vadd.f32 %v2272, 1.0
    %v2274 = vrcp.pop %v2273
    %v2275 = vmul.f32 1.0, %v2274
    %v2276 = vxor.u32 %v2267, 2147483648
    %v2277 = vmul.f32 %v2276, 1.442695
    %v2278 = vpow.pop %v2277
    %v2279 = vadd.f32 %v2278, 1.0
    %v2280 = vrcp.pop %v2279
    %v2281 = vmul.f32 1.0, %v2280
    %v2282 = vtanh.pop %v2268
    %v2283 = vxor.u32 %v2269, 2147483648
    %v2284 = vmul.f32 %v2283, 1.442695
    %v2285 = vpow.pop %v2284
    %v2286 = vadd.f32 %v2285, 1.0
    %v2287 = vrcp.pop %v2286
    %v2288 = vmul.f32 1.0, %v2287
    %v2289 = vmul.f32 %v2281, %v2121
    %v2290 = vmul.f32 %v2275, %v2282
    %v2291 = vadd.f32 %v2289, %v2290
    %v2292 = vtanh.pop %v2291
    %v2293 = vmul.f32 %v2288, %v2292
    %2294 = vmatprep.subr.mxu0 %v168
    %2295 = vmatpush1.msra.mxu0 %v167
    %2296 = vmatprep.subr.mxu0 %v172
    %2297 = vmatpush1.msra.mxu0 %v171
    %2298 = vmatprep.subr.mxu0 %v176
    %2299 = vmatpush1.msra.mxu0 %v175
    %2300 = vmatprep.subr.mxu0 %v180
    %2301 = vmatpush1.msra.mxu0 %v179
    %2302 = vmatprep.subr.mxu0 %v184
    %2303 = vmatpush1.msra.mxu0 %v183
    %2304 = vmatprep.subr.mxu0 %v188
    %2305 = vmatpush1.msra.mxu0 %v187
    %2306 = vmatprep.subr.mxu0 %v192
    %2307 = vmatpush1.msra.mxu0 %v191
    %2308 = vmatprep.subr.mxu0 %v196
    %2309 = vmatpush1.msra.mxu0 %v195
    %2310 = vmatprep.subr.mxu0 %v200
    %2311 = vmatpush1.msra.mxu0 %v199
    %2312 = vmatprep.subr.mxu0 %v204
    %2313 = vmatpush1.msra.mxu0 %v203
    %2314 = vmatprep.subr.mxu0 %v208
    %2315 = vmatpush1.msra.mxu0 %v207
    %2316 = vmatprep.subr.mxu0 %v212
    %2317 = vmatpush1.msra.mxu0 %v211
    %2318 = vmatprep.subr.mxu0 %v216
    %2319 = vmatpush1.msra.mxu0 %v215
    %2320 = vmatprep.subr.mxu0 %v220
    %2321 = vmatpush1.msra.mxu0 %v219
    %2322 = vmatprep.subr.mxu0 %v224
    %2323 = vmatpush1.msra.mxu0 %v223
    %2324 = vmatprep.subr.mxu0 %v228
    %2325 = vmatpush1.msra.mxu0 %v227
    %2326 = vmatprep.subr.mxu0 0.0
    %2327 = vmatpush1.msra.mxu0 0.0
    %2328 = vmatprep.subr.mxu0 0.0
    %2329 = vmatpush1.msra.mxu0 0.0
    %2330 = vmatprep.subr.mxu0 0.0
    %2331 = vmatpush1.msra.mxu0 0.0
    %2332 = vmatprep.subr.mxu0 0.0
    %2333 = vmatpush1.msra.mxu0 0.0
    %2334 = vmatprep.subr.mxu0 0.0
    %2335 = vmatpush1.msra.mxu0 0.0
    %2336 = vmatprep.subr.mxu0 0.0
    %2337 = vmatpush1.msra.mxu0 0.0
    %2338 = vmatprep.subr.mxu0 0.0
    %2339 = vmatpush1.msra.mxu0 0.0
    %2340 = vmatprep.subr.mxu0 0.0
    %2341 = vmatpush1.msra.mxu0 0.0
    %2342 = vmatprep.subr.mxu0 0.0
    %2343 = vmatpush1.msra.mxu0 0.0
    %2344 = vmatprep.subr.mxu0 0.0
    %2345 = vmatpush1.msra.mxu0 0.0
    %2346 = vmatprep.subr.mxu0 0.0
    %2347 = vmatpush1.msra.mxu0 0.0
    %2348 = vmatprep.subr.mxu0 0.0
    %2349 = vmatpush1.msra.mxu0 0.0
    %2350 = vmatprep.subr.mxu0 0.0
    %2351 = vmatpush1.msra.mxu0 0.0
    %2352 = vmatprep.subr.mxu0 0.0
    %2353 = vmatpush1.msra.mxu0 0.0
    %2354 = vmatprep.subr.mxu0 0.0
    %2355 = vmatpush1.msra.mxu0 0.0
    %2356 = vmatprep.subr.mxu0 0.0
    %2357 = vmatpush1.msra.mxu0 0.0
    %2358 = vmatprep.mubr.f32.mxu0 0.0
    %2359 = vmatmul.mubr.f32.gmra.mrb[0].mxu0 %v2293
    %v2360 = vpop.f32.mrb[0].mxu0
    %v2361 = vadd.f32 0.0, %v2360
    %v2362 = vpop.f32.mrb[0].mxu0
    %v2363 = vadd.f32 0.0, %v2362
    %2364 = vdwg.mxu0
    %2365 = vmatprep.subr.mxu0 %v170
    %2366 = vmatpush1.msra.mxu0 %v169
    %2367 = vmatprep.subr.mxu0 %v174
    %2368 = vmatpush1.msra.mxu0 %v173
    %2369 = vmatprep.subr.mxu0 %v178
    %2370 = vmatpush1.msra.mxu0 %v177
    %2371 = vmatprep.subr.mxu0 %v182
    %2372 = vmatpush1.msra.mxu0 %v181
    %2373 = vmatprep.subr.mxu0 %v186
    %2374 = vmatpush1.msra.mxu0 %v185
    %2375 = vmatprep.subr.mxu0 %v190
    %2376 = vmatpush1.msra.mxu0 %v189
    %2377 = vmatprep.subr.mxu0 %v194
    %2378 = vmatpush1.msra.mxu0 %v193
    %2379 = vmatprep.subr.mxu0 %v198
    %2380 = vmatpush1.msra.mxu0 %v197
    %2381 = vmatprep.subr.mxu0 %v202
    %2382 = vmatpush1.msra.mxu0 %v201
    %2383 = vmatprep.subr.mxu0 %v206
    %2384 = vmatpush1.msra.mxu0 %v205
    %2385 = vmatprep.subr.mxu0 %v210
    %2386 = vmatpush1.msra.mxu0 %v209
    %2387 = vmatprep.subr.mxu0 %v214
    %2388 = vmatpush1.msra.mxu0 %v213
    %2389 = vmatprep.subr.mxu0 %v218
    %2390 = vmatpush1.msra.mxu0 %v217
    %2391 = vmatprep.subr.mxu0 %v222
    %2392 = vmatpush1.msra.mxu0 %v221
    %2393 = vmatprep.subr.mxu0 %v226
    %2394 = vmatpush1.msra.mxu0 %v225
    %2395 = vmatprep.subr.mxu0 %v230
    %2396 = vmatpush1.msra.mxu0 %v229
    %2397 = vmatprep.subr.mxu0 0.0
    %2398 = vmatpush1.msra.mxu0 0.0
    %2399 = vmatprep.subr.mxu0 0.0
    %2400 = vmatpush1.msra.mxu0 0.0
    %2401 = vmatprep.subr.mxu0 0.0
    %2402 = vmatpush1.msra.mxu0 0.0
    %2403 = vmatprep.subr.mxu0 0.0
    %2404 = vmatpush1.msra.mxu0 0.0
    %2405 = vmatprep.subr.mxu0 0.0
    %2406 = vmatpush1.msra.mxu0 0.0
    %2407 = vmatprep.subr.mxu0 0.0
    %2408 = vmatpush1.msra.mxu0 0.0
    %2409 = vmatprep.subr.mxu0 0.0
    %2410 = vmatpush1.msra.mxu0 0.0
    %2411 = vmatprep.subr.mxu0 0.0
    %2412 = vmatpush1.msra.mxu0 0.0
    %2413 = vmatprep.subr.mxu0 0.0
    %2414 = vmatpush1.msra.mxu0 0.0
    %2415 = vmatprep.subr.mxu0 0.0
    %2416 = vmatpush1.msra.mxu0 0.0
    %2417 = vmatprep.subr.mxu0 0.0
    %2418 = vmatpush1.msra.mxu0 0.0
    %2419 = vmatprep.subr.mxu0 0.0
    %2420 = vmatpush1.msra.mxu0 0.0
    %2421 = vmatprep.subr.mxu0 0.0
    %2422 = vmatpush1.msra.mxu0 0.0
    %2423 = vmatprep.subr.mxu0 0.0
    %2424 = vmatpush1.msra.mxu0 0.0
    %2425 = vmatprep.subr.mxu0 0.0
    %2426 = vmatpush1.msra.mxu0 0.0
    %2427 = vmatprep.subr.mxu0 0.0
    %2428 = vmatpush1.msra.mxu0 0.0
    %2429 = vmatprep.mubr.f32.mxu0 0.0
    %2430 = vmatmul.mubr.f32.gmra.mrb[0].mxu0 %v2293
    %v2431 = vpop.f32.mrb[0].mxu0
    %v2432 = vadd.f32 0.0, %v2431
    %v2433 = vpop.f32.mrb[0].mxu0
    %v2434 = vadd.f32 0.0, %v2433
    %2435 = vdwg.mxu0
    %v2436 = vadd.f32 %v1179, %v2361
    %v2437 = vadd.f32 %v1181, %v2363
    %v2438 = vadd.f32 %v1220, %v2432
    %v2439 = vadd.f32 %v1222, %v2434
    %v2440 = vxor.u32 %v2436, 2147483648
    %v2441 = vmul.f32 %v2440, 1.442695
    %v2442 = vpow.pop %v2441
    %v2443 = vadd.f32 %v2442, 1.0
    %v2444 = vrcp.pop %v2443
    %v2445 = vmul.f32 1.0, %v2444
    %v2446 = vxor.u32 %v2437, 2147483648
    %v2447 = vmul.f32 %v2446, 1.442695
    %v2448 = vpow.pop %v2447
    %v2449 = vadd.f32 %v2448, 1.0
    %v2450 = vrcp.pop %v2449
    %v2451 = vmul.f32 1.0, %v2450
    %v2452 = vtanh.pop %v2438
    %v2453 = vxor.u32 %v2439, 2147483648
    %v2454 = vmul.f32 %v2453, 1.442695
    %v2455 = vpow.pop %v2454
    %v2456 = vadd.f32 %v2455, 1.0
    %v2457 = vrcp.pop %v2456
    %v2458 = vmul.f32 1.0, %v2457
    %v2459 = vmul.f32 %v2451, %v2291
    %v2460 = vmul.f32 %v2445, %v2452
    %v2461 = vadd.f32 %v2459, %v2460
    %v2462 = vtanh.pop %v2461
    %v2463 = vmul.f32 %v2458, %v2462
    %2464 = vmatprep.subr.mxu0 %v168
    %2465 = vmatpush1.msra.mxu0 %v167
    %2466 = vmatprep.subr.mxu0 %v172
    %2467 = vmatpush1.msra.mxu0 %v171
    %2468 = vmatprep.subr.mxu0 %v176
    %2469 = vmatpush1.msra.mxu0 %v175
    %2470 = vmatprep.subr.mxu0 %v180
    %2471 = vmatpush1.msra.mxu0 %v179
    %2472 = vmatprep.subr.mxu0 %v184
    %2473 = vmatpush1.msra.mxu0 %v183
    %2474 = vmatprep.subr.mxu0 %v188
    %2475 = vmatpush1.msra.mxu0 %v187
    %2476 = vmatprep.subr.mxu0 %v192
    %2477 = vmatpush1.msra.mxu0 %v191
    %2478 = vmatprep.subr.mxu0 %v196
    %2479 = vmatpush1.msra.mxu0 %v195
    %2480 = vmatprep.subr.mxu0 %v200
    %2481 = vmatpush1.msra.mxu0 %v199
    %2482 = vmatprep.subr.mxu0 %v204
    %2483 = vmatpush1.msra.mxu0 %v203
    %2484 = vmatprep.subr.mxu0 %v208
    %2485 = vmatpush1.msra.mxu0 %v207
    %2486 = vmatprep.subr.mxu0 %v212
    %2487 = vmatpush1.msra.mxu0 %v211
    %2488 = vmatprep.subr.mxu0 %v216
    %2489 = vmatpush1.msra.mxu0 %v215
    %2490 = vmatprep.subr.mxu0 %v220
    %2491 = vmatpush1.msra.mxu0 %v219
    %2492 = vmatprep.subr.mxu0 %v224
    %2493 = vmatpush1.msra.mxu0 %v223
    %2494 = vmatprep.subr.mxu0 %v228
    %2495 = vmatpush1.msra.mxu0 %v227
    %2496 = vmatprep.subr.mxu0 0.0
    %2497 = vmatpush1.msra.mxu0 0.0
    %2498 = vmatprep.subr.mxu0 0.0
    %2499 = vmatpush1.msra.mxu0 0.0
    %2500 = vmatprep.subr.mxu0 0.0
    %2501 = vmatpush1.msra.mxu0 0.0
    %2502 = vmatprep.subr.mxu0 0.0
    %2503 = vmatpush1.msra.mxu0 0.0
    %2504 = vmatprep.subr.mxu0 0.0
    %2505 = vmatpush1.msra.mxu0 0.0
    %2506 = vmatprep.subr.mxu0 0.0
    %2507 = vmatpush1.msra.mxu0 0.0
    %2508 = vmatprep.subr.mxu0 0.0
    %2509 = vmatpush1.msra.mxu0 0.0
    %2510 = vmatprep.subr.mxu0 0.0
    %2511 = vmatpush1.msra.mxu0 0.0
    %2512 = vmatprep.subr.mxu0 0.0
    %2513 = vmatpush1.msra.mxu0 0.0
    %2514 = vmatprep.subr.mxu0 0.0
    %2515 = vmatpush1.msra.mxu0 0.0
    %2516 = vmatprep.subr.mxu0 0.0
    %2517 = vmatpush1.msra.mxu0 0.0
    %2518 = vmatprep.subr.mxu0 0.0
    %2519 = vmatpush1.msra.mxu0 0.0
    %2520 = vmatprep.subr.mxu0 0.0
    %2521 = vmatpush1.msra.mxu0 0.0
    %2522 = vmatprep.subr.mxu0 0.0
    %2523 = vmatpush1.msra.mxu0 0.0
    %2524 = vmatprep.subr.mxu0 0.0
    %2525 = vmatpush1.msra.mxu0 0.0
    %2526 = vmatprep.subr.mxu0 0.0
    %2527 = vmatpush1.msra.mxu0 0.0
    %2528 = vmatprep.mubr.f32.mxu0 0.0
    %2529 = vmatmul.mubr.f32.gmra.mrb[0].mxu0 %v2463
    %v2530 = vpop.f32.mrb[0].mxu0
    %v2531 = vadd.f32 0.0, %v2530
    %v2532 = vpop.f32.mrb[0].mxu0
    %v2533 = vadd.f32 0.0, %v2532
    %2534 = vdwg.mxu0
    %2535 = vmatprep.subr.mxu0 %v170
    %2536 = vmatpush1.msra.mxu0 %v169
    %2537 = vmatprep.subr.mxu0 %v174
    %2538 = vmatpush1.msra.mxu0 %v173
    %2539 = vmatprep.subr.mxu0 %v178
    %2540 = vmatpush1.msra.mxu0 %v177
    %2541 = vmatprep.subr.mxu0 %v182
    %2542 = vmatpush1.msra.mxu0 %v181
    %2543 = vmatprep.subr.mxu0 %v186
    %2544 = vmatpush1.msra.mxu0 %v185
    %2545 = vmatprep.subr.mxu0 %v190
    %2546 = vmatpush1.msra.mxu0 %v189
    %2547 = vmatprep.subr.mxu0 %v194
    %2548 = vmatpush1.msra.mxu0 %v193
    %2549 = vmatprep.subr.mxu0 %v198
    %2550 = vmatpush1.msra.mxu0 %v197
    %2551 = vmatprep.subr.mxu0 %v202
    %2552 = vmatpush1.msra.mxu0 %v201
    %2553 = vmatprep.subr.mxu0 %v206
    %2554 = vmatpush1.msra.mxu0 %v205
    %2555 = vmatprep.subr.mxu0 %v210
    %2556 = vmatpush1.msra.mxu0 %v209
    %2557 = vmatprep.subr.mxu0 %v214
    %2558 = vmatpush1.msra.mxu0 %v213
    %2559 = vmatprep.subr.mxu0 %v218
    %2560 = vmatpush1.msra.mxu0 %v217
    %2561 = vmatprep.subr.mxu0 %v222
    %2562 = vmatpush1.msra.mxu0 %v221
    %2563 = vmatprep.subr.mxu0 %v226
    %2564 = vmatpush1.msra.mxu0 %v225
    %2565 = vmatprep.subr.mxu0 %v230
    %2566 = vmatpush1.msra.mxu0 %v229
    %2567 = vmatprep.subr.mxu0 0.0
    %2568 = vmatpush1.msra.mxu0 0.0
    %2569 = vmatprep.subr.mxu0 0.0
    %2570 = vmatpush1.msra.mxu0 0.0
    %2571 = vmatprep.subr.mxu0 0.0
    %2572 = vmatpush1.msra.mxu0 0.0
    %2573 = vmatprep.subr.mxu0 0.0
    %2574 = vmatpush1.msra.mxu0 0.0
    %2575 = vmatprep.subr.mxu0 0.0
    %2576 = vmatpush1.msra.mxu0 0.0
    %2577 = vmatprep.subr.mxu0 0.0
    %2578 = vmatpush1.msra.mxu0 0.0
    %2579 = vmatprep.subr.mxu0 0.0
    %2580 = vmatpush1.msra.mxu0 0.0
    %2581 = vmatprep.subr.mxu0 0.0
    %2582 = vmatpush1.msra.mxu0 0.0
    %2583 = vmatprep.subr.mxu0 0.0
    %2584 = vmatpush1.msra.mxu0 0.0
    %2585 = vmatprep.subr.mxu0 0.0
    %2586 = vmatpush1.msra.mxu0 0.0
    %2587 = vmatprep.subr.mxu0 0.0
    %2588 = vmatpush1.msra.mxu0 0.0
    %2589 = vmatprep.subr.mxu0 0.0
    %2590 = vmatpush1.msra.mxu0 0.0
    %2591 = vmatprep.subr.mxu0 0.0
    %2592 = vmatpush1.msra.mxu0 0.0
    %2593 = vmatprep.subr.mxu0 0.0
    %2594 = vmatpush1.msra.mxu0 0.0
    %2595 = vmatprep.subr.mxu0 0.0
    %2596 = vmatpush1.msra.mxu0 0.0
    %2597 = vmatprep.subr.mxu0 0.0
    %2598 = vmatpush1.msra.mxu0 0.0
    %2599 = vmatprep.mubr.f32.mxu0 0.0
    %2600 = vmatmul.mubr.f32.gmra.mrb[0].mxu0 %v2463
    %v2601 = vpop.f32.mrb[0].mxu0
    %v2602 = vadd.f32 0.0, %v2601
    %v2603 = vpop.f32.mrb[0].mxu0
    %v2604 = vadd.f32 0.0, %v2603
    %2605 = vdwg.mxu0
    %v2606 = vadd.f32 %v1288, %v2531
    %v2607 = vadd.f32 %v1290, %v2533
    %v2608 = vadd.f32 %v1329, %v2602
    %v2609 = vadd.f32 %v1331, %v2604
    %v2610 = vxor.u32 %v2606, 2147483648
    %v2611 = vmul.f32 %v2610, 1.442695
    %v2612 = vpow.pop %v2611
    %v2613 = vadd.f32 %v2612, 1.0
    %v2614 = vrcp.pop %v2613
    %v2615 = vmul.f32 1.0, %v2614
    %v2616 = vxor.u32 %v2607, 2147483648
    %v2617 = vmul.f32 %v2616, 1.442695
    %v2618 = vpow.pop %v2617
    %v2619 = vadd.f32 %v2618, 1.0
    %v2620 = vrcp.pop %v2619
    %v2621 = vmul.f32 1.0, %v2620
    %v2622 = vtanh.pop %v2608
    %v2623 = vxor.u32 %v2609, 2147483648
    %v2624 = vmul.f32 %v2623, 1.442695
    %v2625 = vpow.pop %v2624
    %v2626 = vadd.f32 %v2625, 1.0
    %v2627 = vrcp.pop %v2626
    %v2628 = vmul.f32 1.0, %v2627
    %v2629 = vmul.f32 %v2621, %v2461
    %v2630 = vmul.f32 %v2615, %v2622
    %v2631 = vadd.f32 %v2629, %v2630
    %v2632 = vtanh.pop %v2631
    %v2633 = vmul.f32 %v2628, %v2632
    %2634 = vmatprep.subr.mxu0 %v168
    %2635 = vmatpush1.msra.mxu0 %v167
    %2636 = vmatprep.subr.mxu0 %v172
    %2637 = vmatpush1.msra.mxu0 %v171
    %2638 = vmatprep.subr.mxu0 %v176
    %2639 = vmatpush1.msra.mxu0 %v175
    %2640 = vmatprep.subr.mxu0 %v180
    %2641 = vmatpush1.msra.mxu0 %v179
    %2642 = vmatprep.subr.mxu0 %v184
    %2643 = vmatpush1.msra.mxu0 %v183
    %2644 = vmatprep.subr.mxu0 %v188
    %2645 = vmatpush1.msra.mxu0 %v187
    %2646 = vmatprep.subr.mxu0 %v192
    %2647 = vmatpush1.msra.mxu0 %v191
    %2648 = vmatprep.subr.mxu0 %v196
    %2649 = vmatpush1.msra.mxu0 %v195
    %2650 = vmatprep.subr.mxu0 %v200
    %2651 = vmatpush1.msra.mxu0 %v199
    %2652 = vmatprep.subr.mxu0 %v204
    %2653 = vmatpush1.msra.mxu0 %v203
    %2654 = vmatprep.subr.mxu0 %v208
    %2655 = vmatpush1.msra.mxu0 %v207
    %2656 = vmatprep.subr.mxu0 %v212
    %2657 = vmatpush1.msra.mxu0 %v211
    %2658 = vmatprep.subr.mxu0 %v216
    %2659 = vmatpush1.msra.mxu0 %v215
    %2660 = vmatprep.subr.mxu0 %v220
    %2661 = vmatpush1.msra.mxu0 %v219
    %2662 = vmatprep.subr.mxu0 %v224
    %2663 = vmatpush1.msra.mxu0 %v223
    %2664 = vmatprep.subr.mxu0 %v228
    %2665 = vmatpush1.msra.mxu0 %v227
    %2666 = vmatprep.subr.mxu0 0.0
    %2667 = vmatpush1.msra.mxu0 0.0
    %2668 = vmatprep.subr.mxu0 0.0
    %2669 = vmatpush1.msra.mxu0 0.0
    %2670 = vmatprep.subr.mxu0 0.0
    %2671 = vmatpush1.msra.mxu0 0.0
    %2672 = vmatprep.subr.mxu0 0.0
    %2673 = vmatpush1.msra.mxu0 0.0
    %2674 = vmatprep.subr.mxu0 0.0
    %2675 = vmatpush1.msra.mxu0 0.0
    %2676 = vmatprep.subr.mxu0 0.0
    %2677 = vmatpush1.msra.mxu0 0.0
    %2678 = vmatprep.subr.mxu0 0.0
    %2679 = vmatpush1.msra.mxu0 0.0
    %2680 = vmatprep.subr.mxu0 0.0
    %2681 = vmatpush1.msra.mxu0 0.0
    %2682 = vmatprep.subr.mxu0 0.0
    %2683 = vmatpush1.msra.mxu0 0.0
    %2684 = vmatprep.subr.mxu0 0.0
    %2685 = vmatpush1.msra.mxu0 0.0
    %2686 = vmatprep.subr.mxu0 0.0
    %2687 = vmatpush1.msra.mxu0 0.0
    %2688 = vmatprep.subr.mxu0 0.0
    %2689 = vmatpush1.msra.mxu0 0.0
    %2690 = vmatprep.subr.mxu0 0.0
    %2691 = vmatpush1.msra.mxu0 0.0
    %2692 = vmatprep.subr.mxu0 0.0
    %2693 = vmatpush1.msra.mxu0 0.0
    %2694 = vmatprep.subr.mxu0 0.0
    %2695 = vmatpush1.msra.mxu0 0.0
    %2696 = vmatprep.subr.mxu0 0.0
    %2697 = vmatpush1.msra.mxu0 0.0
    %2698 = vmatprep.mubr.f32.mxu0 0.0
    %2699 = vmatmul.mubr.f32.gmra.mrb[0].mxu0 %v2633
    %v2700 = vpop.f32.mrb[0].mxu0
    %v2701 = vadd.f32 0.0, %v2700
    %v2702 = vpop.f32.mrb[0].mxu0
    %v2703 = vadd.f32 0.0, %v2702
    %2704 = vdwg.mxu0
    %2705 = vmatprep.subr.mxu0 %v170
    %2706 = vmatpush1.msra.mxu0 %v169
    %2707 = vmatprep.subr.mxu0 %v174
    %2708 = vmatpush1.msra.mxu0 %v173
    %2709 = vmatprep.subr.mxu0 %v178
    %2710 = vmatpush1.msra.mxu0 %v177
    %2711 = vmatprep.subr.mxu0 %v182
    %2712 = vmatpush1.msra.mxu0 %v181
    %2713 = vmatprep.subr.mxu0 %v186
    %2714 = vmatpush1.msra.mxu0 %v185
    %2715 = vmatprep.subr.mxu0 %v190
    %2716 = vmatpush1.msra.mxu0 %v189
    %2717 = vmatprep.subr.mxu0 %v194
    %2718 = vmatpush1.msra.mxu0 %v193
    %2719 = vmatprep.subr.mxu0 %v198
    %2720 = vmatpush1.msra.mxu0 %v197
    %2721 = vmatprep.subr.mxu0 %v202
    %2722 = vmatpush1.msra.mxu0 %v201
    %2723 = vmatprep.subr.mxu0 %v206
    %2724 = vmatpush1.msra.mxu0 %v205
    %2725 = vmatprep.subr.mxu0 %v210
    %2726 = vmatpush1.msra.mxu0 %v209
    %2727 = vmatprep.subr.mxu0 %v214
    %2728 = vmatpush1.msra.mxu0 %v213
    %2729 = vmatprep.subr.mxu0 %v218
    %2730 = vmatpush1.msra.mxu0 %v217
    %2731 = vmatprep.subr.mxu0 %v222
    %2732 = vmatpush1.msra.mxu0 %v221
    %2733 = vmatprep.subr.mxu0 %v226
    %2734 = vmatpush1.msra.mxu0 %v225
    %2735 = vmatprep.subr.mxu0 %v230
    %2736 = vmatpush1.msra.mxu0 %v229
    %2737 = vmatprep.subr.mxu0 0.0
    %2738 = vmatpush1.msra.mxu0 0.0
    %2739 = vmatprep.subr.mxu0 0.0
    %2740 = vmatpush1.msra.mxu0 0.0
    %2741 = vmatprep.subr.mxu0 0.0
    %2742 = vmatpush1.msra.mxu0 0.0
    %2743 = vmatprep.subr.mxu0 0.0
    %2744 = vmatpush1.msra.mxu0 0.0
    %2745 = vmatprep.subr.mxu0 0.0
    %2746 = vmatpush1.msra.mxu0 0.0
    %2747 = vmatprep.subr.mxu0 0.0
    %2748 = vmatpush1.msra.mxu0 0.0
    %2749 = vmatprep.subr.mxu0 0.0
    %2750 = vmatpush1.msra.mxu0 0.0
    %2751 = vmatprep.subr.mxu0 0.0
    %2752 = vmatpush1.msra.mxu0 0.0
    %2753 = vmatprep.subr.mxu0 0.0
    %2754 = vmatpush1.msra.mxu0 0.0
    %2755 = vmatprep.subr.mxu0 0.0
    %2756 = vmatpush1.msra.mxu0 0.0
    %2757 = vmatprep.subr.mxu0 0.0
    %2758 = vmatpush1.msra.mxu0 0.0
    %2759 = vmatprep.subr.mxu0 0.0
    %2760 = vmatpush1.msra.mxu0 0.0
    %2761 = vmatprep.subr.mxu0 0.0
    %2762 = vmatpush1.msra.mxu0 0.0
    %2763 = vmatprep.subr.mxu0 0.0
    %2764 = vmatpush1.msra.mxu0 0.0
    %2765 = vmatprep.subr.mxu0 0.0
    %2766 = vmatpush1.msra.mxu0 0.0
    %2767 = vmatprep.subr.mxu0 0.0
    %2768 = vmatpush1.msra.mxu0 0.0
    %2769 = vmatprep.mubr.f32.mxu0 0.0
    %2770 = vmatmul.mubr.f32.gmra.mrb[0].mxu0 %v2633
    %v2771 = vpop.f32.mrb[0].mxu0
    %v2772 = vadd.f32 0.0, %v2771
    %v2773 = vpop.f32.mrb[0].mxu0
    %v2774 = vadd.f32 0.0, %v2773
    %2775 = vdwg.mxu0
    %v2776 = vadd.f32 %v1397, %v2701
    %v2777 = vadd.f32 %v1399, %v2703
    %v2778 = vadd.f32 %v1438, %v2772
    %v2779 = vadd.f32 %v1440, %v2774
    %v2780 = vxor.u32 %v2776, 2147483648
    %v2781 = vmul.f32 %v2780, 1.442695
    %v2782 = vpow.pop %v2781
    %v2783 = vadd.f32 %v2782, 1.0
    %v2784 = vrcp.pop %v2783
    %v2785 = vmul.f32 1.0, %v2784
    %v2786 = vxor.u32 %v2777, 2147483648
    %v2787 = vmul.f32 %v2786, 1.442695
    %v2788 = vpow.pop %v2787
    %v2789 = vadd.f32 %v2788, 1.0
    %v2790 = vrcp.pop %v2789
    %v2791 = vmul.f32 1.0, %v2790
    %v2792 = vtanh.pop %v2778
    %v2793 = vxor.u32 %v2779, 2147483648
    %v2794 = vmul.f32 %v2793, 1.442695
    %v2795 = vpow.pop %v2794
    %v2796 = vadd.f32 %v2795, 1.0
    %v2797 = vrcp.pop %v2796
    %v2798 = vmul.f32 1.0, %v2797
    %v2799 = vmul.f32 %v2791, %v2631
    %v2800 = vmul.f32 %v2785, %v2792
    %v2801 = vadd.f32 %v2799, %v2800
    %v2802 = vtanh.pop %v2801
    %v2803 = vmul.f32 %v2798, %v2802
    %v2804 = vpack.c.bf16 %v2803, %v2803
    %v2805 = vld [vmem:[#allocation10] sm:$0xff]
    %v2806 = vld [vmem:[#allocation10 + $0x8] sm:$0xff]
    %v2807 = vld [vmem:[#allocation10 + $0x10] sm:$0xff]
    %v2808 = vld [vmem:[#allocation10 + $0x18] sm:$0xff]
    %v2809 = vld [vmem:[#allocation10 + $0x20] sm:$0xff]
    %v2810 = vld [vmem:[#allocation10 + $0x28] sm:$0xff]
    %v2811 = vld [vmem:[#allocation10 + $0x30] sm:$0xff]
    %v2812 = vld [vmem:[#allocation10 + $0x38] sm:$0xff]
    %v2813 = vld [vmem:[#allocation10 + $0x40] sm:$0xff]
    %v2814 = vld [vmem:[#allocation10 + $0x48] sm:$0xff]
    %v2815 = vld [vmem:[#allocation10 + $0x50] sm:$0xff]
    %v2816 = vld [vmem:[#allocation10 + $0x58] sm:$0xff]
    %v2817 = vld [vmem:[#allocation10 + $0x60] sm:$0xff]
    %v2818 = vld [vmem:[#allocation10 + $0x68] sm:$0xff]
    %v2819 = vld [vmem:[#allocation10 + $0x70] sm:$0xff]
    %v2820 = vld [vmem:[#allocation10 + $0x78] sm:$0xff]
    %v2821 = vld [vmem:[#allocation11] sm:$0x3]
    %v2823 = vlaneseq
    %v2824 = vshrl.u32 %v2823, 7
    %v2825 = vsub.s32 0, %v2824
    %v2826 = vrot.slane %v2821, %v2825
    %v2827 = vlaneseq
    %v2828 = vshrl.u32 %v2827, 7
    %v2829 = vsub.s32 1, %v2828
    %v2830 = vrot.slane %v2821, %v2829
    %v2849 = vunpack.c.l.b16 %v2805
    %v2850 = vunpack.c.h.b16 %v2805
    %v2851 = vunpack.c.l.b16 %v2806
    %v2852 = vunpack.c.h.b16 %v2806
    %v2853 = vunpack.c.l.b16 %v2807
    %v2854 = vunpack.c.h.b16 %v2807
    %v2855 = vunpack.c.l.b16 %v2808
    %v2856 = vunpack.c.h.b16 %v2808
    %v2857 = vunpack.c.l.b16 %v2809
    %v2858 = vunpack.c.h.b16 %v2809
    %v2859 = vunpack.c.l.b16 %v2810
    %v2860 = vunpack.c.h.b16 %v2810
    %v2861 = vunpack.c.l.b16 %v2811
    %v2862 = vunpack.c.h.b16 %v2811
    %v2863 = vunpack.c.l.b16 %v2812
    %v2864 = vunpack.c.h.b16 %v2812
    %v2865 = vunpack.c.l.b16 %v2813
    %v2866 = vunpack.c.h.b16 %v2813
    %v2867 = vunpack.c.l.b16 %v2814
    %v2868 = vunpack.c.h.b16 %v2814
    %v2869 = vunpack.c.l.b16 %v2815
    %v2870 = vunpack.c.h.b16 %v2815
    %v2871 = vunpack.c.l.b16 %v2816
    %v2872 = vunpack.c.h.b16 %v2816
    %v2873 = vunpack.c.l.b16 %v2817
    %v2874 = vunpack.c.h.b16 %v2817
    %v2875 = vunpack.c.l.b16 %v2818
    %v2876 = vunpack.c.h.b16 %v2818
    %v2877 = vunpack.c.l.b16 %v2819
    %v2878 = vunpack.c.h.b16 %v2819
    %v2879 = vunpack.c.l.b16 %v2820
    %v2880 = vunpack.c.h.b16 %v2820
    %v2881 = vpack.c.b16 %v2851, %v2849
    %v2882 = vpack.c.b16 %v2852, %v2850
    %v2883 = vpack.c.b16 %v2855, %v2853
    %v2884 = vpack.c.b16 %v2856, %v2854
    %v2885 = vpack.c.b16 %v2859, %v2857
    %v2886 = vpack.c.b16 %v2860, %v2858
    %v2887 = vpack.c.b16 %v2863, %v2861
    %v2888 = vpack.c.b16 %v2864, %v2862
    %v2889 = vpack.c.b16 %v2867, %v2865
    %v2890 = vpack.c.b16 %v2868, %v2866
    %v2891 = vpack.c.b16 %v2871, %v2869
    %v2892 = vpack.c.b16 %v2872, %v2870
    %v2893 = vpack.c.b16 %v2875, %v2873
    %v2894 = vpack.c.b16 %v2876, %v2874
    %v2895 = vpack.c.b16 %v2879, %v2877
    %v2896 = vpack.c.b16 %v2880, %v2878
    %2913 = vmatprep.subr.bf16.mxu0 %v2882
    %2914 = vmatpush1.bf16.msra.mxu0 %v2881
    %2915 = vmatprep.subr.bf16.mxu0 %v2884
    %2916 = vmatpush1.bf16.msra.mxu0 %v2883
    %2917 = vmatprep.subr.bf16.mxu0 %v2886
    %2918 = vmatpush1.bf16.msra.mxu0 %v2885
    %2919 = vmatprep.subr.bf16.mxu0 %v2888
    %2920 = vmatpush1.bf16.msra.mxu0 %v2887
    %2921 = vmatprep.subr.bf16.mxu0 %v2890
    %2922 = vmatpush1.bf16.msra.mxu0 %v2889
    %2923 = vmatprep.subr.bf16.mxu0 %v2892
    %2924 = vmatpush1.bf16.msra.mxu0 %v2891
    %2925 = vmatprep.subr.bf16.mxu0 %v2894
    %2926 = vmatpush1.bf16.msra.mxu0 %v2893
    %2927 = vmatprep.subr.bf16.mxu0 %v2896
    %2928 = vmatpush1.bf16.msra.mxu0 %v2895
    %2929 = vmatprep.subr.bf16.mxu0 0
    %2930 = vmatpush1.bf16.msra.mxu0 0
    %2931 = vmatprep.subr.bf16.mxu0 0
    %2932 = vmatpush1.bf16.msra.mxu0 0
    %2933 = vmatprep.subr.bf16.mxu0 0
    %2934 = vmatpush1.bf16.msra.mxu0 0
    %2935 = vmatprep.subr.bf16.mxu0 0
    %2936 = vmatpush1.bf16.msra.mxu0 0
    %2937 = vmatprep.subr.bf16.mxu0 0
    %2938 = vmatpush1.bf16.msra.mxu0 0
    %2939 = vmatprep.subr.bf16.mxu0 0
    %2940 = vmatpush1.bf16.msra.mxu0 0
    %2941 = vmatprep.subr.bf16.mxu0 0
    %2942 = vmatpush1.bf16.msra.mxu0 0
    %2943 = vmatprep.subr.bf16.mxu0 0
    %2944 = vmatpush1.bf16.msra.mxu0 0
    %2945 = vmatprep.mubr.bf16.mxu0 0
    %2946 = vmatmul.mubr.bf16.gmra.mrb[0].mxu0 %v2804
    %v2947 = vpop.f32.mrb[0].mxu0
    %v2948 = vadd.f32 %v2826, %v2947
    %v2949 = vpop.f32.mrb[0].mxu0
    %v2950 = vadd.f32 %v2830, %v2949
    %v2951 = vpop.f32.mrb[0].mxu0
    %v2952 = vpop.f32.mrb[0].mxu0
    %2953 = vdwg.mxu0
    %vm2954 = vcmask 1041408
    %v2955 = vsel %vm2954, %v2948, -inf
    %v2956 = vsel %vm2954, %v2950, -inf
    %v2957 = vmax.f32 %v2955, %v2956
    %2958 = vmax.xlane.f32.xlu0 %v2957
    %v2959 = vpop.xlane.xlu0 %2958
    %v2960 = vsub.f32 %v2948, %v2959
    %v2961 = vsub.f32 %v2950, %v2959
    %v2962 = vmul.f32 %v2960, 1.442695
    %v2963 = vpow.pop %v2962
    %v2964 = vmul.f32 %v2961, 1.442695
    %v2965 = vpow.pop %v2964
    %v2966 = vsel %vm2954, %v2963, 0.0
    %v2967 = vsel %vm2954, %v2965, 0.0
    %v2968 = vadd.f32 %v2966, %v2967
    %2969 = vadd.xlane.f32.xlu0 %v2968
    %v2970 = vpop.xlane.xlu0 %2969
    %v2971 = vrcp.pop %v2970
    %v2972 = vmul.f32 %v2963, %v2971
    %v2973 = vmul.f32 %v2965, %v2971
    %v2976 = vcombine.low %v2972, %v2973
    %v2978 = vunpack.c.l.s4 1983009808
    %v2979 = vunpack.c.0.s8 %v2978
    %v2980 = vlaneseq
    %v2981 = vshrl.u32 %v2980, 7
    %v2982 = vsub.s32 %v2979, %v2981
    %v2983 = vrot.slane %v2976, %v2982
    %2985 = vst [vmem:[#allocation13] sm:$0xf] %v2983
    // Predicated region
    $region50: #{tpu_custom_call.1} parent=1 // pred_check
      _
    $region51: #{tpu_custom_call.1} parent=1 // pred_check_branch
      %2987 = sbr.rel (0) target = $region53
    $region52: #{tpu_custom_call.1} parent=1 // pred_region
      %s2989 = ssub.s32 64, 64
      %2990 = vsyncadd [#allocation4], %s2989
      %s2992 = sshll.u32 [#allocation13], 4
      %s2993 = int_to_ptr.vmem [resolvable:$true] %s2992
      %2995 = dma.vmem_to_hbm [thread:$0]  %s2993, 64, %s6, [#allocation4]
    $region53: #{tpu_custom_call.1} parent=1 // pred_fallthru
      _
    // Predicated region
    $region54: #{tpu_custom_call.1} parent=1 // pred_check
      _
    $region55: #{tpu_custom_call.1} parent=1 // pred_check_branch
      %2997 = sbr.rel (0) target = $region57
    $region56: #{tpu_custom_call.1} parent=1 // pred_region
      %2998 = dma.done [#allocation4], 64
    $region57: #{tpu_custom_call.1} parent=1 // pred_fallthru
      _
    %2999 = vsyncpa [#allocation3], 1
    %3000 = vsyncpa [#allocation6], 1
    %3001 = vsyncpa [#allocation9], 1
    %3002 = vsyncpa [#allocation12], 1
    %3003 = vsyncpa [#allocation4], 1

</llo_original>
